<compile_context>
chip_gen: v6e
topology: v6e:2x2x1
jax: 0.10.0
libtpu: 0.0.40
codegen_flags: <defaults>
</compile_context>

<pallas_src>
import functools

import jax
import jax.numpy as jnp
from jax.experimental import pallas as pl
from jax.experimental.pallas import tpu as pltpu

BN_EPS = 1e-5
LRELU_SLOPE = 0.2

Z_DIM = 50
HID = 128
N2, N3, N4, N5 = 24576, 16384, 24576, 24576
N_TOTAL = N2 + N3 + N4 + N5                    # 90112

USE_BF16_WEIGHTS = True                        # dominant HBM-traffic lever
Z_DTYPE = jnp.bfloat16 if USE_BF16_WEIGHTS else jnp.float32

# Column tile width: multiple of 128 and an exact divisor of N_TOTAL.
# bf16 -> 11264 (8 steps, 2x2.75 MiB weight buffers); f32 -> 8192 (11 steps).
TN = 11264 if USE_BF16_WEIGHTS else 8192
NUM_TILES = N_TOTAL // TN


# ---------------- stem kernel: Linear(50,128) + BatchNorm1d(train) + LeakyReLU ----------------
def _stem_kernel(z0_ref, w1_ref, b1_ref, g_ref, beta_ref, z_ref):
    h = jnp.dot(z0_ref[...], w1_ref[...], preferred_element_type=jnp.float32)
    h = h + b1_ref[...]
    mean = jnp.mean(h, axis=0, keepdims=True)
    var = jnp.mean((h - mean) ** 2, axis=0, keepdims=True)     # biased var (train mode)
    hn = (h - mean) * jax.lax.rsqrt(var + BN_EPS)
    hn = hn * g_ref[...] + beta_ref[...]
    act = jnp.where(hn > 0, hn, LRELU_SLOPE * hn)
    # Store already cast to the fan-out weight dtype -> no per-step cast later.
    z_ref[...] = act.astype(z_ref.dtype)


def stem_pallas(z0, w1, b1, gamma, beta):
    B = z0.shape[0]
    cost = pl.CostEstimate(
        flops=2 * B * Z_DIM * HID + 10 * B * HID,
        transcendentals=HID,                    # rsqrt per feature
        bytes_accessed=(B * Z_DIM + Z_DIM * HID + 3 * HID) * 4 + B * HID * jnp.dtype(Z_DTYPE).itemsize,
    )
    # Single invocation, everything fits in VMEM trivially (< 40 KiB).
    return pl.pallas_call(
        _stem_kernel,
        out_shape=jax.ShapeDtypeStruct((B, HID), Z_DTYPE),
        cost_estimate=cost,
    )(z0, w1, b1, gamma, beta)


# ---------------- fan-out kernel: z @ [W2|W3|W4|W5] + [b2|b3|b4|b5], column-tiled ----------------
def _fanout_kernel(z_ref, w_ref, b_ref, o_ref):
    # bf16 x bf16 -> single-pass MXU matmul with f32 accumulation.
    o_ref[...] = jnp.dot(z_ref[...], w_ref[...],
                         preferred_element_type=jnp.float32) + b_ref[...]


def fanout_pallas(z, w_big, b_big):
    B = z.shape[0]
    w_bytes = HID * N_TOTAL * jnp.dtype(w_big.dtype).itemsize
    cost = pl.CostEstimate(
        flops=2 * B * HID * N_TOTAL,
        transcendentals=0,
        bytes_accessed=w_bytes + N_TOTAL * 4 + B * N_TOTAL * 4
        + B * HID * jnp.dtype(z.dtype).itemsize,
    )
    return pl.pallas_call(
        _fanout_kernel,
        out_shape=jax.ShapeDtypeStruct((B, N_TOTAL), jnp.float32),
        grid=(NUM_TILES,),
        in_specs=[
            pl.BlockSpec((B, HID), lambda j: (0, 0)),      # z (resident, tiny)
            pl.BlockSpec((HID, TN), lambda j: (0, j)),     # weight column tile (streamed)
            pl.BlockSpec((1, TN), lambda j: (0, j)),       # bias column tile
        ],
        out_specs=pl.BlockSpec((B, TN), lambda j: (0, j)), # distinct block per step
        compiler_params=pltpu.CompilerParams(
            # Every step writes its own output block and there is no carried
            # state -> safe to split across TensorCores (v7x megacore).
            dimension_semantics=("parallel",),
        ),
        cost_estimate=cost,
    )(z, w_big, b_big)


# ---------------- parameter init (deterministic, PyTorch-Linear-style) ----------------
def _linear_params(key, fan_in, fan_out):
    kw, kb = jax.random.split(key)
    bound = 1.0 / jnp.sqrt(fan_in)
    # PyTorch stores W as (out, in); we keep (in, out) so the kernel does x @ W.
    w = jax.random.uniform(kw, (fan_in, fan_out), jnp.float32, -bound, bound)
    b = jax.random.uniform(kb, (1, fan_out), jnp.float32, -bound, bound)
    return w, b


def init_params(key, use_bf16=USE_BF16_WEIGHTS):
    k1, k2, k3, k4, k5 = jax.random.split(key, 5)
    w1, b1 = _linear_params(k1, Z_DIM, HID)
    w2, b2 = _linear_params(k2, HID, N2)
    w3, b3 = _linear_params(k3, HID, N3)
    w4, b4 = _linear_params(k4, HID, N4)
    w5, b5 = _linear_params(k5, HID, N5)
    w_big = jnp.concatenate([w2, w3, w4, w5], axis=1)
    if use_bf16:
        w_big = w_big.astype(jnp.bfloat16)
    return {
        "w1": w1, "b1": b1,
        "gamma": jnp.ones((1, HID), jnp.float32),   # BatchNorm1d default affine
        "beta": jnp.zeros((1, HID), jnp.float32),
        "w_big": w_big,
        "b_big": jnp.concatenate([b2, b3, b4, b5], axis=1),   # bias kept f32
    }
    # TODO(synk): BatchNorm1d running-stat buffer updates (train-mode side effect)
    # are not modeled; they do not affect the forward outputs.


# ---------------- forward ----------------
def finet_forward(params, noise_key, batch_size):
    # the PyTorch module draws its own z ~ N(0, 1) inside forward()
    z0 = jax.random.normal(noise_key, (batch_size, Z_DIM), jnp.float32)
    z = stem_pallas(z0, params["w1"], params["b1"], params["gamma"], params["beta"])
    out = fanout_pallas(z, params["w_big"], params["b_big"])
    # head splits + contiguous NCHW views (same as PyTorch .view())
    z2 = out[:, :N2].reshape(batch_size, 96, 16, 16)
    z3 = out[:, N2:N2 + N3].reshape(batch_size, 256, 8, 8)
    z4 = out[:, N2 + N3:N2 + N3 + N4].reshape(batch_size, 384, 8, 8)
    z5 = out[:, N2 + N3 + N4:].reshape(batch_size, 384, 8, 8)
    return z2, z3, z4, z5


# ---------------- pure-JAX reference (mirrors the kernel dtype path) ----------------
def finet_reference(params, z0):
    B = z0.shape[0]
    h = z0 @ params["w1"] + params["b1"]
    mean = h.mean(0, keepdims=True)
    var = ((h - mean) ** 2).mean(0, keepdims=True)
    hn = (h - mean) * jax.lax.rsqrt(var + BN_EPS) * params["gamma"] + params["beta"]
    z = jnp.where(hn > 0, hn, LRELU_SLOPE * hn).astype(params["w_big"].dtype)
    out = jnp.dot(z, params["w_big"], preferred_element_type=jnp.float32) + params["b_big"]
    return (out[:, :N2].reshape(B, 96, 16, 16),
            out[:, N2:N2 + N3].reshape(B, 256, 8, 8),
            out[:, N2 + N3:N2 + N3 + N4].reshape(B, 384, 8, 8),
            out[:, N2 + N3 + N4:].reshape(B, 384, 8, 8))


if __name__ == "__main__":
    batch_size = 8  # small batch; feature sizes are fixed by the module definition
    key = jax.random.PRNGKey(0)
    pkey, nkey = jax.random.split(key)
    params = init_params(pkey)

    fwd = jax.jit(functools.partial(finet_forward, batch_size=batch_size))
    z2, z3, z4, z5 = fwd(params, nkey)
    jax.block_until_ready((z2, z3, z4, z5))

    assert z2.shape == (batch_size, 96, 16, 16)
    assert z3.shape == (batch_size, 256, 8, 8)
    assert z4.shape == (batch_size, 384, 8, 8)
    assert z5.shape == (batch_size, 384, 8, 8)
    assert all(bool(jnp.all(jnp.isfinite(t))) for t in (z2, z3, z4, z5))

    # numerical check against a plain-JAX reference on the same z0 draw
    z0 = jax.random.normal(nkey, (batch_size, Z_DIM), jnp.float32)
    refs = finet_reference(params, z0)
    tol = 5e-2 if USE_BF16_WEIGHTS else 2e-2
    for got, ref in zip((z2, z3, z4, z5), refs):
        assert jnp.allclose(got, ref, rtol=tol, atol=tol), \
            float(jnp.max(jnp.abs(got - ref)))

    print("KERNEL_OK")
</pallas_src>

<mosaic_0001>
module attributes {stable_mosaic.version = 11 : i64} {
  func.func @_fanout_kernel(%arg0: i32, %arg1: memref<8x128xbf16, #tpu.memory_space<vmem>>, %arg2: memref<128x11264xbf16, #tpu.memory_space<vmem>>, %arg3: memref<1x11264xf32, #tpu.memory_space<vmem>>, %arg4: memref<8x11264xf32, #tpu.memory_space<vmem>>) attributes {dimension_semantics = [#tpu.dimension_semantics<parallel>], iteration_bounds = array<i64: 8>, scalar_prefetch = 0 : i64, scratch_operands = 0 : i64, tpu.core_type = #tpu.core_type<tc>, window_params = [{pipeline_mode = #tpu.pipeline_mode<synchronous>, transform_indices = @transform_0, window_bounds = array<i64: 8, 128>}, {transform_indices = @transform_1, window_bounds = array<i64: 128, 11264>}, {transform_indices = @transform_2, window_bounds = array<i64: 1, 11264>}, {transform_indices = @transform_3, window_bounds = array<i64: 8, 11264>}]} {
    %c0 = arith.constant 0 : index
    %c0_0 = arith.constant 0 : index
    %0 = vector.load %arg1[%c0, %c0_0] : memref<8x128xbf16, #tpu.memory_space<vmem>>, vector<8x128xbf16>
    %c0_1 = arith.constant 0 : index
    %c0_2 = arith.constant 0 : index
    %1 = vector.load %arg2[%c0_1, %c0_2] : memref<128x11264xbf16, #tpu.memory_space<vmem>>, vector<128x11264xbf16>
    %cst = arith.constant dense<0.000000e+00> : vector<8x11264xf32>
    %2 = tpu.matmul %0, %1, %cst {dimension_numbers = #tpu.dot_dimension_numbers<[1], [0], [0], [1], [0, 0, 1, 1], [], []>} : vector<8x128xbf16>, vector<128x11264xbf16>, vector<8x11264xf32> -> vector<8x11264xf32>
    %c0_3 = arith.constant 0 : index
    %c0_4 = arith.constant 0 : index
    %3 = vector.load %arg3[%c0_3, %c0_4] : memref<1x11264xf32, #tpu.memory_space<vmem>>, vector<1x11264xf32>
    %4 = vector.broadcast %3 : vector<1x11264xf32> to vector<8x11264xf32>
    %5 = arith.addf %2, %4 : vector<8x11264xf32>
    %c0_5 = arith.constant 0 : index
    %c0_6 = arith.constant 0 : index
    %6 = vector.load %arg4[%c0_5, %c0_6] : memref<8x11264xf32, #tpu.memory_space<vmem>>, vector<8x11264xf32>
    tpu.vector_store %arg4[%c0_5, %c0_6], %5 {strides = array<i32>} : memref<8x11264xf32, #tpu.memory_space<vmem>>, vector<8x11264xf32>,
    return
  }
  func.func @transform_0(%arg0: i32) -> (i32, i32) {
    %c0_i32 = arith.constant 0 : i32
    %c0_i32_0 = arith.constant 0 : i32
    %c0_i32_1 = arith.constant 0 : i32
    return %c0_i32, %c0_i32_0 : i32, i32
  }
  func.func @transform_1(%arg0: i32) -> (i32, i32) {
    %c0_i32 = arith.constant 0 : i32
    %c0_i32_0 = arith.constant 0 : i32
    return %c0_i32, %arg0 : i32, i32
  }
  func.func @transform_2(%arg0: i32) -> (i32, i32) {
    %c0_i32 = arith.constant 0 : i32
    %c0_i32_0 = arith.constant 0 : i32
    return %c0_i32, %arg0 : i32, i32
  }
  func.func @transform_3(%arg0: i32) -> (i32, i32) {
    %c0_i32 = arith.constant 0 : i32
    %c0_i32_0 = arith.constant 0 : i32
    return %c0_i32, %arg0 : i32, i32
  }
}

module attributes {stable_mosaic.version = 11 : i64} {
  func.func @_stem_kernel(%arg0: memref<8x50xf32, #tpu.memory_space<vmem>>, %arg1: memref<50x128xf32, #tpu.memory_space<vmem>>, %arg2: memref<1x128xf32, #tpu.memory_space<vmem>>, %arg3: memref<1x128xf32, #tpu.memory_space<vmem>>, %arg4: memref<1x128xf32, #tpu.memory_space<vmem>>, %arg5: memref<8x128xbf16, #tpu.memory_space<vmem>>) attributes {dimension_semantics = [], scalar_prefetch = 0 : i64, scratch_operands = 0 : i64, tpu.core_type = #tpu.core_type<tc>} {
    %c0 = arith.constant 0 : index
    %c0_0 = arith.constant 0 : index
    %0 = vector.load %arg0[%c0, %c0_0] : memref<8x50xf32, #tpu.memory_space<vmem>>, vector<8x50xf32>
    %c0_1 = arith.constant 0 : index
    %c0_2 = arith.constant 0 : index
    %1 = vector.load %arg1[%c0_1, %c0_2] : memref<50x128xf32, #tpu.memory_space<vmem>>, vector<50x128xf32>
    %cst = arith.constant dense<0.000000e+00> : vector<8x128xf32>
    %2 = tpu.matmul %0, %1, %cst {dimension_numbers = #tpu.dot_dimension_numbers<[1], [0], [0], [1], [0, 0, 1, 1], [], []>} : vector<8x50xf32>, vector<50x128xf32>, vector<8x128xf32> -> vector<8x128xf32>
    %c0_3 = arith.constant 0 : index
    %c0_4 = arith.constant 0 : index
    %3 = vector.load %arg2[%c0_3, %c0_4] : memref<1x128xf32, #tpu.memory_space<vmem>>, vector<1x128xf32>
    %4 = vector.broadcast %3 : vector<1x128xf32> to vector<8x128xf32>
    %5 = arith.addf %2, %4 : vector<8x128xf32>
    %cst_5 = arith.constant dense<0.000000e+00> : vector<128xf32>
    %6 = vector.multi_reduction <add>, %5, %cst_5 [0] : vector<8x128xf32> to vector<128xf32>
    %7 = vector.shape_cast %6 : vector<128xf32> to vector<1x128xf32>
    %cst_6 = arith.constant 8.000000e+00 : f32
    %8 = vector.broadcast %cst_6 : f32 to vector<1x128xf32>
    %9 = arith.divf %7, %8 : vector<1x128xf32>
    %10 = vector.broadcast %9 : vector<1x128xf32> to vector<8x128xf32>
    %11 = arith.subf %5, %10 : vector<8x128xf32>
    %12 = arith.mulf %11, %11 : vector<8x128xf32>
    %cst_7 = arith.constant dense<0.000000e+00> : vector<128xf32>
    %13 = vector.multi_reduction <add>, %12, %cst_7 [0] : vector<8x128xf32> to vector<128xf32>
    %14 = vector.shape_cast %13 : vector<128xf32> to vector<1x128xf32>
    %cst_8 = arith.constant 8.000000e+00 : f32
    %15 = vector.broadcast %cst_8 : f32 to vector<1x128xf32>
    %16 = arith.divf %14, %15 : vector<1x128xf32>
    %17 = vector.broadcast %9 : vector<1x128xf32> to vector<8x128xf32>
    %18 = arith.subf %5, %17 : vector<8x128xf32>
    %cst_9 = arith.constant 9.99999974E-6 : f32
    %19 = vector.broadcast %cst_9 : f32 to vector<1x128xf32>
    %20 = arith.addf %16, %19 : vector<1x128xf32>
    %21 = math.rsqrt %20 : vector<1x128xf32>
    %22 = vector.broadcast %21 : vector<1x128xf32> to vector<8x128xf32>
    %23 = arith.mulf %18, %22 : vector<8x128xf32>
    %c0_10 = arith.constant 0 : index
    %c0_11 = arith.constant 0 : index
    %24 = vector.load %arg3[%c0_10, %c0_11] : memref<1x128xf32, #tpu.memory_space<vmem>>, vector<1x128xf32>
    %25 = vector.broadcast %24 : vector<1x128xf32> to vector<8x128xf32>
    %26 = arith.mulf %23, %25 : vector<8x128xf32>
    %c0_12 = arith.constant 0 : index
    %c0_13 = arith.constant 0 : index
    %27 = vector.load %arg4[%c0_12, %c0_13] : memref<1x128xf32, #tpu.memory_space<vmem>>, vector<1x128xf32>
    %28 = vector.broadcast %27 : vector<1x128xf32> to vector<8x128xf32>
    %29 = arith.addf %26, %28 : vector<8x128xf32>
    %cst_14 = arith.constant 0.000000e+00 : f32
    %30 = vector.broadcast %cst_14 : f32 to vector<8x128xf32>
    %31 = arith.cmpf ogt, %29, %30 : vector<8x128xf32>
    %cst_15 = arith.constant 2.000000e-01 : f32
    %32 = vector.broadcast %cst_15 : f32 to vector<8x128xf32>
    %33 = arith.mulf %32, %29 : vector<8x128xf32>
    %34 = arith.select %31, %29, %33 : vector<8x128xi1>, vector<8x128xf32>
    %35 = arith.truncf %34 : vector<8x128xf32> to vector<8x128xbf16>
    %c0_16 = arith.constant 0 : index
    %c0_17 = arith.constant 0 : index
    %36 = vector.load %arg5[%c0_16, %c0_17] : memref<8x128xbf16, #tpu.memory_space<vmem>>, vector<8x128xbf16>
    tpu.vector_store %arg5[%c0_16, %c0_17], %35 {strides = array<i32>} : memref<8x128xbf16, #tpu.memory_space<vmem>>, vector<8x128xbf16>,
    return
  }
}

</mosaic_0001>

<llo_original>
// kernel: finet_forward.2
$region0: #{finet_forward.2}
  #allocation0 [shape = 'u32[]', space=smem, size = 0x4, offset = 0x4, fixed_abs, tag = 'smem constant byte address 0x4 - core index']
  #allocation1 [shape = 'u32[144,128]{1,0:T(1,128)}', space=vmem, size = 0x12000, scoped, tag = 'internal scratch']
  %s0 = inlined_call_operand.vmem [shape: f32[8,50], index: 0, kind: input, shape index: {}]
  %s1 = inlined_call_operand.hbm [shape: f32[50,128], index: 1, kind: input, shape index: {}]
  %s2 = inlined_call_operand.hbm [shape: f32[1,128], index: 2, kind: input, shape index: {}]
  %s3 = inlined_call_operand.hbm [shape: f32[1,128], index: 3, kind: input, shape index: {}]
  %s4 = inlined_call_operand.hbm [shape: f32[1,128], index: 4, kind: input, shape index: {}]
  %s5 = inlined_call_operand.vmem [shape: bf16[8,128], index: 5, kind: output, shape index: {}]
  %s6 = sld [smem:[#allocation0]]
  $region46: #{finet_forward.2} parent=0
    _
  %s8 = ssub.s32 1, %s6
  %s9 = scalar_select 0, %s8, %s6
  $region1: #{finet_forward.2} parent=0
    #allocation2 [shape = 'u8[28672]{0}', space=vmem, size = 0x7000, scoped, tag = 'input window, operand 1, single buffered']
    #allocation3 [shape = 's32[1]{0}', space=sflag, size = 0x4, scoped, tag = 'scoped memory for finet_forward.2']
    #allocation4 [shape = 'u8[512]{0}', space=vmem, size = 0x400, scoped, tag = 'input window, operand 2, single buffered']
    #allocation5 [shape = 's32[1]{0}', space=sflag, size = 0x4, scoped, tag = 'scoped memory for finet_forward.2']
    #allocation6 [shape = 'u8[512]{0}', space=vmem, size = 0x400, scoped, tag = 'input window, operand 3, single buffered']
    #allocation7 [shape = 'u8[512]{0}', space=vmem, size = 0x400, scoped, tag = 'input window, operand 4, single buffered']
    #allocation8 [shape = 's32[1]{0}', space=sflag, size = 0x4, scoped, tag = 'scoped memory for finet_forward.2']
    %10 = vsyncpa [#allocation3], 0
    %11 = vsyncpa [#allocation5], 0
    %12 = vsyncpa [#allocation8], 0
    // Predicated region
    $region2: #{finet_forward.2} parent=1 // pred_check
      _
    $region3: #{finet_forward.2} parent=1 // pred_check_branch
      %14 = sbr.rel (0) target = $region5
    $region4: #{finet_forward.2} parent=1 // pred_region
      _
    $region5: #{finet_forward.2} parent=1 // pred_fallthru
      _
    // Predicated region
    $region6: #{finet_forward.2} parent=1 // pred_check
      _
    $region7: #{finet_forward.2} parent=1 // pred_check_branch
      %16 = sbr.rel (0) target = $region9
    $region8: #{finet_forward.2} parent=1 // pred_region
      %s18 = ssub.s32 896, 896
      %19 = vsyncadd [#allocation3], %s18
      %s20 = sshll.u32 [#allocation2], 4
      %s21 = int_to_ptr.vmem [resolvable:$true] %s20
      %26 = dma.hbm_to_vmem [thread:$0]  %s1, 896, %s21, [#allocation3], 128, 128, 8
    $region9: #{finet_forward.2} parent=1 // pred_fallthru
      _
    // Predicated region
    $region10: #{finet_forward.2} parent=1 // pred_check
      _
    $region11: #{finet_forward.2} parent=1 // pred_check_branch
      %28 = sbr.rel (0) target = $region13
    $region12: #{finet_forward.2} parent=1 // pred_region
      %s30 = ssub.s32 16, 16
      %31 = vsyncadd [#allocation5], %s30
      %s33 = sshll.u32 [#allocation4], 4
      %s34 = int_to_ptr.vmem [resolvable:$true] %s33
      %36 = dma.hbm_to_vmem [thread:$0]  %s2, 16, %s34, [#allocation5]
    $region13: #{finet_forward.2} parent=1 // pred_fallthru
      _
    // Predicated region
    $region14: #{finet_forward.2} parent=1 // pred_check
      _
    $region15: #{finet_forward.2} parent=1 // pred_check_branch
      %38 = sbr.rel (0) target = $region17
    $region16: #{finet_forward.2} parent=1 // pred_region
      %s40 = ssub.s32 16, 16
      %41 = vsyncadd [#allocation5], %s40
      %s43 = sshll.u32 [#allocation6], 4
      %s44 = int_to_ptr.vmem [resolvable:$true] %s43
      %46 = dma.hbm_to_vmem [thread:$0]  %s3, 16, %s44, [#allocation5]
    $region17: #{finet_forward.2} parent=1 // pred_fallthru
      _
    // Predicated region
    $region18: #{finet_forward.2} parent=1 // pred_check
      _
    $region19: #{finet_forward.2} parent=1 // pred_check_branch
      %48 = sbr.rel (0) target = $region21
    $region20: #{finet_forward.2} parent=1 // pred_region
      %s50 = ssub.s32 16, 16
      %51 = vsyncadd [#allocation8], %s50
      %s53 = sshll.u32 [#allocation7], 4
      %s54 = int_to_ptr.vmem [resolvable:$true] %s53
      %56 = dma.hbm_to_vmem [thread:$0]  %s4, 16, %s54, [#allocation8]
    $region21: #{finet_forward.2} parent=1 // pred_fallthru
      _
    // Predicated region
    $region22: #{finet_forward.2} parent=1 // pred_check
      _
    $region23: #{finet_forward.2} parent=1 // pred_check_branch
      %58 = sbr.rel (0) target = $region25
    $region24: #{finet_forward.2} parent=1 // pred_region
      %59 = dma.done [#allocation3], 896
    $region25: #{finet_forward.2} parent=1 // pred_fallthru
      _
    // Predicated region
    $region26: #{finet_forward.2} parent=1 // pred_check
      _
    $region27: #{finet_forward.2} parent=1 // pred_check_branch
      %61 = sbr.rel (0) target = $region29
    $region28: #{finet_forward.2} parent=1 // pred_region
      %62 = dma.done [#allocation5], 16
    $region29: #{finet_forward.2} parent=1 // pred_fallthru
      _
    // Predicated region
    $region30: #{finet_forward.2} parent=1 // pred_check
      _
    $region31: #{finet_forward.2} parent=1 // pred_check_branch
      %64 = sbr.rel (0) target = $region33
    $region32: #{finet_forward.2} parent=1 // pred_region
      %65 = dma.done [#allocation5], 16
    $region33: #{finet_forward.2} parent=1 // pred_fallthru
      _
    // Predicated region
    $region34: #{finet_forward.2} parent=1 // pred_check
      _
    $region35: #{finet_forward.2} parent=1 // pred_check_branch
      %67 = sbr.rel (0) target = $region37
    $region36: #{finet_forward.2} parent=1 // pred_region
      %68 = dma.done [#allocation8], 16
    $region37: #{finet_forward.2} parent=1 // pred_fallthru
      _
    %v69 = vld [vmem:[%s0] sm:$0xff]
    %v70 = vld [vmem:[#allocation2] sm:$0xff]
    %v71 = vld [vmem:[#allocation2 + $0x8] sm:$0xff]
    %v72 = vld [vmem:[#allocation2 + $0x10] sm:$0xff]
    %v73 = vld [vmem:[#allocation2 + $0x18] sm:$0xff]
    %v74 = vld [vmem:[#allocation2 + $0x20] sm:$0xff]
    %v75 = vld [vmem:[#allocation2 + $0x28] sm:$0xff]
    %v76 = vld [vmem:[#allocation2 + $0x30] sm:$0x3]
    %v77 = vld [vmem:[#allocation4] sm:$0x1]
    %v79 = vlaneseq
    %v80 = vshrl.u32 %v79, 7
    %v81 = vsub.s32 0, %v80
    %v82 = vrot.slane %v77, %v81
    %vm84 = vcmask 408576
    %v86 = vsel %vm84, %v69, 0
    %vm88 = vcmask 1041408
    %v90 = vsel %vm88, %v76, 0
    %92 = vmatprep.subr.mxu0 0.0
    %93 = vmatpush1.msra.mxu0 0.0
    %94 = vmatprep.subr.mxu0 0.0
    %95 = vmatpush1.msra.mxu0 0.0
    %96 = vmatprep.subr.mxu0 0.0
    %97 = vmatpush1.msra.mxu0 0.0
    %98 = vmatprep.subr.mxu0 0.0
    %99 = vmatpush1.msra.mxu0 0.0
    %100 = vmatprep.subr.mxu0 0.0
    %101 = vmatpush1.msra.mxu0 0.0
    %102 = vmatprep.subr.mxu0 0.0
    %103 = vmatpush1.msra.mxu0 0.0
    %104 = vmatprep.subr.mxu0 0.0
    %105 = vmatpush1.msra.mxu0 0.0
    %106 = vmatprep.subr.mxu0 0.0
    %107 = vmatpush1.msra.mxu0 0.0
    %108 = vmatprep.subr.mxu0 0.0
    %109 = vmatpush1.msra.mxu0 0.0
    %110 = vmatprep.subr.mxu0 0.0
    %111 = vmatpush1.msra.mxu0 %v90
    %112 = vmatprep.subr.mxu0 0.0
    %113 = vmatpush1.msra.mxu0 %v75
    %114 = vmatprep.subr.mxu0 0.0
    %115 = vmatpush1.msra.mxu0 %v74
    %116 = vmatprep.subr.mxu0 0.0
    %117 = vmatpush1.msra.mxu0 %v73
    %118 = vmatprep.subr.mxu0 0.0
    %119 = vmatpush1.msra.mxu0 %v72
    %120 = vmatprep.subr.mxu0 0.0
    %121 = vmatpush1.msra.mxu0 %v71
    %122 = vmatprep.subr.mxu0 0.0
    %123 = vmatpush1.msra.mxu0 %v70
    %124 = vmatprep.subr.mxu0 0.0
    %125 = vmatpush2.msra.mxu0 0.0
    %126 = vmatprep.subr.mxu0 0.0
    %127 = vmatpush2.msra.mxu0 0.0
    %128 = vmatprep.subr.mxu0 0.0
    %129 = vmatpush2.msra.mxu0 0.0
    %130 = vmatprep.subr.mxu0 0.0
    %131 = vmatpush2.msra.mxu0 0.0
    %132 = vmatprep.subr.mxu0 0.0
    %133 = vmatpush2.msra.mxu0 0.0
    %134 = vmatprep.subr.mxu0 0.0
    %135 = vmatpush2.msra.mxu0 0.0
    %136 = vmatprep.subr.mxu0 0.0
    %137 = vmatpush2.msra.mxu0 0.0
    %138 = vmatprep.subr.mxu0 0.0
    %139 = vmatpush2.msra.mxu0 0.0
    %140 = vmatprep.subr.mxu0 0.0
    %141 = vmatpush2.msra.mxu0 0.0
    %142 = vmatprep.subr.mxu0 0.0
    %143 = vmatpush2.msra.mxu0 0.0
    %144 = vmatprep.subr.mxu0 0.0
    %145 = vmatpush2.msra.mxu0 0.0
    %146 = vmatprep.subr.mxu0 0.0
    %147 = vmatpush2.msra.mxu0 0.0
    %148 = vmatprep.subr.mxu0 0.0
    %149 = vmatpush2.msra.mxu0 0.0
    %150 = vmatprep.subr.mxu0 0.0
    %151 = vmatpush2.msra.mxu0 0.0
    %152 = vmatprep.subr.mxu0 0.0
    %153 = vmatpush2.msra.mxu0 0.0
    %154 = vmatprep.subr.mxu0 0.0
    %155 = vmatpush2.msra.mxu0 0.0
    %156 = vmatprep.mubr.f32.mxu0 0.0
    %157 = vmatmul.mubr.f32.gmra.mxu0 %v86
    %v158 = vpop.f32.mrf.mxu0
    %v159 = vadd.f32 %v82, %v158
    %v160 = vpop.f32.mrf.mxu0
    %161 = vdwg.mxu0
    %v162 = vrot.slane %v159, 4
    %v163 = vadd.f32 %v159, %v162
    %v164 = vrot.slane %v163, 2
    %v165 = vadd.f32 %v163, %v164
    %v166 = vrot.slane %v165, 1
    %v167 = vadd.f32 %v165, %v166
    %v168 = vrcp.pop 8.0
    %v169 = vmul.f32 %v167, %v168
    %v170 = vsub.f32 %v159, %v169
    %v171 = vmul.f32 %v170, %v170
    %v172 = vrot.slane %v171, 4
    %v173 = vadd.f32 %v171, %v172
    %v174 = vrot.slane %v173, 2
    %v175 = vadd.f32 %v173, %v174
    %v176 = vrot.slane %v175, 1
    %v177 = vadd.f32 %v175, %v176
    %v178 = vmul.f32 %v177, %v168
    %v179 = vadd.f32 %v178, 1e-05
    %v180 = vrsqrt.pop %v179
    %v181 = vmul.f32 %v170, %v180
    %v182 = vld [vmem:[#allocation6] sm:$0x1]
    %v184 = vlaneseq
    %v185 = vshrl.u32 %v184, 7
    %v186 = vsub.s32 0, %v185
    %v187 = vrot.slane %v182, %v186
    %v189 = vmul.f32 %v181, %v187
    %v190 = vld [vmem:[#allocation7] sm:$0x1]
    %v192 = vlaneseq
    %v193 = vshrl.u32 %v192, 7
    %v194 = vsub.s32 0, %v193
    %v195 = vrot.slane %v190, %v194
    %v197 = vadd.f32 %v189, %v195
    %vm198 = vcmp.gt.f32.partialorder %v197, 0.0
    %v199 = vmul.f32 %v197, 0.2
    %v200 = vsel %vm198, %v197, %v199
    %v201 = vpack.c.bf16 %v200, %v200
    %202 = vst [vmem:[%s5] sm:$0xf] %v201
    // Predicated region
    $region38: #{finet_forward.2} parent=1 // pred_check
      _
    $region39: #{finet_forward.2} parent=1 // pred_check_branch
      %204 = sbr.rel (0) target = $region41
    $region40: #{finet_forward.2} parent=1 // pred_region
      _
    $region41: #{finet_forward.2} parent=1 // pred_fallthru
      _
    // Predicated region
    $region42: #{finet_forward.2} parent=1 // pred_check
      _
    $region43: #{finet_forward.2} parent=1 // pred_check_branch
      %206 = sbr.rel (0) target = $region45
    $region44: #{finet_forward.2} parent=1 // pred_region
      _
    $region45: #{finet_forward.2} parent=1 // pred_fallthru
      _
    %207 = vsyncpa [#allocation3], 1
    %208 = vsyncpa [#allocation5], 1
    %209 = vsyncpa [#allocation8], 1

// kernel: finet_forward.3
$region0: #{finet_forward.3}
  #allocation0 [shape = 'u32[]', space=smem, size = 0x4, offset = 0x4, fixed_abs, tag = 'smem constant byte address 0x4 - core index']
  #allocation1 [shape = 'u32[144,128]{1,0:T(1,128)}', space=vmem, size = 0x12000, scoped, tag = 'internal scratch']
  %s0 = inlined_call_operand.vmem [shape: bf16[8,128], index: 0, kind: input, shape index: {}]
  %s1 = inlined_call_operand.hbm [shape: bf16[128,90112], index: 1, kind: input, shape index: {}]
  %s2 = inlined_call_operand.hbm [shape: f32[1,90112], index: 2, kind: input, shape index: {}]
  %s3 = inlined_call_operand.vmem [shape: f32[8,90112], index: 3, kind: output, shape index: {}]
  %s4 = sld [smem:[#allocation0]]
  $region53: #{finet_forward.3} parent=0
    _
  %s6 = ssub.s32 1, %s4
  %s7 = scalar_select 0, %s6, %s4
  $region1: #{finet_forward.3} parent=0
    #allocation2 [shape = 'u8[5767168]{0}', space=vmem, size = 0x580000, scoped, tag = 'input window, operand 1']
    #allocation3 [shape = 's32[2]{0}', space=sflag, size = 0x8, scoped, tag = 'scoped memory for finet_forward.3']
    #allocation4 [shape = 'u8[90112]{0}', space=vmem, size = 0x16000, scoped, tag = 'input window, operand 2']
    #allocation5 [shape = 's32[2]{0}', space=sflag, size = 0x8, scoped, tag = 'scoped memory for finet_forward.3']
    %8 = vsyncpa [#allocation3], 0
    %s9 = scalar_lea.sflag [#allocation3], 1
    %10 = vsyncpa %s9, 0
    %11 = vsyncpa [#allocation5], 0
    %s12 = scalar_lea.sflag [#allocation5], 1
    %13 = vsyncpa %s12, 0
    loop: start=0, step=1, limit=10
    $region2: #{finet_forward.3} parent=1 // loop_pre_header
      _
    $region3: #{finet_forward.3} parent=1 // loop_header
      %s15 = sphi 0, %s19
      %p16 = scmp.ge.s32.totalorder %s15, 10
      %s23 = sphi 0, %s23
      %s25 = sphi 0, %s23
      %s26 = sphi 0, %s25
      %s40 = sphi 0, %s26
      %s46 = sphi 0, %s48
      %s49 = sphi 0, %s46
      %s50 = sphi 0, %s49
      %s66 = sphi 0, %s50
      %s72 = sphi 0, %s74
      %s75 = sphi 0, %s72
      %s76 = sphi 0, %s75
      %s92 = sphi 0, %s76
      %s98 = sphi 0, %s100
      %s101 = sphi 0, %s98
      %s102 = sphi 0, %s101
      %s118 = sphi 0, %s102
    $region4: #{finet_forward.3} parent=1 // loop_header_branch
      %18 = sbr.rel (%p16) target = $region8
    $region5: #{finet_forward.3} parent=1 // loop_body
      %s20 = ssub.s32 %s15, 1
      %s21 = ssub.s32 %s15, 2
      %s22 = sadd.s32 %s15, 1
      %s24 = sadd.s32 %s23, 1
      %p27 = scmp.eq.s32.totalorder %s15, 7
      %p28 = scmp.ne.s32.totalorder %s23, %s25
      %p29 = scmp.eq.s32.totalorder %s15, 0
      %p30 = por %p28, %p29
      %p31 = scmp.ne.s32.totalorder %s23, %s25
      %p32 = scmp.eq.s32.totalorder %s20, 7
      %p33 = por %p31, %p32
      %p34 = scmp.ne.s32.totalorder %s25, %s26
      %p35 = scmp.eq.s32.totalorder %s20, 0
      %p36 = por %p34, %p35
      %p37 = scmp.ne.s32.totalorder %s25, %s26
      %p38 = scmp.eq.s32.totalorder %s21, 7
      %p39 = por %p37, %p38
      %p41 = scmp.ne.s32.totalorder %s26, %s40
      %p42 = scmp.eq.s32.totalorder %s21, 0
      %p43 = por %p41, %p42
      %s44 = ssub.s32 %s15, %s22
      %p45 = scmp.eq.s32.totalorder %s44, 0
      %s47 = sadd.s32 %s46, 1
      %s48 = scalar_select %p45, %s46, %s47
      %p51 = pneg %p45
      %p52 = scmp.eq.s32.totalorder %s15, 7
      %p53 = por %p51, %p52
      %p54 = scmp.ne.s32.totalorder %s46, %s49
      %p55 = scmp.eq.s32.totalorder %s15, 0
      %p56 = por %p54, %p55
      %p57 = scmp.ne.s32.totalorder %s46, %s49
      %p58 = scmp.eq.s32.totalorder %s20, 7
      %p59 = por %p57, %p58
      %p60 = scmp.ne.s32.totalorder %s49, %s50
      %p61 = scmp.eq.s32.totalorder %s20, 0
      %p62 = por %p60, %p61
      %p63 = scmp.ne.s32.totalorder %s49, %s50
      %p64 = scmp.eq.s32.totalorder %s21, 7
      %p65 = por %p63, %p64
      %p67 = scmp.ne.s32.totalorder %s50, %s66
      %p68 = scmp.eq.s32.totalorder %s21, 0
      %p69 = por %p67, %p68
      %s70 = ssub.s32 %s15, %s22
      %p71 = scmp.eq.s32.totalorder %s70, 0
      %s73 = sadd.s32 %s72, 1
      %s74 = scalar_select %p71, %s72, %s73
      %p77 = pneg %p71
      %p78 = scmp.eq.s32.totalorder %s15, 7
      %p79 = por %p77, %p78
      %p80 = scmp.ne.s32.totalorder %s72, %s75
      %p81 = scmp.eq.s32.totalorder %s15, 0
      %p82 = por %p80, %p81
      %p83 = scmp.ne.s32.totalorder %s72, %s75
      %p84 = scmp.eq.s32.totalorder %s20, 7
      %p85 = por %p83, %p84
      %p86 = scmp.ne.s32.totalorder %s75, %s76
      %p87 = scmp.eq.s32.totalorder %s20, 0
      %p88 = por %p86, %p87
      %p89 = scmp.ne.s32.totalorder %s75, %s76
      %p90 = scmp.eq.s32.totalorder %s21, 7
      %p91 = por %p89, %p90
      %p93 = scmp.ne.s32.totalorder %s76, %s92
      %p94 = scmp.eq.s32.totalorder %s21, 0
      %p95 = por %p93, %p94
      %s96 = ssub.s32 %s15, %s22
      %p97 = scmp.eq.s32.totalorder %s96, 0
      %s99 = sadd.s32 %s98, 1
      %s100 = scalar_select %p97, %s98, %s99
      %p103 = pneg %p97
      %p104 = scmp.eq.s32.totalorder %s15, 7
      %p105 = por %p103, %p104
      %p106 = scmp.ne.s32.totalorder %s98, %s101
      %p107 = scmp.eq.s32.totalorder %s15, 0
      %p108 = por %p106, %p107
      %p109 = scmp.ne.s32.totalorder %s98, %s101
      %p110 = scmp.eq.s32.totalorder %s20, 7
      %p111 = por %p109, %p110
      %p112 = scmp.ne.s32.totalorder %s101, %s102
      %p113 = scmp.eq.s32.totalorder %s20, 0
      %p114 = por %p112, %p113
      %p115 = scmp.ne.s32.totalorder %s101, %s102
      %p116 = scmp.eq.s32.totalorder %s21, 7
      %p117 = por %p115, %p116
      %p119 = scmp.ne.s32.totalorder %s102, %s118
      %p120 = scmp.eq.s32.totalorder %s21, 0
      %p121 = por %p119, %p120
      %p122 = scmp.le.s32.totalorder 1, %s15
      %p123 = scmp.lt.s32.totalorder %s15, 9
      %p124 = pnand %p122, %p123
      %p125 = pneg %p124
      // Predicated region
      $region9: #{finet_forward.3} parent=5 // pred_check
        _
      $region10: #{finet_forward.3} parent=5 // pred_check_branch
        %127 = sbr.rel (%p124) target = $region12
      $region11: #{finet_forward.3} parent=5 // pred_region
        %s128 = ssub.s32 %s15, 1
        // Predicated region
        $region13: #{finet_forward.3} parent=11 // pred_check
          %p129 = pneg %p36
        $region14: #{finet_forward.3} parent=11 // pred_check_branch
          %131 = sbr.rel (%p129) target = $region16
        $region15: #{finet_forward.3} parent=11 // pred_region
          _
        $region16: #{finet_forward.3} parent=11 // pred_fallthru
          _
      $region12: #{finet_forward.3} parent=5 // pred_fallthru
        _
      %p132 = scmp.lt.s32.totalorder %s15, 8
      // Predicated region
      $region17: #{finet_forward.3} parent=5 // pred_check
        %p133 = pneg %p132
      $region18: #{finet_forward.3} parent=5 // pred_check_branch
        %135 = sbr.rel (%p133) target = $region20
      $region19: #{finet_forward.3} parent=5 // pred_region
        // Predicated region
        $region21: #{finet_forward.3} parent=19 // pred_check
          %p136 = pneg %p56
        $region22: #{finet_forward.3} parent=19 // pred_check_branch
          %138 = sbr.rel (%p136) target = $region24
        $region23: #{finet_forward.3} parent=19 // pred_region
          %s139 = sand.u32 %s46, 1
          %s140 = scalar_lea.sflag [#allocation3], %s139
          %s141 = sand.u32 %s46, 1
          %s142 = smul.addr %s141, 5632
          %s143 = scalar_lea.vmem [#allocation2], %s142
          %s144 = smul.u32 88, %s15
          %s146 = ssub.s32 90112, 90112
          %147 = vsyncadd %s140, %s146
          %s148 = smul.addr %s144, 64
          %s149 = scalar_lea.hbm %s1, %s148
          %s150 = sshll.u32 %s143, 4
          %s151 = int_to_ptr.vmem [resolvable:$true] %s150
          %156 = dma.hbm_to_vmem [thread:$0]  %s149, 90112, %s151, %s140, 45056, 5632, 352
        $region24: #{finet_forward.3} parent=19 // pred_fallthru
          _
        // Predicated region
        $region25: #{finet_forward.3} parent=19 // pred_check
          %p157 = pneg %p82
        $region26: #{finet_forward.3} parent=19 // pred_check_branch
          %159 = sbr.rel (%p157) target = $region28
        $region27: #{finet_forward.3} parent=19 // pred_region
          %s160 = sand.u32 %s72, 1
          %s161 = scalar_lea.sflag [#allocation5], %s160
          %s162 = sand.u32 %s72, 1
          %s163 = smul.addr %s162, 88
          %s164 = scalar_lea.vmem [#allocation4], %s163
          %s165 = smul.u32 88, %s15
          %s167 = ssub.s32 1408, 1408
          %168 = vsyncadd %s161, %s167
          %s169 = smul.addr %s165, 16
          %s170 = scalar_lea.hbm %s2, %s169
          %s172 = sshll.u32 %s164, 4
          %s173 = int_to_ptr.vmem [resolvable:$true] %s172
          %175 = dma.hbm_to_vmem [thread:$0]  %s170, 1408, %s173, %s161
        $region28: #{finet_forward.3} parent=19 // pred_fallthru
          _
      $region20: #{finet_forward.3} parent=5 // pred_fallthru
        _
      %p176 = scmp.le.s32.totalorder 1, %s15
      %p177 = scmp.lt.s32.totalorder %s15, 9
      %p178 = pnand %p176, %p177
      %p179 = pneg %p178
      // Predicated region
      $region29: #{finet_forward.3} parent=5 // pred_check
        _
      $region30: #{finet_forward.3} parent=5 // pred_check_branch
        %181 = sbr.rel (%p178) target = $region32
      $region31: #{finet_forward.3} parent=5 // pred_region
        %s182 = ssub.s32 %s15, 1
        %s183 = sand.u32 %s49, 1
        %s184 = scalar_lea.sflag [#allocation3], %s183
        %s185 = sand.u32 %s49, 1
        %s186 = smul.addr %s185, 5632
        %s187 = scalar_lea.vmem [#allocation2], %s186
        // Predicated region
        $region33: #{finet_forward.3} parent=31 // pred_check
          %p188 = pneg %p62
        $region34: #{finet_forward.3} parent=31 // pred_check_branch
          %190 = sbr.rel (%p188) target = $region36
        $region35: #{finet_forward.3} parent=31 // pred_region
          %191 = dma.done %s184, 90112
        $region36: #{finet_forward.3} parent=31 // pred_fallthru
          _
        %s192 = sand.u32 %s75, 1
        %s193 = scalar_lea.sflag [#allocation5], %s192
        %s194 = sand.u32 %s75, 1
        %s195 = smul.addr %s194, 88
        %s196 = scalar_lea.vmem [#allocation4], %s195
        // Predicated region
        $region37: #{finet_forward.3} parent=31 // pred_check
          %p197 = pneg %p88
        $region38: #{finet_forward.3} parent=31 // pred_check_branch
          %199 = sbr.rel (%p197) target = $region40
        $region39: #{finet_forward.3} parent=31 // pred_region
          %200 = dma.done %s193, 1408
        $region40: #{finet_forward.3} parent=31 // pred_fallthru
          _
        %p201 = pneg %p36
        %p202 = pneg %p33
        %s203 = sand.u32 %s49, 1
        %s204 = scalar_lea.sflag [#allocation3], %s203
        %s205 = sand.u32 %s49, 1
        %s206 = smul.addr %s205, 5632
        %s207 = scalar_lea.vmem [#allocation2], %s206
        %p208 = pneg %p62
        %p209 = pneg %p59
        %s210 = sand.u32 %s75, 1
        %s211 = scalar_lea.sflag [#allocation5], %s210
        %s212 = sand.u32 %s75, 1
        %s213 = smul.addr %s212, 88
        %s214 = scalar_lea.vmem [#allocation4], %s213
        %p215 = pneg %p88
        %p216 = pneg %p85
        %p217 = pneg %p114
        %p218 = pneg %p111
        %s219 = smul.u32 88, %s20
        %p220 = scmp.lt.s32.totalorder %s219, 703
        %s221 = scalar_select %p220, %s219, 703
        %s222 = smul.addr %s221, 8
        %s223 = scalar_lea.vmem %s3, %s222
        %s224 = smul.u32 88, %s20
        %s225 = smul.u32 88, %s20
        %s226 = smul.u32 88, %s20
        %p227 = scmp.lt.s32.totalorder %s226, 703
        %s228 = scalar_select %p227, %s226, 703
        %s229 = smul.addr %s228, 8
        %s230 = scalar_lea.vmem %s3, %s229
        %s231 = smul.u32 88, %s20
        %v233 = vld [vmem:[%s0] sm:$0xf]
        %v234 = vld [vmem:[%s187] sm:$0xff]
        %v235 = vld [vmem:[%s187 + $0x8] sm:$0xff]
        %v236 = vld [vmem:[%s187 + $0x10] sm:$0xff]
        %v237 = vld [vmem:[%s187 + $0x18] sm:$0xff]
        %v238 = vld [vmem:[%s187 + $0x20] sm:$0xff]
        %v239 = vld [vmem:[%s187 + $0x28] sm:$0xff]
        %v240 = vld [vmem:[%s187 + $0x30] sm:$0xff]
        %v241 = vld [vmem:[%s187 + $0x38] sm:$0xff]
        %v242 = vld [vmem:[%s187 + $0x40] sm:$0xff]
        %v243 = vld [vmem:[%s187 + $0x48] sm:$0xff]
        %v244 = vld [vmem:[%s187 + $0x50] sm:$0xff]
        %v245 = vld [vmem:[%s187 + $0x58] sm:$0xff]
        %v246 = vld [vmem:[%s187 + $0x60] sm:$0xff]
        %v247 = vld [vmem:[%s187 + $0x68] sm:$0xff]
        %v248 = vld [vmem:[%s187 + $0x70] sm:$0xff]
        %v249 = vld [vmem:[%s187 + $0x78] sm:$0xff]
        %v250 = vld [vmem:[%s187 + $0x80] sm:$0xff]
        %v251 = vld [vmem:[%s187 + $0x88] sm:$0xff]
        %v252 = vld [vmem:[%s187 + $0x90] sm:$0xff]
        %v253 = vld [vmem:[%s187 + $0x98] sm:$0xff]
        %v254 = vld [vmem:[%s187 + $0xa0] sm:$0xff]
        %v255 = vld [vmem:[%s187 + $0xa8] sm:$0xff]
        %v256 = vld [vmem:[%s187 + $0xb0] sm:$0xff]
        %v257 = vld [vmem:[%s187 + $0xb8] sm:$0xff]
        %v258 = vld [vmem:[%s187 + $0xc0] sm:$0xff]
        %v259 = vld [vmem:[%s187 + $0xc8] sm:$0xff]
        %v260 = vld [vmem:[%s187 + $0xd0] sm:$0xff]
        %v261 = vld [vmem:[%s187 + $0xd8] sm:$0xff]
        %v262 = vld [vmem:[%s187 + $0xe0] sm:$0xff]
        %v263 = vld [vmem:[%s187 + $0xe8] sm:$0xff]
        %v264 = vld [vmem:[%s187 + $0xf0] sm:$0xff]
        %v265 = vld [vmem:[%s187 + $0xf8] sm:$0xff]
        %v266 = vld [vmem:[%s187 + $0x100] sm:$0xff]
        %v267 = vld [vmem:[%s187 + $0x108] sm:$0xff]
        %v268 = vld [vmem:[%s187 + $0x110] sm:$0xff]
        %v269 = vld [vmem:[%s187 + $0x118] sm:$0xff]
        %v270 = vld [vmem:[%s187 + $0x120] sm:$0xff]
        %v271 = vld [vmem:[%s187 + $0x128] sm:$0xff]
        %v272 = vld [vmem:[%s187 + $0x130] sm:$0xff]
        %v273 = vld [vmem:[%s187 + $0x138] sm:$0xff]
        %v274 = vld [vmem:[%s187 + $0x140] sm:$0xff]
        %v275 = vld [vmem:[%s187 + $0x148] sm:$0xff]
        %v276 = vld [vmem:[%s187 + $0x150] sm:$0xff]
        %v277 = vld [vmem:[%s187 + $0x158] sm:$0xff]
        %v278 = vld [vmem:[%s187 + $0x160] sm:$0xff]
        %v279 = vld [vmem:[%s187 + $0x168] sm:$0xff]
        %v280 = vld [vmem:[%s187 + $0x170] sm:$0xff]
        %v281 = vld [vmem:[%s187 + $0x178] sm:$0xff]
        %v282 = vld [vmem:[%s187 + $0x180] sm:$0xff]
        %v283 = vld [vmem:[%s187 + $0x188] sm:$0xff]
        %v284 = vld [vmem:[%s187 + $0x190] sm:$0xff]
        %v285 = vld [vmem:[%s187 + $0x198] sm:$0xff]
        %v286 = vld [vmem:[%s187 + $0x1a0] sm:$0xff]
        %v287 = vld [vmem:[%s187 + $0x1a8] sm:$0xff]
        %v288 = vld [vmem:[%s187 + $0x1b0] sm:$0xff]
        %v289 = vld [vmem:[%s187 + $0x1b8] sm:$0xff]
        %v290 = vld [vmem:[%s187 + $0x1c0] sm:$0xff]
        %v291 = vld [vmem:[%s187 + $0x1c8] sm:$0xff]
        %v292 = vld [vmem:[%s187 + $0x1d0] sm:$0xff]
        %v293 = vld [vmem:[%s187 + $0x1d8] sm:$0xff]
        %v294 = vld [vmem:[%s187 + $0x1e0] sm:$0xff]
        %v295 = vld [vmem:[%s187 + $0x1e8] sm:$0xff]
        %v296 = vld [vmem:[%s187 + $0x1f0] sm:$0xff]
        %v297 = vld [vmem:[%s187 + $0x1f8] sm:$0xff]
        %v298 = vld [vmem:[%s187 + $0x200] sm:$0xff]
        %v299 = vld [vmem:[%s187 + $0x208] sm:$0xff]
        %v300 = vld [vmem:[%s187 + $0x210] sm:$0xff]
        %v301 = vld [vmem:[%s187 + $0x218] sm:$0xff]
        %v302 = vld [vmem:[%s187 + $0x220] sm:$0xff]
        %v303 = vld [vmem:[%s187 + $0x228] sm:$0xff]
        %v304 = vld [vmem:[%s187 + $0x230] sm:$0xff]
        %v305 = vld [vmem:[%s187 + $0x238] sm:$0xff]
        %v306 = vld [vmem:[%s187 + $0x240] sm:$0xff]
        %v307 = vld [vmem:[%s187 + $0x248] sm:$0xff]
        %v308 = vld [vmem:[%s187 + $0x250] sm:$0xff]
        %v309 = vld [vmem:[%s187 + $0x258] sm:$0xff]
        %v310 = vld [vmem:[%s187 + $0x260] sm:$0xff]
        %v311 = vld [vmem:[%s187 + $0x268] sm:$0xff]
        %v312 = vld [vmem:[%s187 + $0x270] sm:$0xff]
        %v313 = vld [vmem:[%s187 + $0x278] sm:$0xff]
        %v314 = vld [vmem:[%s187 + $0x280] sm:$0xff]
        %v315 = vld [vmem:[%s187 + $0x288] sm:$0xff]
        %v316 = vld [vmem:[%s187 + $0x290] sm:$0xff]
        %v317 = vld [vmem:[%s187 + $0x298] sm:$0xff]
        %v318 = vld [vmem:[%s187 + $0x2a0] sm:$0xff]
        %v319 = vld [vmem:[%s187 + $0x2a8] sm:$0xff]
        %v320 = vld [vmem:[%s187 + $0x2b0] sm:$0xff]
        %v321 = vld [vmem:[%s187 + $0x2b8] sm:$0xff]
        %v322 = vld [vmem:[%s187 + $0x2c0] sm:$0xff]
        %v323 = vld [vmem:[%s187 + $0x2c8] sm:$0xff]
        %v324 = vld [vmem:[%s187 + $0x2d0] sm:$0xff]
        %v325 = vld [vmem:[%s187 + $0x2d8] sm:$0xff]
        %v326 = vld [vmem:[%s187 + $0x2e0] sm:$0xff]
        %v327 = vld [vmem:[%s187 + $0x2e8] sm:$0xff]
        %v328 = vld [vmem:[%s187 + $0x2f0] sm:$0xff]
        %v329 = vld [vmem:[%s187 + $0x2f8] sm:$0xff]
        %v330 = vld [vmem:[%s187 + $0x300] sm:$0xff]
        %v331 = vld [vmem:[%s187 + $0x308] sm:$0xff]
        %v332 = vld [vmem:[%s187 + $0x310] sm:$0xff]
        %v333 = vld [vmem:[%s187 + $0x318] sm:$0xff]
        %v334 = vld [vmem:[%s187 + $0x320] sm:$0xff]
        %v335 = vld [vmem:[%s187 + $0x328] sm:$0xff]
        %v336 = vld [vmem:[%s187 + $0x330] sm:$0xff]
        %v337 = vld [vmem:[%s187 + $0x338] sm:$0xff]
        %v338 = vld [vmem:[%s187 + $0x340] sm:$0xff]
        %v339 = vld [vmem:[%s187 + $0x348] sm:$0xff]
        %v340 = vld [vmem:[%s187 + $0x350] sm:$0xff]
        %v341 = vld [vmem:[%s187 + $0x358] sm:$0xff]
        %v342 = vld [vmem:[%s187 + $0x360] sm:$0xff]
        %v343 = vld [vmem:[%s187 + $0x368] sm:$0xff]
        %v344 = vld [vmem:[%s187 + $0x370] sm:$0xff]
        %v345 = vld [vmem:[%s187 + $0x378] sm:$0xff]
        %v346 = vld [vmem:[%s187 + $0x380] sm:$0xff]
        %v347 = vld [vmem:[%s187 + $0x388] sm:$0xff]
        %v348 = vld [vmem:[%s187 + $0x390] sm:$0xff]
        %v349 = vld [vmem:[%s187 + $0x398] sm:$0xff]
        %v350 = vld [vmem:[%s187 + $0x3a0] sm:$0xff]
        %v351 = vld [vmem:[%s187 + $0x3a8] sm:$0xff]
        %v352 = vld [vmem:[%s187 + $0x3b0] sm:$0xff]
        %v353 = vld [vmem:[%s187 + $0x3b8] sm:$0xff]
        %v354 = vld [vmem:[%s187 + $0x3c0] sm:$0xff]
        %v355 = vld [vmem:[%s187 + $0x3c8] sm:$0xff]
        %v356 = vld [vmem:[%s187 + $0x3d0] sm:$0xff]
        %v357 = vld [vmem:[%s187 + $0x3d8] sm:$0xff]
        %v358 = vld [vmem:[%s187 + $0x3e0] sm:$0xff]
        %v359 = vld [vmem:[%s187 + $0x3e8] sm:$0xff]
        %v360 = vld [vmem:[%s187 + $0x3f0] sm:$0xff]
        %v361 = vld [vmem:[%s187 + $0x3f8] sm:$0xff]
        %v362 = vld [vmem:[%s187 + $0x400] sm:$0xff]
        %v363 = vld [vmem:[%s187 + $0x408] sm:$0xff]
        %v364 = vld [vmem:[%s187 + $0x410] sm:$0xff]
        %v365 = vld [vmem:[%s187 + $0x418] sm:$0xff]
        %v366 = vld [vmem:[%s187 + $0x420] sm:$0xff]
        %v367 = vld [vmem:[%s187 + $0x428] sm:$0xff]
        %v368 = vld [vmem:[%s187 + $0x430] sm:$0xff]
        %v369 = vld [vmem:[%s187 + $0x438] sm:$0xff]
        %v370 = vld [vmem:[%s187 + $0x440] sm:$0xff]
        %v371 = vld [vmem:[%s187 + $0x448] sm:$0xff]
        %v372 = vld [vmem:[%s187 + $0x450] sm:$0xff]
        %v373 = vld [vmem:[%s187 + $0x458] sm:$0xff]
        %v374 = vld [vmem:[%s187 + $0x460] sm:$0xff]
        %v375 = vld [vmem:[%s187 + $0x468] sm:$0xff]
        %v376 = vld [vmem:[%s187 + $0x470] sm:$0xff]
        %v377 = vld [vmem:[%s187 + $0x478] sm:$0xff]
        %v378 = vld [vmem:[%s187 + $0x480] sm:$0xff]
        %v379 = vld [vmem:[%s187 + $0x488] sm:$0xff]
        %v380 = vld [vmem:[%s187 + $0x490] sm:$0xff]
        %v381 = vld [vmem:[%s187 + $0x498] sm:$0xff]
        %v382 = vld [vmem:[%s187 + $0x4a0] sm:$0xff]
        %v383 = vld [vmem:[%s187 + $0x4a8] sm:$0xff]
        %v384 = vld [vmem:[%s187 + $0x4b0] sm:$0xff]
        %v385 = vld [vmem:[%s187 + $0x4b8] sm:$0xff]
        %v386 = vld [vmem:[%s187 + $0x4c0] sm:$0xff]
        %v387 = vld [vmem:[%s187 + $0x4c8] sm:$0xff]
        %v388 = vld [vmem:[%s187 + $0x4d0] sm:$0xff]
        %v389 = vld [vmem:[%s187 + $0x4d8] sm:$0xff]
        %v390 = vld [vmem:[%s187 + $0x4e0] sm:$0xff]
        %v391 = vld [vmem:[%s187 + $0x4e8] sm:$0xff]
        %v392 = vld [vmem:[%s187 + $0x4f0] sm:$0xff]
        %v393 = vld [vmem:[%s187 + $0x4f8] sm:$0xff]
        %v394 = vld [vmem:[%s187 + $0x500] sm:$0xff]
        %v395 = vld [vmem:[%s187 + $0x508] sm:$0xff]
        %v396 = vld [vmem:[%s187 + $0x510] sm:$0xff]
        %v397 = vld [vmem:[%s187 + $0x518] sm:$0xff]
        %v398 = vld [vmem:[%s187 + $0x520] sm:$0xff]
        %v399 = vld [vmem:[%s187 + $0x528] sm:$0xff]
        %v400 = vld [vmem:[%s187 + $0x530] sm:$0xff]
        %v401 = vld [vmem:[%s187 + $0x538] sm:$0xff]
        %v402 = vld [vmem:[%s187 + $0x540] sm:$0xff]
        %v403 = vld [vmem:[%s187 + $0x548] sm:$0xff]
        %v404 = vld [vmem:[%s187 + $0x550] sm:$0xff]
        %v405 = vld [vmem:[%s187 + $0x558] sm:$0xff]
        %v406 = vld [vmem:[%s187 + $0x560] sm:$0xff]
        %v407 = vld [vmem:[%s187 + $0x568] sm:$0xff]
        %v408 = vld [vmem:[%s187 + $0x570] sm:$0xff]
        %v409 = vld [vmem:[%s187 + $0x578] sm:$0xff]
        %v410 = vld [vmem:[%s187 + $0x580] sm:$0xff]
        %v411 = vld [vmem:[%s187 + $0x588] sm:$0xff]
        %v412 = vld [vmem:[%s187 + $0x590] sm:$0xff]
        %v413 = vld [vmem:[%s187 + $0x598] sm:$0xff]
        %v414 = vld [vmem:[%s187 + $0x5a0] sm:$0xff]
        %v415 = vld [vmem:[%s187 + $0x5a8] sm:$0xff]
        %v416 = vld [vmem:[%s187 + $0x5b0] sm:$0xff]
        %v417 = vld [vmem:[%s187 + $0x5b8] sm:$0xff]
        %v418 = vld [vmem:[%s187 + $0x5c0] sm:$0xff]
        %v419 = vld [vmem:[%s187 + $0x5c8] sm:$0xff]
        %v420 = vld [vmem:[%s187 + $0x5d0] sm:$0xff]
        %v421 = vld [vmem:[%s187 + $0x5d8] sm:$0xff]
        %v422 = vld [vmem:[%s187 + $0x5e0] sm:$0xff]
        %v423 = vld [vmem:[%s187 + $0x5e8] sm:$0xff]
        %v424 = vld [vmem:[%s187 + $0x5f0] sm:$0xff]
        %v425 = vld [vmem:[%s187 + $0x5f8] sm:$0xff]
        %v426 = vld [vmem:[%s187 + $0x600] sm:$0xff]
        %v427 = vld [vmem:[%s187 + $0x608] sm:$0xff]
        %v428 = vld [vmem:[%s187 + $0x610] sm:$0xff]
        %v429 = vld [vmem:[%s187 + $0x618] sm:$0xff]
        %v430 = vld [vmem:[%s187 + $0x620] sm:$0xff]
        %v431 = vld [vmem:[%s187 + $0x628] sm:$0xff]
        %v432 = vld [vmem:[%s187 + $0x630] sm:$0xff]
        %v433 = vld [vmem:[%s187 + $0x638] sm:$0xff]
        %v434 = vld [vmem:[%s187 + $0x640] sm:$0xff]
        %v435 = vld [vmem:[%s187 + $0x648] sm:$0xff]
        %v436 = vld [vmem:[%s187 + $0x650] sm:$0xff]
        %v437 = vld [vmem:[%s187 + $0x658] sm:$0xff]
        %v438 = vld [vmem:[%s187 + $0x660] sm:$0xff]
        %v439 = vld [vmem:[%s187 + $0x668] sm:$0xff]
        %v440 = vld [vmem:[%s187 + $0x670] sm:$0xff]
        %v441 = vld [vmem:[%s187 + $0x678] sm:$0xff]
        %v442 = vld [vmem:[%s187 + $0x680] sm:$0xff]
        %v443 = vld [vmem:[%s187 + $0x688] sm:$0xff]
        %v444 = vld [vmem:[%s187 + $0x690] sm:$0xff]
        %v445 = vld [vmem:[%s187 + $0x698] sm:$0xff]
        %v446 = vld [vmem:[%s187 + $0x6a0] sm:$0xff]
        %v447 = vld [vmem:[%s187 + $0x6a8] sm:$0xff]
        %v448 = vld [vmem:[%s187 + $0x6b0] sm:$0xff]
        %v449 = vld [vmem:[%s187 + $0x6b8] sm:$0xff]
        %v450 = vld [vmem:[%s187 + $0x6c0] sm:$0xff]
        %v451 = vld [vmem:[%s187 + $0x6c8] sm:$0xff]
        %v452 = vld [vmem:[%s187 + $0x6d0] sm:$0xff]
        %v453 = vld [vmem:[%s187 + $0x6d8] sm:$0xff]
        %v454 = vld [vmem:[%s187 + $0x6e0] sm:$0xff]
        %v455 = vld [vmem:[%s187 + $0x6e8] sm:$0xff]
        %v456 = vld [vmem:[%s187 + $0x6f0] sm:$0xff]
        %v457 = vld [vmem:[%s187 + $0x6f8] sm:$0xff]
        %v458 = vld [vmem:[%s187 + $0x700] sm:$0xff]
        %v459 = vld [vmem:[%s187 + $0x708] sm:$0xff]
        %v460 = vld [vmem:[%s187 + $0x710] sm:$0xff]
        %v461 = vld [vmem:[%s187 + $0x718] sm:$0xff]
        %v462 = vld [vmem:[%s187 + $0x720] sm:$0xff]
        %v463 = vld [vmem:[%s187 + $0x728] sm:$0xff]
        %v464 = vld [vmem:[%s187 + $0x730] sm:$0xff]
        %v465 = vld [vmem:[%s187 + $0x738] sm:$0xff]
        %v466 = vld [vmem:[%s187 + $0x740] sm:$0xff]
        %v467 = vld [vmem:[%s187 + $0x748] sm:$0xff]
        %v468 = vld [vmem:[%s187 + $0x750] sm:$0xff]
        %v469 = vld [vmem:[%s187 + $0x758] sm:$0xff]
        %v470 = vld [vmem:[%s187 + $0x760] sm:$0xff]
        %v471 = vld [vmem:[%s187 + $0x768] sm:$0xff]
        %v472 = vld [vmem:[%s187 + $0x770] sm:$0xff]
        %v473 = vld [vmem:[%s187 + $0x778] sm:$0xff]
        %v474 = vld [vmem:[%s187 + $0x780] sm:$0xff]
        %v475 = vld [vmem:[%s187 + $0x788] sm:$0xff]
        %v476 = vld [vmem:[%s187 + $0x790] sm:$0xff]
        %v477 = vld [vmem:[%s187 + $0x798] sm:$0xff]
        %v478 = vld [vmem:[%s187 + $0x7a0] sm:$0xff]
        %v479 = vld [vmem:[%s187 + $0x7a8] sm:$0xff]
        %v480 = vld [vmem:[%s187 + $0x7b0] sm:$0xff]
        %v481 = vld [vmem:[%s187 + $0x7b8] sm:$0xff]
        %v482 = vld [vmem:[%s187 + $0x7c0] sm:$0xff]
        %v483 = vld [vmem:[%s187 + $0x7c8] sm:$0xff]
        %v484 = vld [vmem:[%s187 + $0x7d0] sm:$0xff]
        %v485 = vld [vmem:[%s187 + $0x7d8] sm:$0xff]
        %v486 = vld [vmem:[%s187 + $0x7e0] sm:$0xff]
        %v487 = vld [vmem:[%s187 + $0x7e8] sm:$0xff]
        %v488 = vld [vmem:[%s187 + $0x7f0] sm:$0xff]
        %v489 = vld [vmem:[%s187 + $0x7f8] sm:$0xff]
        %v490 = vld [vmem:[%s187 + $0x800] sm:$0xff]
        %v491 = vld [vmem:[%s187 + $0x808] sm:$0xff]
        %v492 = vld [vmem:[%s187 + $0x810] sm:$0xff]
        %v493 = vld [vmem:[%s187 + $0x818] sm:$0xff]
        %v494 = vld [vmem:[%s187 + $0x820] sm:$0xff]
        %v495 = vld [vmem:[%s187 + $0x828] sm:$0xff]
        %v496 = vld [vmem:[%s187 + $0x830] sm:$0xff]
        %v497 = vld [vmem:[%s187 + $0x838] sm:$0xff]
        %v498 = vld [vmem:[%s187 + $0x840] sm:$0xff]
        %v499 = vld [vmem:[%s187 + $0x848] sm:$0xff]
        %v500 = vld [vmem:[%s187 + $0x850] sm:$0xff]
        %v501 = vld [vmem:[%s187 + $0x858] sm:$0xff]
        %v502 = vld [vmem:[%s187 + $0x860] sm:$0xff]
        %v503 = vld [vmem:[%s187 + $0x868] sm:$0xff]
        %v504 = vld [vmem:[%s187 + $0x870] sm:$0xff]
        %v505 = vld [vmem:[%s187 + $0x878] sm:$0xff]
        %v506 = vld [vmem:[%s187 + $0x880] sm:$0xff]
        %v507 = vld [vmem:[%s187 + $0x888] sm:$0xff]
        %v508 = vld [vmem:[%s187 + $0x890] sm:$0xff]
        %v509 = vld [vmem:[%s187 + $0x898] sm:$0xff]
        %v510 = vld [vmem:[%s187 + $0x8a0] sm:$0xff]
        %v511 = vld [vmem:[%s187 + $0x8a8] sm:$0xff]
        %v512 = vld [vmem:[%s187 + $0x8b0] sm:$0xff]
        %v513 = vld [vmem:[%s187 + $0x8b8] sm:$0xff]
        %v514 = vld [vmem:[%s187 + $0x8c0] sm:$0xff]
        %v515 = vld [vmem:[%s187 + $0x8c8] sm:$0xff]
        %v516 = vld [vmem:[%s187 + $0x8d0] sm:$0xff]
        %v517 = vld [vmem:[%s187 + $0x8d8] sm:$0xff]
        %v518 = vld [vmem:[%s187 + $0x8e0] sm:$0xff]
        %v519 = vld [vmem:[%s187 + $0x8e8] sm:$0xff]
        %v520 = vld [vmem:[%s187 + $0x8f0] sm:$0xff]
        %v521 = vld [vmem:[%s187 + $0x8f8] sm:$0xff]
        %v522 = vld [vmem:[%s187 + $0x900] sm:$0xff]
        %v523 = vld [vmem:[%s187 + $0x908] sm:$0xff]
        %v524 = vld [vmem:[%s187 + $0x910] sm:$0xff]
        %v525 = vld [vmem:[%s187 + $0x918] sm:$0xff]
        %v526 = vld [vmem:[%s187 + $0x920] sm:$0xff]
        %v527 = vld [vmem:[%s187 + $0x928] sm:$0xff]
        %v528 = vld [vmem:[%s187 + $0x930] sm:$0xff]
        %v529 = vld [vmem:[%s187 + $0x938] sm:$0xff]
        %v530 = vld [vmem:[%s187 + $0x940] sm:$0xff]
        %v531 = vld [vmem:[%s187 + $0x948] sm:$0xff]
        %v532 = vld [vmem:[%s187 + $0x950] sm:$0xff]
        %v533 = vld [vmem:[%s187 + $0x958] sm:$0xff]
        %v534 = vld [vmem:[%s187 + $0x960] sm:$0xff]
        %v535 = vld [vmem:[%s187 + $0x968] sm:$0xff]
        %v536 = vld [vmem:[%s187 + $0x970] sm:$0xff]
        %v537 = vld [vmem:[%s187 + $0x978] sm:$0xff]
        %v538 = vld [vmem:[%s187 + $0x980] sm:$0xff]
        %v539 = vld [vmem:[%s187 + $0x988] sm:$0xff]
        %v540 = vld [vmem:[%s187 + $0x990] sm:$0xff]
        %v541 = vld [vmem:[%s187 + $0x998] sm:$0xff]
        %v542 = vld [vmem:[%s187 + $0x9a0] sm:$0xff]
        %v543 = vld [vmem:[%s187 + $0x9a8] sm:$0xff]
        %v544 = vld [vmem:[%s187 + $0x9b0] sm:$0xff]
        %v545 = vld [vmem:[%s187 + $0x9b8] sm:$0xff]
        %v546 = vld [vmem:[%s187 + $0x9c0] sm:$0xff]
        %v547 = vld [vmem:[%s187 + $0x9c8] sm:$0xff]
        %v548 = vld [vmem:[%s187 + $0x9d0] sm:$0xff]
        %v549 = vld [vmem:[%s187 + $0x9d8] sm:$0xff]
        %v550 = vld [vmem:[%s187 + $0x9e0] sm:$0xff]
        %v551 = vld [vmem:[%s187 + $0x9e8] sm:$0xff]
        %v552 = vld [vmem:[%s187 + $0x9f0] sm:$0xff]
        %v553 = vld [vmem:[%s187 + $0x9f8] sm:$0xff]
        %v554 = vld [vmem:[%s187 + $0xa00] sm:$0xff]
        %v555 = vld [vmem:[%s187 + $0xa08] sm:$0xff]
        %v556 = vld [vmem:[%s187 + $0xa10] sm:$0xff]
        %v557 = vld [vmem:[%s187 + $0xa18] sm:$0xff]
        %v558 = vld [vmem:[%s187 + $0xa20] sm:$0xff]
        %v559 = vld [vmem:[%s187 + $0xa28] sm:$0xff]
        %v560 = vld [vmem:[%s187 + $0xa30] sm:$0xff]
        %v561 = vld [vmem:[%s187 + $0xa38] sm:$0xff]
        %v562 = vld [vmem:[%s187 + $0xa40] sm:$0xff]
        %v563 = vld [vmem:[%s187 + $0xa48] sm:$0xff]
        %v564 = vld [vmem:[%s187 + $0xa50] sm:$0xff]
        %v565 = vld [vmem:[%s187 + $0xa58] sm:$0xff]
        %v566 = vld [vmem:[%s187 + $0xa60] sm:$0xff]
        %v567 = vld [vmem:[%s187 + $0xa68] sm:$0xff]
        %v568 = vld [vmem:[%s187 + $0xa70] sm:$0xff]
        %v569 = vld [vmem:[%s187 + $0xa78] sm:$0xff]
        %v570 = vld [vmem:[%s187 + $0xa80] sm:$0xff]
        %v571 = vld [vmem:[%s187 + $0xa88] sm:$0xff]
        %v572 = vld [vmem:[%s187 + $0xa90] sm:$0xff]
        %v573 = vld [vmem:[%s187 + $0xa98] sm:$0xff]
        %v574 = vld [vmem:[%s187 + $0xaa0] sm:$0xff]
        %v575 = vld [vmem:[%s187 + $0xaa8] sm:$0xff]
        %v576 = vld [vmem:[%s187 + $0xab0] sm:$0xff]
        %v577 = vld [vmem:[%s187 + $0xab8] sm:$0xff]
        %v578 = vld [vmem:[%s187 + $0xac0] sm:$0xff]
        %v579 = vld [vmem:[%s187 + $0xac8] sm:$0xff]
        %v580 = vld [vmem:[%s187 + $0xad0] sm:$0xff]
        %v581 = vld [vmem:[%s187 + $0xad8] sm:$0xff]
        %v582 = vld [vmem:[%s187 + $0xae0] sm:$0xff]
        %v583 = vld [vmem:[%s187 + $0xae8] sm:$0xff]
        %v584 = vld [vmem:[%s187 + $0xaf0] sm:$0xff]
        %v585 = vld [vmem:[%s187 + $0xaf8] sm:$0xff]
        %v586 = vld [vmem:[%s187 + $0xb00] sm:$0xff]
        %v587 = vld [vmem:[%s187 + $0xb08] sm:$0xff]
        %v588 = vld [vmem:[%s187 + $0xb10] sm:$0xff]
        %v589 = vld [vmem:[%s187 + $0xb18] sm:$0xff]
        %v590 = vld [vmem:[%s187 + $0xb20] sm:$0xff]
        %v591 = vld [vmem:[%s187 + $0xb28] sm:$0xff]
        %v592 = vld [vmem:[%s187 + $0xb30] sm:$0xff]
        %v593 = vld [vmem:[%s187 + $0xb38] sm:$0xff]
        %v594 = vld [vmem:[%s187 + $0xb40] sm:$0xff]
        %v595 = vld [vmem:[%s187 + $0xb48] sm:$0xff]
        %v596 = vld [vmem:[%s187 + $0xb50] sm:$0xff]
        %v597 = vld [vmem:[%s187 + $0xb58] sm:$0xff]
        %v598 = vld [vmem:[%s187 + $0xb60] sm:$0xff]
        %v599 = vld [vmem:[%s187 + $0xb68] sm:$0xff]
        %v600 = vld [vmem:[%s187 + $0xb70] sm:$0xff]
        %v601 = vld [vmem:[%s187 + $0xb78] sm:$0xff]
        %v602 = vld [vmem:[%s187 + $0xb80] sm:$0xff]
        %v603 = vld [vmem:[%s187 + $0xb88] sm:$0xff]
        %v604 = vld [vmem:[%s187 + $0xb90] sm:$0xff]
        %v605 = vld [vmem:[%s187 + $0xb98] sm:$0xff]
        %v606 = vld [vmem:[%s187 + $0xba0] sm:$0xff]
        %v607 = vld [vmem:[%s187 + $0xba8] sm:$0xff]
        %v608 = vld [vmem:[%s187 + $0xbb0] sm:$0xff]
        %v609 = vld [vmem:[%s187 + $0xbb8] sm:$0xff]
        %v610 = vld [vmem:[%s187 + $0xbc0] sm:$0xff]
        %v611 = vld [vmem:[%s187 + $0xbc8] sm:$0xff]
        %v612 = vld [vmem:[%s187 + $0xbd0] sm:$0xff]
        %v613 = vld [vmem:[%s187 + $0xbd8] sm:$0xff]
        %v614 = vld [vmem:[%s187 + $0xbe0] sm:$0xff]
        %v615 = vld [vmem:[%s187 + $0xbe8] sm:$0xff]
        %v616 = vld [vmem:[%s187 + $0xbf0] sm:$0xff]
        %v617 = vld [vmem:[%s187 + $0xbf8] sm:$0xff]
        %v618 = vld [vmem:[%s187 + $0xc00] sm:$0xff]
        %v619 = vld [vmem:[%s187 + $0xc08] sm:$0xff]
        %v620 = vld [vmem:[%s187 + $0xc10] sm:$0xff]
        %v621 = vld [vmem:[%s187 + $0xc18] sm:$0xff]
        %v622 = vld [vmem:[%s187 + $0xc20] sm:$0xff]
        %v623 = vld [vmem:[%s187 + $0xc28] sm:$0xff]
        %v624 = vld [vmem:[%s187 + $0xc30] sm:$0xff]
        %v625 = vld [vmem:[%s187 + $0xc38] sm:$0xff]
        %v626 = vld [vmem:[%s187 + $0xc40] sm:$0xff]
        %v627 = vld [vmem:[%s187 + $0xc48] sm:$0xff]
        %v628 = vld [vmem:[%s187 + $0xc50] sm:$0xff]
        %v629 = vld [vmem:[%s187 + $0xc58] sm:$0xff]
        %v630 = vld [vmem:[%s187 + $0xc60] sm:$0xff]
        %v631 = vld [vmem:[%s187 + $0xc68] sm:$0xff]
        %v632 = vld [vmem:[%s187 + $0xc70] sm:$0xff]
        %v633 = vld [vmem:[%s187 + $0xc78] sm:$0xff]
        %v634 = vld [vmem:[%s187 + $0xc80] sm:$0xff]
        %v635 = vld [vmem:[%s187 + $0xc88] sm:$0xff]
        %v636 = vld [vmem:[%s187 + $0xc90] sm:$0xff]
        %v637 = vld [vmem:[%s187 + $0xc98] sm:$0xff]
        %v638 = vld [vmem:[%s187 + $0xca0] sm:$0xff]
        %v639 = vld [vmem:[%s187 + $0xca8] sm:$0xff]
        %v640 = vld [vmem:[%s187 + $0xcb0] sm:$0xff]
        %v641 = vld [vmem:[%s187 + $0xcb8] sm:$0xff]
        %v642 = vld [vmem:[%s187 + $0xcc0] sm:$0xff]
        %v643 = vld [vmem:[%s187 + $0xcc8] sm:$0xff]
        %v644 = vld [vmem:[%s187 + $0xcd0] sm:$0xff]
        %v645 = vld [vmem:[%s187 + $0xcd8] sm:$0xff]
        %v646 = vld [vmem:[%s187 + $0xce0] sm:$0xff]
        %v647 = vld [vmem:[%s187 + $0xce8] sm:$0xff]
        %v648 = vld [vmem:[%s187 + $0xcf0] sm:$0xff]
        %v649 = vld [vmem:[%s187 + $0xcf8] sm:$0xff]
        %v650 = vld [vmem:[%s187 + $0xd00] sm:$0xff]
        %v651 = vld [vmem:[%s187 + $0xd08] sm:$0xff]
        %v652 = vld [vmem:[%s187 + $0xd10] sm:$0xff]
        %v653 = vld [vmem:[%s187 + $0xd18] sm:$0xff]
        %v654 = vld [vmem:[%s187 + $0xd20] sm:$0xff]
        %v655 = vld [vmem:[%s187 + $0xd28] sm:$0xff]
        %v656 = vld [vmem:[%s187 + $0xd30] sm:$0xff]
        %v657 = vld [vmem:[%s187 + $0xd38] sm:$0xff]
        %v658 = vld [vmem:[%s187 + $0xd40] sm:$0xff]
        %v659 = vld [vmem:[%s187 + $0xd48] sm:$0xff]
        %v660 = vld [vmem:[%s187 + $0xd50] sm:$0xff]
        %v661 = vld [vmem:[%s187 + $0xd58] sm:$0xff]
        %v662 = vld [vmem:[%s187 + $0xd60] sm:$0xff]
        %v663 = vld [vmem:[%s187 + $0xd68] sm:$0xff]
        %v664 = vld [vmem:[%s187 + $0xd70] sm:$0xff]
        %v665 = vld [vmem:[%s187 + $0xd78] sm:$0xff]
        %v666 = vld [vmem:[%s187 + $0xd80] sm:$0xff]
        %v667 = vld [vmem:[%s187 + $0xd88] sm:$0xff]
        %v668 = vld [vmem:[%s187 + $0xd90] sm:$0xff]
        %v669 = vld [vmem:[%s187 + $0xd98] sm:$0xff]
        %v670 = vld [vmem:[%s187 + $0xda0] sm:$0xff]
        %v671 = vld [vmem:[%s187 + $0xda8] sm:$0xff]
        %v672 = vld [vmem:[%s187 + $0xdb0] sm:$0xff]
        %v673 = vld [vmem:[%s187 + $0xdb8] sm:$0xff]
        %v674 = vld [vmem:[%s187 + $0xdc0] sm:$0xff]
        %v675 = vld [vmem:[%s187 + $0xdc8] sm:$0xff]
        %v676 = vld [vmem:[%s187 + $0xdd0] sm:$0xff]
        %v677 = vld [vmem:[%s187 + $0xdd8] sm:$0xff]
        %v678 = vld [vmem:[%s187 + $0xde0] sm:$0xff]
        %v679 = vld [vmem:[%s187 + $0xde8] sm:$0xff]
        %v680 = vld [vmem:[%s187 + $0xdf0] sm:$0xff]
        %v681 = vld [vmem:[%s187 + $0xdf8] sm:$0xff]
        %v682 = vld [vmem:[%s187 + $0xe00] sm:$0xff]
        %v683 = vld [vmem:[%s187 + $0xe08] sm:$0xff]
        %v684 = vld [vmem:[%s187 + $0xe10] sm:$0xff]
        %v685 = vld [vmem:[%s187 + $0xe18] sm:$0xff]
        %v686 = vld [vmem:[%s187 + $0xe20] sm:$0xff]
        %v687 = vld [vmem:[%s187 + $0xe28] sm:$0xff]
        %v688 = vld [vmem:[%s187 + $0xe30] sm:$0xff]
        %v689 = vld [vmem:[%s187 + $0xe38] sm:$0xff]
        %v690 = vld [vmem:[%s187 + $0xe40] sm:$0xff]
        %v691 = vld [vmem:[%s187 + $0xe48] sm:$0xff]
        %v692 = vld [vmem:[%s187 + $0xe50] sm:$0xff]
        %v693 = vld [vmem:[%s187 + $0xe58] sm:$0xff]
        %v694 = vld [vmem:[%s187 + $0xe60] sm:$0xff]
        %v695 = vld [vmem:[%s187 + $0xe68] sm:$0xff]
        %v696 = vld [vmem:[%s187 + $0xe70] sm:$0xff]
        %v697 = vld [vmem:[%s187 + $0xe78] sm:$0xff]
        %v698 = vld [vmem:[%s187 + $0xe80] sm:$0xff]
        %v699 = vld [vmem:[%s187 + $0xe88] sm:$0xff]
        %v700 = vld [vmem:[%s187 + $0xe90] sm:$0xff]
        %v701 = vld [vmem:[%s187 + $0xe98] sm:$0xff]
        %v702 = vld [vmem:[%s187 + $0xea0] sm:$0xff]
        %v703 = vld [vmem:[%s187 + $0xea8] sm:$0xff]
        %v704 = vld [vmem:[%s187 + $0xeb0] sm:$0xff]
        %v705 = vld [vmem:[%s187 + $0xeb8] sm:$0xff]
        %v706 = vld [vmem:[%s187 + $0xec0] sm:$0xff]
        %v707 = vld [vmem:[%s187 + $0xec8] sm:$0xff]
        %v708 = vld [vmem:[%s187 + $0xed0] sm:$0xff]
        %v709 = vld [vmem:[%s187 + $0xed8] sm:$0xff]
        %v710 = vld [vmem:[%s187 + $0xee0] sm:$0xff]
        %v711 = vld [vmem:[%s187 + $0xee8] sm:$0xff]
        %v712 = vld [vmem:[%s187 + $0xef0] sm:$0xff]
        %v713 = vld [vmem:[%s187 + $0xef8] sm:$0xff]
        %v714 = vld [vmem:[%s187 + $0xf00] sm:$0xff]
        %v715 = vld [vmem:[%s187 + $0xf08] sm:$0xff]
        %v716 = vld [vmem:[%s187 + $0xf10] sm:$0xff]
        %v717 = vld [vmem:[%s187 + $0xf18] sm:$0xff]
        %v718 = vld [vmem:[%s187 + $0xf20] sm:$0xff]
        %v719 = vld [vmem:[%s187 + $0xf28] sm:$0xff]
        %v720 = vld [vmem:[%s187 + $0xf30] sm:$0xff]
        %v721 = vld [vmem:[%s187 + $0xf38] sm:$0xff]
        %v722 = vld [vmem:[%s187 + $0xf40] sm:$0xff]
        %v723 = vld [vmem:[%s187 + $0xf48] sm:$0xff]
        %v724 = vld [vmem:[%s187 + $0xf50] sm:$0xff]
        %v725 = vld [vmem:[%s187 + $0xf58] sm:$0xff]
        %v726 = vld [vmem:[%s187 + $0xf60] sm:$0xff]
        %v727 = vld [vmem:[%s187 + $0xf68] sm:$0xff]
        %v728 = vld [vmem:[%s187 + $0xf70] sm:$0xff]
        %v729 = vld [vmem:[%s187 + $0xf78] sm:$0xff]
        %v730 = vld [vmem:[%s187 + $0xf80] sm:$0xff]
        %v731 = vld [vmem:[%s187 + $0xf88] sm:$0xff]
        %v732 = vld [vmem:[%s187 + $0xf90] sm:$0xff]
        %v733 = vld [vmem:[%s187 + $0xf98] sm:$0xff]
        %v734 = vld [vmem:[%s187 + $0xfa0] sm:$0xff]
        %v735 = vld [vmem:[%s187 + $0xfa8] sm:$0xff]
        %v736 = vld [vmem:[%s187 + $0xfb0] sm:$0xff]
        %v737 = vld [vmem:[%s187 + $0xfb8] sm:$0xff]
        %v738 = vld [vmem:[%s187 + $0xfc0] sm:$0xff]
        %v739 = vld [vmem:[%s187 + $0xfc8] sm:$0xff]
        %v740 = vld [vmem:[%s187 + $0xfd0] sm:$0xff]
        %v741 = vld [vmem:[%s187 + $0xfd8] sm:$0xff]
        %v742 = vld [vmem:[%s187 + $0xfe0] sm:$0xff]
        %v743 = vld [vmem:[%s187 + $0xfe8] sm:$0xff]
        %v744 = vld [vmem:[%s187 + $0xff0] sm:$0xff]
        %v745 = vld [vmem:[%s187 + $0xff8] sm:$0xff]
        %v746 = vld [vmem:[%s187 + $0x1000] sm:$0xff]
        %v747 = vld [vmem:[%s187 + $0x1008] sm:$0xff]
        %v748 = vld [vmem:[%s187 + $0x1010] sm:$0xff]
        %v749 = vld [vmem:[%s187 + $0x1018] sm:$0xff]
        %v750 = vld [vmem:[%s187 + $0x1020] sm:$0xff]
        %v751 = vld [vmem:[%s187 + $0x1028] sm:$0xff]
        %v752 = vld [vmem:[%s187 + $0x1030] sm:$0xff]
        %v753 = vld [vmem:[%s187 + $0x1038] sm:$0xff]
        %v754 = vld [vmem:[%s187 + $0x1040] sm:$0xff]
        %v755 = vld [vmem:[%s187 + $0x1048] sm:$0xff]
        %v756 = vld [vmem:[%s187 + $0x1050] sm:$0xff]
        %v757 = vld [vmem:[%s187 + $0x1058] sm:$0xff]
        %v758 = vld [vmem:[%s187 + $0x1060] sm:$0xff]
        %v759 = vld [vmem:[%s187 + $0x1068] sm:$0xff]
        %v760 = vld [vmem:[%s187 + $0x1070] sm:$0xff]
        %v761 = vld [vmem:[%s187 + $0x1078] sm:$0xff]
        %v762 = vld [vmem:[%s187 + $0x1080] sm:$0xff]
        %v763 = vld [vmem:[%s187 + $0x1088] sm:$0xff]
        %v764 = vld [vmem:[%s187 + $0x1090] sm:$0xff]
        %v765 = vld [vmem:[%s187 + $0x1098] sm:$0xff]
        %v766 = vld [vmem:[%s187 + $0x10a0] sm:$0xff]
        %v767 = vld [vmem:[%s187 + $0x10a8] sm:$0xff]
        %v768 = vld [vmem:[%s187 + $0x10b0] sm:$0xff]
        %v769 = vld [vmem:[%s187 + $0x10b8] sm:$0xff]
        %v770 = vld [vmem:[%s187 + $0x10c0] sm:$0xff]
        %v771 = vld [vmem:[%s187 + $0x10c8] sm:$0xff]
        %v772 = vld [vmem:[%s187 + $0x10d0] sm:$0xff]
        %v773 = vld [vmem:[%s187 + $0x10d8] sm:$0xff]
        %v774 = vld [vmem:[%s187 + $0x10e0] sm:$0xff]
        %v775 = vld [vmem:[%s187 + $0x10e8] sm:$0xff]
        %v776 = vld [vmem:[%s187 + $0x10f0] sm:$0xff]
        %v777 = vld [vmem:[%s187 + $0x10f8] sm:$0xff]
        %v778 = vld [vmem:[%s187 + $0x1100] sm:$0xff]
        %v779 = vld [vmem:[%s187 + $0x1108] sm:$0xff]
        %v780 = vld [vmem:[%s187 + $0x1110] sm:$0xff]
        %v781 = vld [vmem:[%s187 + $0x1118] sm:$0xff]
        %v782 = vld [vmem:[%s187 + $0x1120] sm:$0xff]
        %v783 = vld [vmem:[%s187 + $0x1128] sm:$0xff]
        %v784 = vld [vmem:[%s187 + $0x1130] sm:$0xff]
        %v785 = vld [vmem:[%s187 + $0x1138] sm:$0xff]
        %v786 = vld [vmem:[%s187 + $0x1140] sm:$0xff]
        %v787 = vld [vmem:[%s187 + $0x1148] sm:$0xff]
        %v788 = vld [vmem:[%s187 + $0x1150] sm:$0xff]
        %v789 = vld [vmem:[%s187 + $0x1158] sm:$0xff]
        %v790 = vld [vmem:[%s187 + $0x1160] sm:$0xff]
        %v791 = vld [vmem:[%s187 + $0x1168] sm:$0xff]
        %v792 = vld [vmem:[%s187 + $0x1170] sm:$0xff]
        %v793 = vld [vmem:[%s187 + $0x1178] sm:$0xff]
        %v794 = vld [vmem:[%s187 + $0x1180] sm:$0xff]
        %v795 = vld [vmem:[%s187 + $0x1188] sm:$0xff]
        %v796 = vld [vmem:[%s187 + $0x1190] sm:$0xff]
        %v797 = vld [vmem:[%s187 + $0x1198] sm:$0xff]
        %v798 = vld [vmem:[%s187 + $0x11a0] sm:$0xff]
        %v799 = vld [vmem:[%s187 + $0x11a8] sm:$0xff]
        %v800 = vld [vmem:[%s187 + $0x11b0] sm:$0xff]
        %v801 = vld [vmem:[%s187 + $0x11b8] sm:$0xff]
        %v802 = vld [vmem:[%s187 + $0x11c0] sm:$0xff]
        %v803 = vld [vmem:[%s187 + $0x11c8] sm:$0xff]
        %v804 = vld [vmem:[%s187 + $0x11d0] sm:$0xff]
        %v805 = vld [vmem:[%s187 + $0x11d8] sm:$0xff]
        %v806 = vld [vmem:[%s187 + $0x11e0] sm:$0xff]
        %v807 = vld [vmem:[%s187 + $0x11e8] sm:$0xff]
        %v808 = vld [vmem:[%s187 + $0x11f0] sm:$0xff]
        %v809 = vld [vmem:[%s187 + $0x11f8] sm:$0xff]
        %v810 = vld [vmem:[%s187 + $0x1200] sm:$0xff]
        %v811 = vld [vmem:[%s187 + $0x1208] sm:$0xff]
        %v812 = vld [vmem:[%s187 + $0x1210] sm:$0xff]
        %v813 = vld [vmem:[%s187 + $0x1218] sm:$0xff]
        %v814 = vld [vmem:[%s187 + $0x1220] sm:$0xff]
        %v815 = vld [vmem:[%s187 + $0x1228] sm:$0xff]
        %v816 = vld [vmem:[%s187 + $0x1230] sm:$0xff]
        %v817 = vld [vmem:[%s187 + $0x1238] sm:$0xff]
        %v818 = vld [vmem:[%s187 + $0x1240] sm:$0xff]
        %v819 = vld [vmem:[%s187 + $0x1248] sm:$0xff]
        %v820 = vld [vmem:[%s187 + $0x1250] sm:$0xff]
        %v821 = vld [vmem:[%s187 + $0x1258] sm:$0xff]
        %v822 = vld [vmem:[%s187 + $0x1260] sm:$0xff]
        %v823 = vld [vmem:[%s187 + $0x1268] sm:$0xff]
        %v824 = vld [vmem:[%s187 + $0x1270] sm:$0xff]
        %v825 = vld [vmem:[%s187 + $0x1278] sm:$0xff]
        %v826 = vld [vmem:[%s187 + $0x1280] sm:$0xff]
        %v827 = vld [vmem:[%s187 + $0x1288] sm:$0xff]
        %v828 = vld [vmem:[%s187 + $0x1290] sm:$0xff]
        %v829 = vld [vmem:[%s187 + $0x1298] sm:$0xff]
        %v830 = vld [vmem:[%s187 + $0x12a0] sm:$0xff]
        %v831 = vld [vmem:[%s187 + $0x12a8] sm:$0xff]
        %v832 = vld [vmem:[%s187 + $0x12b0] sm:$0xff]
        %v833 = vld [vmem:[%s187 + $0x12b8] sm:$0xff]
        %v834 = vld [vmem:[%s187 + $0x12c0] sm:$0xff]
        %v835 = vld [vmem:[%s187 + $0x12c8] sm:$0xff]
        %v836 = vld [vmem:[%s187 + $0x12d0] sm:$0xff]
        %v837 = vld [vmem:[%s187 + $0x12d8] sm:$0xff]
        %v838 = vld [vmem:[%s187 + $0x12e0] sm:$0xff]
        %v839 = vld [vmem:[%s187 + $0x12e8] sm:$0xff]
        %v840 = vld [vmem:[%s187 + $0x12f0] sm:$0xff]
        %v841 = vld [vmem:[%s187 + $0x12f8] sm:$0xff]
        %v842 = vld [vmem:[%s187 + $0x1300] sm:$0xff]
        %v843 = vld [vmem:[%s187 + $0x1308] sm:$0xff]
        %v844 = vld [vmem:[%s187 + $0x1310] sm:$0xff]
        %v845 = vld [vmem:[%s187 + $0x1318] sm:$0xff]
        %v846 = vld [vmem:[%s187 + $0x1320] sm:$0xff]
        %v847 = vld [vmem:[%s187 + $0x1328] sm:$0xff]
        %v848 = vld [vmem:[%s187 + $0x1330] sm:$0xff]
        %v849 = vld [vmem:[%s187 + $0x1338] sm:$0xff]
        %v850 = vld [vmem:[%s187 + $0x1340] sm:$0xff]
        %v851 = vld [vmem:[%s187 + $0x1348] sm:$0xff]
        %v852 = vld [vmem:[%s187 + $0x1350] sm:$0xff]
        %v853 = vld [vmem:[%s187 + $0x1358] sm:$0xff]
        %v854 = vld [vmem:[%s187 + $0x1360] sm:$0xff]
        %v855 = vld [vmem:[%s187 + $0x1368] sm:$0xff]
        %v856 = vld [vmem:[%s187 + $0x1370] sm:$0xff]
        %v857 = vld [vmem:[%s187 + $0x1378] sm:$0xff]
        %v858 = vld [vmem:[%s187 + $0x1380] sm:$0xff]
        %v859 = vld [vmem:[%s187 + $0x1388] sm:$0xff]
        %v860 = vld [vmem:[%s187 + $0x1390] sm:$0xff]
        %v861 = vld [vmem:[%s187 + $0x1398] sm:$0xff]
        %v862 = vld [vmem:[%s187 + $0x13a0] sm:$0xff]
        %v863 = vld [vmem:[%s187 + $0x13a8] sm:$0xff]
        %v864 = vld [vmem:[%s187 + $0x13b0] sm:$0xff]
        %v865 = vld [vmem:[%s187 + $0x13b8] sm:$0xff]
        %v866 = vld [vmem:[%s187 + $0x13c0] sm:$0xff]
        %v867 = vld [vmem:[%s187 + $0x13c8] sm:$0xff]
        %v868 = vld [vmem:[%s187 + $0x13d0] sm:$0xff]
        %v869 = vld [vmem:[%s187 + $0x13d8] sm:$0xff]
        %v870 = vld [vmem:[%s187 + $0x13e0] sm:$0xff]
        %v871 = vld [vmem:[%s187 + $0x13e8] sm:$0xff]
        %v872 = vld [vmem:[%s187 + $0x13f0] sm:$0xff]
        %v873 = vld [vmem:[%s187 + $0x13f8] sm:$0xff]
        %v874 = vld [vmem:[%s187 + $0x1400] sm:$0xff]
        %v875 = vld [vmem:[%s187 + $0x1408] sm:$0xff]
        %v876 = vld [vmem:[%s187 + $0x1410] sm:$0xff]
        %v877 = vld [vmem:[%s187 + $0x1418] sm:$0xff]
        %v878 = vld [vmem:[%s187 + $0x1420] sm:$0xff]
        %v879 = vld [vmem:[%s187 + $0x1428] sm:$0xff]
        %v880 = vld [vmem:[%s187 + $0x1430] sm:$0xff]
        %v881 = vld [vmem:[%s187 + $0x1438] sm:$0xff]
        %v882 = vld [vmem:[%s187 + $0x1440] sm:$0xff]
        %v883 = vld [vmem:[%s187 + $0x1448] sm:$0xff]
        %v884 = vld [vmem:[%s187 + $0x1450] sm:$0xff]
        %v885 = vld [vmem:[%s187 + $0x1458] sm:$0xff]
        %v886 = vld [vmem:[%s187 + $0x1460] sm:$0xff]
        %v887 = vld [vmem:[%s187 + $0x1468] sm:$0xff]
        %v888 = vld [vmem:[%s187 + $0x1470] sm:$0xff]
        %v889 = vld [vmem:[%s187 + $0x1478] sm:$0xff]
        %v890 = vld [vmem:[%s187 + $0x1480] sm:$0xff]
        %v891 = vld [vmem:[%s187 + $0x1488] sm:$0xff]
        %v892 = vld [vmem:[%s187 + $0x1490] sm:$0xff]
        %v893 = vld [vmem:[%s187 + $0x1498] sm:$0xff]
        %v894 = vld [vmem:[%s187 + $0x14a0] sm:$0xff]
        %v895 = vld [vmem:[%s187 + $0x14a8] sm:$0xff]
        %v896 = vld [vmem:[%s187 + $0x14b0] sm:$0xff]
        %v897 = vld [vmem:[%s187 + $0x14b8] sm:$0xff]
        %v898 = vld [vmem:[%s187 + $0x14c0] sm:$0xff]
        %v899 = vld [vmem:[%s187 + $0x14c8] sm:$0xff]
        %v900 = vld [vmem:[%s187 + $0x14d0] sm:$0xff]
        %v901 = vld [vmem:[%s187 + $0x14d8] sm:$0xff]
        %v902 = vld [vmem:[%s187 + $0x14e0] sm:$0xff]
        %v903 = vld [vmem:[%s187 + $0x14e8] sm:$0xff]
        %v904 = vld [vmem:[%s187 + $0x14f0] sm:$0xff]
        %v905 = vld [vmem:[%s187 + $0x14f8] sm:$0xff]
        %v906 = vld [vmem:[%s187 + $0x1500] sm:$0xff]
        %v907 = vld [vmem:[%s187 + $0x1508] sm:$0xff]
        %v908 = vld [vmem:[%s187 + $0x1510] sm:$0xff]
        %v909 = vld [vmem:[%s187 + $0x1518] sm:$0xff]
        %v910 = vld [vmem:[%s187 + $0x1520] sm:$0xff]
        %v911 = vld [vmem:[%s187 + $0x1528] sm:$0xff]
        %v912 = vld [vmem:[%s187 + $0x1530] sm:$0xff]
        %v913 = vld [vmem:[%s187 + $0x1538] sm:$0xff]
        %v914 = vld [vmem:[%s187 + $0x1540] sm:$0xff]
        %v915 = vld [vmem:[%s187 + $0x1548] sm:$0xff]
        %v916 = vld [vmem:[%s187 + $0x1550] sm:$0xff]
        %v917 = vld [vmem:[%s187 + $0x1558] sm:$0xff]
        %v918 = vld [vmem:[%s187 + $0x1560] sm:$0xff]
        %v919 = vld [vmem:[%s187 + $0x1568] sm:$0xff]
        %v920 = vld [vmem:[%s187 + $0x1570] sm:$0xff]
        %v921 = vld [vmem:[%s187 + $0x1578] sm:$0xff]
        %v922 = vld [vmem:[%s187 + $0x1580] sm:$0xff]
        %v923 = vld [vmem:[%s187 + $0x1588] sm:$0xff]
        %v924 = vld [vmem:[%s187 + $0x1590] sm:$0xff]
        %v925 = vld [vmem:[%s187 + $0x1598] sm:$0xff]
        %v926 = vld [vmem:[%s187 + $0x15a0] sm:$0xff]
        %v927 = vld [vmem:[%s187 + $0x15a8] sm:$0xff]
        %v928 = vld [vmem:[%s187 + $0x15b0] sm:$0xff]
        %v929 = vld [vmem:[%s187 + $0x15b8] sm:$0xff]
        %v930 = vld [vmem:[%s187 + $0x15c0] sm:$0xff]
        %v931 = vld [vmem:[%s187 + $0x15c8] sm:$0xff]
        %v932 = vld [vmem:[%s187 + $0x15d0] sm:$0xff]
        %v933 = vld [vmem:[%s187 + $0x15d8] sm:$0xff]
        %v934 = vld [vmem:[%s187 + $0x15e0] sm:$0xff]
        %v935 = vld [vmem:[%s187 + $0x15e8] sm:$0xff]
        %v936 = vld [vmem:[%s187 + $0x15f0] sm:$0xff]
        %v937 = vld [vmem:[%s187 + $0x15f8] sm:$0xff]
        %v938 = vld [vmem:[%s196] sm:$0xff]
        %v939 = vld [vmem:[%s196 + $0x8] sm:$0xff]
        %v940 = vld [vmem:[%s196 + $0x10] sm:$0xff]
        %v941 = vld [vmem:[%s196 + $0x18] sm:$0xff]
        %v942 = vld [vmem:[%s196 + $0x20] sm:$0xff]
        %v943 = vld [vmem:[%s196 + $0x28] sm:$0xff]
        %v944 = vld [vmem:[%s196 + $0x30] sm:$0xff]
        %v945 = vld [vmem:[%s196 + $0x38] sm:$0xff]
        %v946 = vld [vmem:[%s196 + $0x40] sm:$0xff]
        %v947 = vld [vmem:[%s196 + $0x48] sm:$0xff]
        %v948 = vld [vmem:[%s196 + $0x50] sm:$0xff]
        %v960 = vlaneseq
        %v961 = vshrl.u32 %v960, 7
        %v962 = vsub.s32 0, %v961
        %v963 = vrot.slane %v938, %v962
        %v964 = vlaneseq
        %v965 = vshrl.u32 %v964, 7
        %v966 = vsub.s32 1, %v965
        %v967 = vrot.slane %v938, %v966
        %v968 = vlaneseq
        %v969 = vshrl.u32 %v968, 7
        %v970 = vsub.s32 2, %v969
        %v971 = vrot.slane %v938, %v970
        %v972 = vlaneseq
        %v973 = vshrl.u32 %v972, 7
        %v974 = vsub.s32 3, %v973
        %v975 = vrot.slane %v938, %v974
        %v976 = vlaneseq
        %v977 = vshrl.u32 %v976, 7
        %v978 = vsub.s32 4, %v977
        %v979 = vrot.slane %v938, %v978
        %v980 = vlaneseq
        %v981 = vshrl.u32 %v980, 7
        %v982 = vsub.s32 5, %v981
        %v983 = vrot.slane %v938, %v982
        %v984 = vlaneseq
        %v985 = vshrl.u32 %v984, 7
        %v986 = vsub.s32 6, %v985
        %v987 = vrot.slane %v938, %v986
        %v988 = vlaneseq
        %v989 = vshrl.u32 %v988, 7
        %v990 = vsub.s32 7, %v989
        %v991 = vrot.slane %v938, %v990
        %v992 = vlaneseq
        %v993 = vshrl.u32 %v992, 7
        %v994 = vsub.s32 0, %v993
        %v995 = vrot.slane %v939, %v994
        %v996 = vlaneseq
        %v997 = vshrl.u32 %v996, 7
        %v998 = vsub.s32 1, %v997
        %v999 = vrot.slane %v939, %v998
        %v1000 = vlaneseq
        %v1001 = vshrl.u32 %v1000, 7
        %v1002 = vsub.s32 2, %v1001
        %v1003 = vrot.slane %v939, %v1002
        %v1004 = vlaneseq
        %v1005 = vshrl.u32 %v1004, 7
        %v1006 = vsub.s32 3, %v1005
        %v1007 = vrot.slane %v939, %v1006
        %v1008 = vlaneseq
        %v1009 = vshrl.u32 %v1008, 7
        %v1010 = vsub.s32 4, %v1009
        %v1011 = vrot.slane %v939, %v1010
        %v1012 = vlaneseq
        %v1013 = vshrl.u32 %v1012, 7
        %v1014 = vsub.s32 5, %v1013
        %v1015 = vrot.slane %v939, %v1014
        %v1016 = vlaneseq
        %v1017 = vshrl.u32 %v1016, 7
        %v1018 = vsub.s32 6, %v1017
        %v1019 = vrot.slane %v939, %v1018
        %v1020 = vlaneseq
        %v1021 = vshrl.u32 %v1020, 7
        %v1022 = vsub.s32 7, %v1021
        %v1023 = vrot.slane %v939, %v1022
        %v1024 = vlaneseq
        %v1025 = vshrl.u32 %v1024, 7
        %v1026 = vsub.s32 0, %v1025
        %v1027 = vrot.slane %v940, %v1026
        %v1028 = vlaneseq
        %v1029 = vshrl.u32 %v1028, 7
        %v1030 = vsub.s32 1, %v1029
        %v1031 = vrot.slane %v940, %v1030
        %v1032 = vlaneseq
        %v1033 = vshrl.u32 %v1032, 7
        %v1034 = vsub.s32 2, %v1033
        %v1035 = vrot.slane %v940, %v1034
        %v1036 = vlaneseq
        %v1037 = vshrl.u32 %v1036, 7
        %v1038 = vsub.s32 3, %v1037
        %v1039 = vrot.slane %v940, %v1038
        %v1040 = vlaneseq
        %v1041 = vshrl.u32 %v1040, 7
        %v1042 = vsub.s32 4, %v1041
        %v1043 = vrot.slane %v940, %v1042
        %v1044 = vlaneseq
        %v1045 = vshrl.u32 %v1044, 7
        %v1046 = vsub.s32 5, %v1045
        %v1047 = vrot.slane %v940, %v1046
        %v1048 = vlaneseq
        %v1049 = vshrl.u32 %v1048, 7
        %v1050 = vsub.s32 6, %v1049
        %v1051 = vrot.slane %v940, %v1050
        %v1052 = vlaneseq
        %v1053 = vshrl.u32 %v1052, 7
        %v1054 = vsub.s32 7, %v1053
        %v1055 = vrot.slane %v940, %v1054
        %v1056 = vlaneseq
        %v1057 = vshrl.u32 %v1056, 7
        %v1058 = vsub.s32 0, %v1057
        %v1059 = vrot.slane %v941, %v1058
        %v1060 = vlaneseq
        %v1061 = vshrl.u32 %v1060, 7
        %v1062 = vsub.s32 1, %v1061
        %v1063 = vrot.slane %v941, %v1062
        %v1064 = vlaneseq
        %v1065 = vshrl.u32 %v1064, 7
        %v1066 = vsub.s32 2, %v1065
        %v1067 = vrot.slane %v941, %v1066
        %v1068 = vlaneseq
        %v1069 = vshrl.u32 %v1068, 7
        %v1070 = vsub.s32 3, %v1069
        %v1071 = vrot.slane %v941, %v1070
        %v1072 = vlaneseq
        %v1073 = vshrl.u32 %v1072, 7
        %v1074 = vsub.s32 4, %v1073
        %v1075 = vrot.slane %v941, %v1074
        %v1076 = vlaneseq
        %v1077 = vshrl.u32 %v1076, 7
        %v1078 = vsub.s32 5, %v1077
        %v1079 = vrot.slane %v941, %v1078
        %v1080 = vlaneseq
        %v1081 = vshrl.u32 %v1080, 7
        %v1082 = vsub.s32 6, %v1081
        %v1083 = vrot.slane %v941, %v1082
        %v1084 = vlaneseq
        %v1085 = vshrl.u32 %v1084, 7
        %v1086 = vsub.s32 7, %v1085
        %v1087 = vrot.slane %v941, %v1086
        %v1088 = vlaneseq
        %v1089 = vshrl.u32 %v1088, 7
        %v1090 = vsub.s32 0, %v1089
        %v1091 = vrot.slane %v942, %v1090
        %v1092 = vlaneseq
        %v1093 = vshrl.u32 %v1092, 7
        %v1094 = vsub.s32 1, %v1093
        %v1095 = vrot.slane %v942, %v1094
        %v1096 = vlaneseq
        %v1097 = vshrl.u32 %v1096, 7
        %v1098 = vsub.s32 2, %v1097
        %v1099 = vrot.slane %v942, %v1098
        %v1100 = vlaneseq
        %v1101 = vshrl.u32 %v1100, 7
        %v1102 = vsub.s32 3, %v1101
        %v1103 = vrot.slane %v942, %v1102
        %v1104 = vlaneseq
        %v1105 = vshrl.u32 %v1104, 7
        %v1106 = vsub.s32 4, %v1105
        %v1107 = vrot.slane %v942, %v1106
        %v1108 = vlaneseq
        %v1109 = vshrl.u32 %v1108, 7
        %v1110 = vsub.s32 5, %v1109
        %v1111 = vrot.slane %v942, %v1110
        %v1112 = vlaneseq
        %v1113 = vshrl.u32 %v1112, 7
        %v1114 = vsub.s32 6, %v1113
        %v1115 = vrot.slane %v942, %v1114
        %v1116 = vlaneseq
        %v1117 = vshrl.u32 %v1116, 7
        %v1118 = vsub.s32 7, %v1117
        %v1119 = vrot.slane %v942, %v1118
        %v1120 = vlaneseq
        %v1121 = vshrl.u32 %v1120, 7
        %v1122 = vsub.s32 0, %v1121
        %v1123 = vrot.slane %v943, %v1122
        %v1124 = vlaneseq
        %v1125 = vshrl.u32 %v1124, 7
        %v1126 = vsub.s32 1, %v1125
        %v1127 = vrot.slane %v943, %v1126
        %v1128 = vlaneseq
        %v1129 = vshrl.u32 %v1128, 7
        %v1130 = vsub.s32 2, %v1129
        %v1131 = vrot.slane %v943, %v1130
        %v1132 = vlaneseq
        %v1133 = vshrl.u32 %v1132, 7
        %v1134 = vsub.s32 3, %v1133
        %v1135 = vrot.slane %v943, %v1134
        %v1136 = vlaneseq
        %v1137 = vshrl.u32 %v1136, 7
        %v1138 = vsub.s32 4, %v1137
        %v1139 = vrot.slane %v943, %v1138
        %v1140 = vlaneseq
        %v1141 = vshrl.u32 %v1140, 7
        %v1142 = vsub.s32 5, %v1141
        %v1143 = vrot.slane %v943, %v1142
        %v1144 = vlaneseq
        %v1145 = vshrl.u32 %v1144, 7
        %v1146 = vsub.s32 6, %v1145
        %v1147 = vrot.slane %v943, %v1146
        %v1148 = vlaneseq
        %v1149 = vshrl.u32 %v1148, 7
        %v1150 = vsub.s32 7, %v1149
        %v1151 = vrot.slane %v943, %v1150
        %v1152 = vlaneseq
        %v1153 = vshrl.u32 %v1152, 7
        %v1154 = vsub.s32 0, %v1153
        %v1155 = vrot.slane %v944, %v1154
        %v1156 = vlaneseq
        %v1157 = vshrl.u32 %v1156, 7
        %v1158 = vsub.s32 1, %v1157
        %v1159 = vrot.slane %v944, %v1158
        %v1160 = vlaneseq
        %v1161 = vshrl.u32 %v1160, 7
        %v1162 = vsub.s32 2, %v1161
        %v1163 = vrot.slane %v944, %v1162
        %v1164 = vlaneseq
        %v1165 = vshrl.u32 %v1164, 7
        %v1166 = vsub.s32 3, %v1165
        %v1167 = vrot.slane %v944, %v1166
        %v1168 = vlaneseq
        %v1169 = vshrl.u32 %v1168, 7
        %v1170 = vsub.s32 4, %v1169
        %v1171 = vrot.slane %v944, %v1170
        %v1172 = vlaneseq
        %v1173 = vshrl.u32 %v1172, 7
        %v1174 = vsub.s32 5, %v1173
        %v1175 = vrot.slane %v944, %v1174
        %v1176 = vlaneseq
        %v1177 = vshrl.u32 %v1176, 7
        %v1178 = vsub.s32 6, %v1177
        %v1179 = vrot.slane %v944, %v1178
        %v1180 = vlaneseq
        %v1181 = vshrl.u32 %v1180, 7
        %v1182 = vsub.s32 7, %v1181
        %v1183 = vrot.slane %v944, %v1182
        %v1184 = vlaneseq
        %v1185 = vshrl.u32 %v1184, 7
        %v1186 = vsub.s32 0, %v1185
        %v1187 = vrot.slane %v945, %v1186
        %v1188 = vlaneseq
        %v1189 = vshrl.u32 %v1188, 7
        %v1190 = vsub.s32 1, %v1189
        %v1191 = vrot.slane %v945, %v1190
        %v1192 = vlaneseq
        %v1193 = vshrl.u32 %v1192, 7
        %v1194 = vsub.s32 2, %v1193
        %v1195 = vrot.slane %v945, %v1194
        %v1196 = vlaneseq
        %v1197 = vshrl.u32 %v1196, 7
        %v1198 = vsub.s32 3, %v1197
        %v1199 = vrot.slane %v945, %v1198
        %v1200 = vlaneseq
        %v1201 = vshrl.u32 %v1200, 7
        %v1202 = vsub.s32 4, %v1201
        %v1203 = vrot.slane %v945, %v1202
        %v1204 = vlaneseq
        %v1205 = vshrl.u32 %v1204, 7
        %v1206 = vsub.s32 5, %v1205
        %v1207 = vrot.slane %v945, %v1206
        %v1208 = vlaneseq
        %v1209 = vshrl.u32 %v1208, 7
        %v1210 = vsub.s32 6, %v1209
        %v1211 = vrot.slane %v945, %v1210
        %v1212 = vlaneseq
        %v1213 = vshrl.u32 %v1212, 7
        %v1214 = vsub.s32 7, %v1213
        %v1215 = vrot.slane %v945, %v1214
        %v1216 = vlaneseq
        %v1217 = vshrl.u32 %v1216, 7
        %v1218 = vsub.s32 0, %v1217
        %v1219 = vrot.slane %v946, %v1218
        %v1220 = vlaneseq
        %v1221 = vshrl.u32 %v1220, 7
        %v1222 = vsub.s32 1, %v1221
        %v1223 = vrot.slane %v946, %v1222
        %v1224 = vlaneseq
        %v1225 = vshrl.u32 %v1224, 7
        %v1226 = vsub.s32 2, %v1225
        %v1227 = vrot.slane %v946, %v1226
        %v1228 = vlaneseq
        %v1229 = vshrl.u32 %v1228, 7
        %v1230 = vsub.s32 3, %v1229
        %v1231 = vrot.slane %v946, %v1230
        %v1232 = vlaneseq
        %v1233 = vshrl.u32 %v1232, 7
        %v1234 = vsub.s32 4, %v1233
        %v1235 = vrot.slane %v946, %v1234
        %v1236 = vlaneseq
        %v1237 = vshrl.u32 %v1236, 7
        %v1238 = vsub.s32 5, %v1237
        %v1239 = vrot.slane %v946, %v1238
        %v1240 = vlaneseq
        %v1241 = vshrl.u32 %v1240, 7
        %v1242 = vsub.s32 6, %v1241
        %v1243 = vrot.slane %v946, %v1242
        %v1244 = vlaneseq
        %v1245 = vshrl.u32 %v1244, 7
        %v1246 = vsub.s32 7, %v1245
        %v1247 = vrot.slane %v946, %v1246
        %v1248 = vlaneseq
        %v1249 = vshrl.u32 %v1248, 7
        %v1250 = vsub.s32 0, %v1249
        %v1251 = vrot.slane %v947, %v1250
        %v1252 = vlaneseq
        %v1253 = vshrl.u32 %v1252, 7
        %v1254 = vsub.s32 1, %v1253
        %v1255 = vrot.slane %v947, %v1254
        %v1256 = vlaneseq
        %v1257 = vshrl.u32 %v1256, 7
        %v1258 = vsub.s32 2, %v1257
        %v1259 = vrot.slane %v947, %v1258
        %v1260 = vlaneseq
        %v1261 = vshrl.u32 %v1260, 7
        %v1262 = vsub.s32 3, %v1261
        %v1263 = vrot.slane %v947, %v1262
        %v1264 = vlaneseq
        %v1265 = vshrl.u32 %v1264, 7
        %v1266 = vsub.s32 4, %v1265
        %v1267 = vrot.slane %v947, %v1266
        %v1268 = vlaneseq
        %v1269 = vshrl.u32 %v1268, 7
        %v1270 = vsub.s32 5, %v1269
        %v1271 = vrot.slane %v947, %v1270
        %v1272 = vlaneseq
        %v1273 = vshrl.u32 %v1272, 7
        %v1274 = vsub.s32 6, %v1273
        %v1275 = vrot.slane %v947, %v1274
        %v1276 = vlaneseq
        %v1277 = vshrl.u32 %v1276, 7
        %v1278 = vsub.s32 7, %v1277
        %v1279 = vrot.slane %v947, %v1278
        %v1280 = vlaneseq
        %v1281 = vshrl.u32 %v1280, 7
        %v1282 = vsub.s32 0, %v1281
        %v1283 = vrot.slane %v948, %v1282
        %v1284 = vlaneseq
        %v1285 = vshrl.u32 %v1284, 7
        %v1286 = vsub.s32 1, %v1285
        %v1287 = vrot.slane %v948, %v1286
        %v1288 = vlaneseq
        %v1289 = vshrl.u32 %v1288, 7
        %v1290 = vsub.s32 2, %v1289
        %v1291 = vrot.slane %v948, %v1290
        %v1292 = vlaneseq
        %v1293 = vshrl.u32 %v1292, 7
        %v1294 = vsub.s32 3, %v1293
        %v1295 = vrot.slane %v948, %v1294
        %v1296 = vlaneseq
        %v1297 = vshrl.u32 %v1296, 7
        %v1298 = vsub.s32 4, %v1297
        %v1299 = vrot.slane %v948, %v1298
        %v1300 = vlaneseq
        %v1301 = vshrl.u32 %v1300, 7
        %v1302 = vsub.s32 5, %v1301
        %v1303 = vrot.slane %v948, %v1302
        %v1304 = vlaneseq
        %v1305 = vshrl.u32 %v1304, 7
        %v1306 = vsub.s32 6, %v1305
        %v1307 = vrot.slane %v948, %v1306
        %v1308 = vlaneseq
        %v1309 = vshrl.u32 %v1308, 7
        %v1310 = vsub.s32 7, %v1309
        %v1311 = vrot.slane %v948, %v1310
        %v2104 = vunpack.c.l.b16 %v234
        %v2105 = vunpack.c.h.b16 %v234
        %v2106 = vunpack.c.l.b16 %v235
        %v2107 = vunpack.c.h.b16 %v235
        %v2108 = vunpack.c.l.b16 %v236
        %v2109 = vunpack.c.h.b16 %v236
        %v2110 = vunpack.c.l.b16 %v237
        %v2111 = vunpack.c.h.b16 %v237
        %v2112 = vunpack.c.l.b16 %v238
        %v2113 = vunpack.c.h.b16 %v238
        %v2114 = vunpack.c.l.b16 %v239
        %v2115 = vunpack.c.h.b16 %v239
        %v2116 = vunpack.c.l.b16 %v240
        %v2117 = vunpack.c.h.b16 %v240
        %v2118 = vunpack.c.l.b16 %v241
        %v2119 = vunpack.c.h.b16 %v241
        %v2120 = vunpack.c.l.b16 %v242
        %v2121 = vunpack.c.h.b16 %v242
        %v2122 = vunpack.c.l.b16 %v243
        %v2123 = vunpack.c.h.b16 %v243
        %v2124 = vunpack.c.l.b16 %v244
        %v2125 = vunpack.c.h.b16 %v244
        %v2126 = vunpack.c.l.b16 %v245
        %v2127 = vunpack.c.h.b16 %v245
        %v2128 = vunpack.c.l.b16 %v246
        %v2129 = vunpack.c.h.b16 %v246
        %v2130 = vunpack.c.l.b16 %v247
        %v2131 = vunpack.c.h.b16 %v247
        %v2132 = vunpack.c.l.b16 %v248
        %v2133 = vunpack.c.h.b16 %v248
        %v2134 = vunpack.c.l.b16 %v249
        %v2135 = vunpack.c.h.b16 %v249
        %v2136 = vunpack.c.l.b16 %v250
        %v2137 = vunpack.c.h.b16 %v250
        %v2138 = vunpack.c.l.b16 %v251
        %v2139 = vunpack.c.h.b16 %v251
        %v2140 = vunpack.c.l.b16 %v252
        %v2141 = vunpack.c.h.b16 %v252
        %v2142 = vunpack.c.l.b16 %v253
        %v2143 = vunpack.c.h.b16 %v253
        %v2144 = vunpack.c.l.b16 %v254
        %v2145 = vunpack.c.h.b16 %v254
        %v2146 = vunpack.c.l.b16 %v255
        %v2147 = vunpack.c.h.b16 %v255
        %v2148 = vunpack.c.l.b16 %v256
        %v2149 = vunpack.c.h.b16 %v256
        %v2150 = vunpack.c.l.b16 %v257
        %v2151 = vunpack.c.h.b16 %v257
        %v2152 = vunpack.c.l.b16 %v258
        %v2153 = vunpack.c.h.b16 %v258
        %v2154 = vunpack.c.l.b16 %v259
        %v2155 = vunpack.c.h.b16 %v259
        %v2156 = vunpack.c.l.b16 %v260
        %v2157 = vunpack.c.h.b16 %v260
        %v2158 = vunpack.c.l.b16 %v261
        %v2159 = vunpack.c.h.b16 %v261
        %v2160 = vunpack.c.l.b16 %v262
        %v2161 = vunpack.c.h.b16 %v262
        %v2162 = vunpack.c.l.b16 %v263
        %v2163 = vunpack.c.h.b16 %v263
        %v2164 = vunpack.c.l.b16 %v264
        %v2165 = vunpack.c.h.b16 %v264
        %v2166 = vunpack.c.l.b16 %v265
        %v2167 = vunpack.c.h.b16 %v265
        %v2168 = vunpack.c.l.b16 %v266
        %v2169 = vunpack.c.h.b16 %v266
        %v2170 = vunpack.c.l.b16 %v267
        %v2171 = vunpack.c.h.b16 %v267
        %v2172 = vunpack.c.l.b16 %v268
        %v2173 = vunpack.c.h.b16 %v268
        %v2174 = vunpack.c.l.b16 %v269
        %v2175 = vunpack.c.h.b16 %v269
        %v2176 = vunpack.c.l.b16 %v270
        %v2177 = vunpack.c.h.b16 %v270
        %v2178 = vunpack.c.l.b16 %v271
        %v2179 = vunpack.c.h.b16 %v271
        %v2180 = vunpack.c.l.b16 %v272
        %v2181 = vunpack.c.h.b16 %v272
        %v2182 = vunpack.c.l.b16 %v273
        %v2183 = vunpack.c.h.b16 %v273
        %v2184 = vunpack.c.l.b16 %v274
        %v2185 = vunpack.c.h.b16 %v274
        %v2186 = vunpack.c.l.b16 %v275
        %v2187 = vunpack.c.h.b16 %v275
        %v2188 = vunpack.c.l.b16 %v276
        %v2189 = vunpack.c.h.b16 %v276
        %v2190 = vunpack.c.l.b16 %v277
        %v2191 = vunpack.c.h.b16 %v277
        %v2192 = vunpack.c.l.b16 %v278
        %v2193 = vunpack.c.h.b16 %v278
        %v2194 = vunpack.c.l.b16 %v279
        %v2195 = vunpack.c.h.b16 %v279
        %v2196 = vunpack.c.l.b16 %v280
        %v2197 = vunpack.c.h.b16 %v280
        %v2198 = vunpack.c.l.b16 %v281
        %v2199 = vunpack.c.h.b16 %v281
        %v2200 = vunpack.c.l.b16 %v282
        %v2201 = vunpack.c.h.b16 %v282
        %v2202 = vunpack.c.l.b16 %v283
        %v2203 = vunpack.c.h.b16 %v283
        %v2204 = vunpack.c.l.b16 %v284
        %v2205 = vunpack.c.h.b16 %v284
        %v2206 = vunpack.c.l.b16 %v285
        %v2207 = vunpack.c.h.b16 %v285
        %v2208 = vunpack.c.l.b16 %v286
        %v2209 = vunpack.c.h.b16 %v286
        %v2210 = vunpack.c.l.b16 %v287
        %v2211 = vunpack.c.h.b16 %v287
        %v2212 = vunpack.c.l.b16 %v288
        %v2213 = vunpack.c.h.b16 %v288
        %v2214 = vunpack.c.l.b16 %v289
        %v2215 = vunpack.c.h.b16 %v289
        %v2216 = vunpack.c.l.b16 %v290
        %v2217 = vunpack.c.h.b16 %v290
        %v2218 = vunpack.c.l.b16 %v291
        %v2219 = vunpack.c.h.b16 %v291
        %v2220 = vunpack.c.l.b16 %v292
        %v2221 = vunpack.c.h.b16 %v292
        %v2222 = vunpack.c.l.b16 %v293
        %v2223 = vunpack.c.h.b16 %v293
        %v2224 = vunpack.c.l.b16 %v294
        %v2225 = vunpack.c.h.b16 %v294
        %v2226 = vunpack.c.l.b16 %v295
        %v2227 = vunpack.c.h.b16 %v295
        %v2228 = vunpack.c.l.b16 %v296
        %v2229 = vunpack.c.h.b16 %v296
        %v2230 = vunpack.c.l.b16 %v297
        %v2231 = vunpack.c.h.b16 %v297
        %v2232 = vunpack.c.l.b16 %v298
        %v2233 = vunpack.c.h.b16 %v298
        %v2234 = vunpack.c.l.b16 %v299
        %v2235 = vunpack.c.h.b16 %v299
        %v2236 = vunpack.c.l.b16 %v300
        %v2237 = vunpack.c.h.b16 %v300
        %v2238 = vunpack.c.l.b16 %v301
        %v2239 = vunpack.c.h.b16 %v301
        %v2240 = vunpack.c.l.b16 %v302
        %v2241 = vunpack.c.h.b16 %v302
        %v2242 = vunpack.c.l.b16 %v303
        %v2243 = vunpack.c.h.b16 %v303
        %v2244 = vunpack.c.l.b16 %v304
        %v2245 = vunpack.c.h.b16 %v304
        %v2246 = vunpack.c.l.b16 %v305
        %v2247 = vunpack.c.h.b16 %v305
        %v2248 = vunpack.c.l.b16 %v306
        %v2249 = vunpack.c.h.b16 %v306
        %v2250 = vunpack.c.l.b16 %v307
        %v2251 = vunpack.c.h.b16 %v307
        %v2252 = vunpack.c.l.b16 %v308
        %v2253 = vunpack.c.h.b16 %v308
        %v2254 = vunpack.c.l.b16 %v309
        %v2255 = vunpack.c.h.b16 %v309
        %v2256 = vunpack.c.l.b16 %v310
        %v2257 = vunpack.c.h.b16 %v310
        %v2258 = vunpack.c.l.b16 %v311
        %v2259 = vunpack.c.h.b16 %v311
        %v2260 = vunpack.c.l.b16 %v312
        %v2261 = vunpack.c.h.b16 %v312
        %v2262 = vunpack.c.l.b16 %v313
        %v2263 = vunpack.c.h.b16 %v313
        %v2264 = vunpack.c.l.b16 %v314
        %v2265 = vunpack.c.h.b16 %v314
        %v2266 = vunpack.c.l.b16 %v315
        %v2267 = vunpack.c.h.b16 %v315
        %v2268 = vunpack.c.l.b16 %v316
        %v2269 = vunpack.c.h.b16 %v316
        %v2270 = vunpack.c.l.b16 %v317
        %v2271 = vunpack.c.h.b16 %v317
        %v2272 = vunpack.c.l.b16 %v318
        %v2273 = vunpack.c.h.b16 %v318
        %v2274 = vunpack.c.l.b16 %v319
        %v2275 = vunpack.c.h.b16 %v319
        %v2276 = vunpack.c.l.b16 %v320
        %v2277 = vunpack.c.h.b16 %v320
        %v2278 = vunpack.c.l.b16 %v321
        %v2279 = vunpack.c.h.b16 %v321
        %v2280 = vunpack.c.l.b16 %v322
        %v2281 = vunpack.c.h.b16 %v322
        %v2282 = vunpack.c.l.b16 %v323
        %v2283 = vunpack.c.h.b16 %v323
        %v2284 = vunpack.c.l.b16 %v324
        %v2285 = vunpack.c.h.b16 %v324
        %v2286 = vunpack.c.l.b16 %v325
        %v2287 = vunpack.c.h.b16 %v325
        %v2288 = vunpack.c.l.b16 %v326
        %v2289 = vunpack.c.h.b16 %v326
        %v2290 = vunpack.c.l.b16 %v327
        %v2291 = vunpack.c.h.b16 %v327
        %v2292 = vunpack.c.l.b16 %v328
        %v2293 = vunpack.c.h.b16 %v328
        %v2294 = vunpack.c.l.b16 %v329
        %v2295 = vunpack.c.h.b16 %v329
        %v2296 = vunpack.c.l.b16 %v330
        %v2297 = vunpack.c.h.b16 %v330
        %v2298 = vunpack.c.l.b16 %v331
        %v2299 = vunpack.c.h.b16 %v331
        %v2300 = vunpack.c.l.b16 %v332
        %v2301 = vunpack.c.h.b16 %v332
        %v2302 = vunpack.c.l.b16 %v333
        %v2303 = vunpack.c.h.b16 %v333
        %v2304 = vunpack.c.l.b16 %v334
        %v2305 = vunpack.c.h.b16 %v334
        %v2306 = vunpack.c.l.b16 %v335
        %v2307 = vunpack.c.h.b16 %v335
        %v2308 = vunpack.c.l.b16 %v336
        %v2309 = vunpack.c.h.b16 %v336
        %v2310 = vunpack.c.l.b16 %v337
        %v2311 = vunpack.c.h.b16 %v337
        %v2312 = vunpack.c.l.b16 %v338
        %v2313 = vunpack.c.h.b16 %v338
        %v2314 = vunpack.c.l.b16 %v339
        %v2315 = vunpack.c.h.b16 %v339
        %v2316 = vunpack.c.l.b16 %v340
        %v2317 = vunpack.c.h.b16 %v340
        %v2318 = vunpack.c.l.b16 %v341
        %v2319 = vunpack.c.h.b16 %v341
        %v2320 = vunpack.c.l.b16 %v342
        %v2321 = vunpack.c.h.b16 %v342
        %v2322 = vunpack.c.l.b16 %v343
        %v2323 = vunpack.c.h.b16 %v343
        %v2324 = vunpack.c.l.b16 %v344
        %v2325 = vunpack.c.h.b16 %v344
        %v2326 = vunpack.c.l.b16 %v345
        %v2327 = vunpack.c.h.b16 %v345
        %v2328 = vunpack.c.l.b16 %v346
        %v2329 = vunpack.c.h.b16 %v346
        %v2330 = vunpack.c.l.b16 %v347
        %v2331 = vunpack.c.h.b16 %v347
        %v2332 = vunpack.c.l.b16 %v348
        %v2333 = vunpack.c.h.b16 %v348
        %v2334 = vunpack.c.l.b16 %v349
        %v2335 = vunpack.c.h.b16 %v349
        %v2336 = vunpack.c.l.b16 %v350
        %v2337 = vunpack.c.h.b16 %v350
        %v2338 = vunpack.c.l.b16 %v351
        %v2339 = vunpack.c.h.b16 %v351
        %v2340 = vunpack.c.l.b16 %v352
        %v2341 = vunpack.c.h.b16 %v352
        %v2342 = vunpack.c.l.b16 %v353
        %v2343 = vunpack.c.h.b16 %v353
        %v2344 = vunpack.c.l.b16 %v354
        %v2345 = vunpack.c.h.b16 %v354
        %v2346 = vunpack.c.l.b16 %v355
        %v2347 = vunpack.c.h.b16 %v355
        %v2348 = vunpack.c.l.b16 %v356
        %v2349 = vunpack.c.h.b16 %v356
        %v2350 = vunpack.c.l.b16 %v357
        %v2351 = vunpack.c.h.b16 %v357
        %v2352 = vunpack.c.l.b16 %v358
        %v2353 = vunpack.c.h.b16 %v358
        %v2354 = vunpack.c.l.b16 %v359
        %v2355 = vunpack.c.h.b16 %v359
        %v2356 = vunpack.c.l.b16 %v360
        %v2357 = vunpack.c.h.b16 %v360
        %v2358 = vunpack.c.l.b16 %v361
        %v2359 = vunpack.c.h.b16 %v361
        %v2360 = vunpack.c.l.b16 %v362
        %v2361 = vunpack.c.h.b16 %v362
        %v2362 = vunpack.c.l.b16 %v363
        %v2363 = vunpack.c.h.b16 %v363
        %v2364 = vunpack.c.l.b16 %v364
        %v2365 = vunpack.c.h.b16 %v364
        %v2366 = vunpack.c.l.b16 %v365
        %v2367 = vunpack.c.h.b16 %v365
        %v2368 = vunpack.c.l.b16 %v366
        %v2369 = vunpack.c.h.b16 %v366
        %v2370 = vunpack.c.l.b16 %v367
        %v2371 = vunpack.c.h.b16 %v367
        %v2372 = vunpack.c.l.b16 %v368
        %v2373 = vunpack.c.h.b16 %v368
        %v2374 = vunpack.c.l.b16 %v369
        %v2375 = vunpack.c.h.b16 %v369
        %v2376 = vunpack.c.l.b16 %v370
        %v2377 = vunpack.c.h.b16 %v370
        %v2378 = vunpack.c.l.b16 %v371
        %v2379 = vunpack.c.h.b16 %v371
        %v2380 = vunpack.c.l.b16 %v372
        %v2381 = vunpack.c.h.b16 %v372
        %v2382 = vunpack.c.l.b16 %v373
        %v2383 = vunpack.c.h.b16 %v373
        %v2384 = vunpack.c.l.b16 %v374
        %v2385 = vunpack.c.h.b16 %v374
        %v2386 = vunpack.c.l.b16 %v375
        %v2387 = vunpack.c.h.b16 %v375
        %v2388 = vunpack.c.l.b16 %v376
        %v2389 = vunpack.c.h.b16 %v376
        %v2390 = vunpack.c.l.b16 %v377
        %v2391 = vunpack.c.h.b16 %v377
        %v2392 = vunpack.c.l.b16 %v378
        %v2393 = vunpack.c.h.b16 %v378
        %v2394 = vunpack.c.l.b16 %v379
        %v2395 = vunpack.c.h.b16 %v379
        %v2396 = vunpack.c.l.b16 %v380
        %v2397 = vunpack.c.h.b16 %v380
        %v2398 = vunpack.c.l.b16 %v381
        %v2399 = vunpack.c.h.b16 %v381
        %v2400 = vunpack.c.l.b16 %v382
        %v2401 = vunpack.c.h.b16 %v382
        %v2402 = vunpack.c.l.b16 %v383
        %v2403 = vunpack.c.h.b16 %v383
        %v2404 = vunpack.c.l.b16 %v384
        %v2405 = vunpack.c.h.b16 %v384
        %v2406 = vunpack.c.l.b16 %v385
        %v2407 = vunpack.c.h.b16 %v385
        %v2408 = vunpack.c.l.b16 %v386
        %v2409 = vunpack.c.h.b16 %v386
        %v2410 = vunpack.c.l.b16 %v387
        %v2411 = vunpack.c.h.b16 %v387
        %v2412 = vunpack.c.l.b16 %v388
        %v2413 = vunpack.c.h.b16 %v388
        %v2414 = vunpack.c.l.b16 %v389
        %v2415 = vunpack.c.h.b16 %v389
        %v2416 = vunpack.c.l.b16 %v390
        %v2417 = vunpack.c.h.b16 %v390
        %v2418 = vunpack.c.l.b16 %v391
        %v2419 = vunpack.c.h.b16 %v391
        %v2420 = vunpack.c.l.b16 %v392
        %v2421 = vunpack.c.h.b16 %v392
        %v2422 = vunpack.c.l.b16 %v393
        %v2423 = vunpack.c.h.b16 %v393
        %v2424 = vunpack.c.l.b16 %v394
        %v2425 = vunpack.c.h.b16 %v394
        %v2426 = vunpack.c.l.b16 %v395
        %v2427 = vunpack.c.h.b16 %v395
        %v2428 = vunpack.c.l.b16 %v396
        %v2429 = vunpack.c.h.b16 %v396
        %v2430 = vunpack.c.l.b16 %v397
        %v2431 = vunpack.c.h.b16 %v397
        %v2432 = vunpack.c.l.b16 %v398
        %v2433 = vunpack.c.h.b16 %v398
        %v2434 = vunpack.c.l.b16 %v399
        %v2435 = vunpack.c.h.b16 %v399
        %v2436 = vunpack.c.l.b16 %v400
        %v2437 = vunpack.c.h.b16 %v400
        %v2438 = vunpack.c.l.b16 %v401
        %v2439 = vunpack.c.h.b16 %v401
        %v2440 = vunpack.c.l.b16 %v402
        %v2441 = vunpack.c.h.b16 %v402
        %v2442 = vunpack.c.l.b16 %v403
        %v2443 = vunpack.c.h.b16 %v403
        %v2444 = vunpack.c.l.b16 %v404
        %v2445 = vunpack.c.h.b16 %v404
        %v2446 = vunpack.c.l.b16 %v405
        %v2447 = vunpack.c.h.b16 %v405
        %v2448 = vunpack.c.l.b16 %v406
        %v2449 = vunpack.c.h.b16 %v406
        %v2450 = vunpack.c.l.b16 %v407
        %v2451 = vunpack.c.h.b16 %v407
        %v2452 = vunpack.c.l.b16 %v408
        %v2453 = vunpack.c.h.b16 %v408
        %v2454 = vunpack.c.l.b16 %v409
        %v2455 = vunpack.c.h.b16 %v409
        %v2456 = vunpack.c.l.b16 %v410
        %v2457 = vunpack.c.h.b16 %v410
        %v2458 = vunpack.c.l.b16 %v411
        %v2459 = vunpack.c.h.b16 %v411
        %v2460 = vunpack.c.l.b16 %v412
        %v2461 = vunpack.c.h.b16 %v412
        %v2462 = vunpack.c.l.b16 %v413
        %v2463 = vunpack.c.h.b16 %v413
        %v2464 = vunpack.c.l.b16 %v414
        %v2465 = vunpack.c.h.b16 %v414
        %v2466 = vunpack.c.l.b16 %v415
        %v2467 = vunpack.c.h.b16 %v415
        %v2468 = vunpack.c.l.b16 %v416
        %v2469 = vunpack.c.h.b16 %v416
        %v2470 = vunpack.c.l.b16 %v417
        %v2471 = vunpack.c.h.b16 %v417
        %v2472 = vunpack.c.l.b16 %v418
        %v2473 = vunpack.c.h.b16 %v418
        %v2474 = vunpack.c.l.b16 %v419
        %v2475 = vunpack.c.h.b16 %v419
        %v2476 = vunpack.c.l.b16 %v420
        %v2477 = vunpack.c.h.b16 %v420
        %v2478 = vunpack.c.l.b16 %v421
        %v2479 = vunpack.c.h.b16 %v421
        %v2480 = vunpack.c.l.b16 %v422
        %v2481 = vunpack.c.h.b16 %v422
        %v2482 = vunpack.c.l.b16 %v423
        %v2483 = vunpack.c.h.b16 %v423
        %v2484 = vunpack.c.l.b16 %v424
        %v2485 = vunpack.c.h.b16 %v424
        %v2486 = vunpack.c.l.b16 %v425
        %v2487 = vunpack.c.h.b16 %v425
        %v2488 = vunpack.c.l.b16 %v426
        %v2489 = vunpack.c.h.b16 %v426
        %v2490 = vunpack.c.l.b16 %v427
        %v2491 = vunpack.c.h.b16 %v427
        %v2492 = vunpack.c.l.b16 %v428
        %v2493 = vunpack.c.h.b16 %v428
        %v2494 = vunpack.c.l.b16 %v429
        %v2495 = vunpack.c.h.b16 %v429
        %v2496 = vunpack.c.l.b16 %v430
        %v2497 = vunpack.c.h.b16 %v430
        %v2498 = vunpack.c.l.b16 %v431
        %v2499 = vunpack.c.h.b16 %v431
        %v2500 = vunpack.c.l.b16 %v432
        %v2501 = vunpack.c.h.b16 %v432
        %v2502 = vunpack.c.l.b16 %v433
        %v2503 = vunpack.c.h.b16 %v433
        %v2504 = vunpack.c.l.b16 %v434
        %v2505 = vunpack.c.h.b16 %v434
        %v2506 = vunpack.c.l.b16 %v435
        %v2507 = vunpack.c.h.b16 %v435
        %v2508 = vunpack.c.l.b16 %v436
        %v2509 = vunpack.c.h.b16 %v436
        %v2510 = vunpack.c.l.b16 %v437
        %v2511 = vunpack.c.h.b16 %v437
        %v2512 = vunpack.c.l.b16 %v438
        %v2513 = vunpack.c.h.b16 %v438
        %v2514 = vunpack.c.l.b16 %v439
        %v2515 = vunpack.c.h.b16 %v439
        %v2516 = vunpack.c.l.b16 %v440
        %v2517 = vunpack.c.h.b16 %v440
        %v2518 = vunpack.c.l.b16 %v441
        %v2519 = vunpack.c.h.b16 %v441
        %v2520 = vunpack.c.l.b16 %v442
        %v2521 = vunpack.c.h.b16 %v442
        %v2522 = vunpack.c.l.b16 %v443
        %v2523 = vunpack.c.h.b16 %v443
        %v2524 = vunpack.c.l.b16 %v444
        %v2525 = vunpack.c.h.b16 %v444
        %v2526 = vunpack.c.l.b16 %v445
        %v2527 = vunpack.c.h.b16 %v445
        %v2528 = vunpack.c.l.b16 %v446
        %v2529 = vunpack.c.h.b16 %v446
        %v2530 = vunpack.c.l.b16 %v447
        %v2531 = vunpack.c.h.b16 %v447
        %v2532 = vunpack.c.l.b16 %v448
        %v2533 = vunpack.c.h.b16 %v448
        %v2534 = vunpack.c.l.b16 %v449
        %v2535 = vunpack.c.h.b16 %v449
        %v2536 = vunpack.c.l.b16 %v450
        %v2537 = vunpack.c.h.b16 %v450
        %v2538 = vunpack.c.l.b16 %v451
        %v2539 = vunpack.c.h.b16 %v451
        %v2540 = vunpack.c.l.b16 %v452
        %v2541 = vunpack.c.h.b16 %v452
        %v2542 = vunpack.c.l.b16 %v453
        %v2543 = vunpack.c.h.b16 %v453
        %v2544 = vunpack.c.l.b16 %v454
        %v2545 = vunpack.c.h.b16 %v454
        %v2546 = vunpack.c.l.b16 %v455
        %v2547 = vunpack.c.h.b16 %v455
        %v2548 = vunpack.c.l.b16 %v456
        %v2549 = vunpack.c.h.b16 %v456
        %v2550 = vunpack.c.l.b16 %v457
        %v2551 = vunpack.c.h.b16 %v457
        %v2552 = vunpack.c.l.b16 %v458
        %v2553 = vunpack.c.h.b16 %v458
        %v2554 = vunpack.c.l.b16 %v459
        %v2555 = vunpack.c.h.b16 %v459
        %v2556 = vunpack.c.l.b16 %v460
        %v2557 = vunpack.c.h.b16 %v460
        %v2558 = vunpack.c.l.b16 %v461
        %v2559 = vunpack.c.h.b16 %v461
        %v2560 = vunpack.c.l.b16 %v462
        %v2561 = vunpack.c.h.b16 %v462
        %v2562 = vunpack.c.l.b16 %v463
        %v2563 = vunpack.c.h.b16 %v463
        %v2564 = vunpack.c.l.b16 %v464
        %v2565 = vunpack.c.h.b16 %v464
        %v2566 = vunpack.c.l.b16 %v465
        %v2567 = vunpack.c.h.b16 %v465
        %v2568 = vunpack.c.l.b16 %v466
        %v2569 = vunpack.c.h.b16 %v466
        %v2570 = vunpack.c.l.b16 %v467
        %v2571 = vunpack.c.h.b16 %v467
        %v2572 = vunpack.c.l.b16 %v468
        %v2573 = vunpack.c.h.b16 %v468
        %v2574 = vunpack.c.l.b16 %v469
        %v2575 = vunpack.c.h.b16 %v469
        %v2576 = vunpack.c.l.b16 %v470
        %v2577 = vunpack.c.h.b16 %v470
        %v2578 = vunpack.c.l.b16 %v471
        %v2579 = vunpack.c.h.b16 %v471
        %v2580 = vunpack.c.l.b16 %v472
        %v2581 = vunpack.c.h.b16 %v472
        %v2582 = vunpack.c.l.b16 %v473
        %v2583 = vunpack.c.h.b16 %v473
        %v2584 = vunpack.c.l.b16 %v474
        %v2585 = vunpack.c.h.b16 %v474
        %v2586 = vunpack.c.l.b16 %v475
        %v2587 = vunpack.c.h.b16 %v475
        %v2588 = vunpack.c.l.b16 %v476
        %v2589 = vunpack.c.h.b16 %v476
        %v2590 = vunpack.c.l.b16 %v477
        %v2591 = vunpack.c.h.b16 %v477
        %v2592 = vunpack.c.l.b16 %v478
        %v2593 = vunpack.c.h.b16 %v478
        %v2594 = vunpack.c.l.b16 %v479
        %v2595 = vunpack.c.h.b16 %v479
        %v2596 = vunpack.c.l.b16 %v480
        %v2597 = vunpack.c.h.b16 %v480
        %v2598 = vunpack.c.l.b16 %v481
        %v2599 = vunpack.c.h.b16 %v481
        %v2600 = vunpack.c.l.b16 %v482
        %v2601 = vunpack.c.h.b16 %v482
        %v2602 = vunpack.c.l.b16 %v483
        %v2603 = vunpack.c.h.b16 %v483
        %v2604 = vunpack.c.l.b16 %v484
        %v2605 = vunpack.c.h.b16 %v484
        %v2606 = vunpack.c.l.b16 %v485
        %v2607 = vunpack.c.h.b16 %v485
        %v2608 = vunpack.c.l.b16 %v486
        %v2609 = vunpack.c.h.b16 %v486
        %v2610 = vunpack.c.l.b16 %v487
        %v2611 = vunpack.c.h.b16 %v487
        %v2612 = vunpack.c.l.b16 %v488
        %v2613 = vunpack.c.h.b16 %v488
        %v2614 = vunpack.c.l.b16 %v489
        %v2615 = vunpack.c.h.b16 %v489
        %v2616 = vunpack.c.l.b16 %v490
        %v2617 = vunpack.c.h.b16 %v490
        %v2618 = vunpack.c.l.b16 %v491
        %v2619 = vunpack.c.h.b16 %v491
        %v2620 = vunpack.c.l.b16 %v492
        %v2621 = vunpack.c.h.b16 %v492
        %v2622 = vunpack.c.l.b16 %v493
        %v2623 = vunpack.c.h.b16 %v493
        %v2624 = vunpack.c.l.b16 %v494
        %v2625 = vunpack.c.h.b16 %v494
        %v2626 = vunpack.c.l.b16 %v495
        %v2627 = vunpack.c.h.b16 %v495
        %v2628 = vunpack.c.l.b16 %v496
        %v2629 = vunpack.c.h.b16 %v496
        %v2630 = vunpack.c.l.b16 %v497
        %v2631 = vunpack.c.h.b16 %v497
        %v2632 = vunpack.c.l.b16 %v498
        %v2633 = vunpack.c.h.b16 %v498
        %v2634 = vunpack.c.l.b16 %v499
        %v2635 = vunpack.c.h.b16 %v499
        %v2636 = vunpack.c.l.b16 %v500
        %v2637 = vunpack.c.h.b16 %v500
        %v2638 = vunpack.c.l.b16 %v501
        %v2639 = vunpack.c.h.b16 %v501
        %v2640 = vunpack.c.l.b16 %v502
        %v2641 = vunpack.c.h.b16 %v502
        %v2642 = vunpack.c.l.b16 %v503
        %v2643 = vunpack.c.h.b16 %v503
        %v2644 = vunpack.c.l.b16 %v504
        %v2645 = vunpack.c.h.b16 %v504
        %v2646 = vunpack.c.l.b16 %v505
        %v2647 = vunpack.c.h.b16 %v505
        %v2648 = vunpack.c.l.b16 %v506
        %v2649 = vunpack.c.h.b16 %v506
        %v2650 = vunpack.c.l.b16 %v507
        %v2651 = vunpack.c.h.b16 %v507
        %v2652 = vunpack.c.l.b16 %v508
        %v2653 = vunpack.c.h.b16 %v508
        %v2654 = vunpack.c.l.b16 %v509
        %v2655 = vunpack.c.h.b16 %v509
        %v2656 = vunpack.c.l.b16 %v510
        %v2657 = vunpack.c.h.b16 %v510
        %v2658 = vunpack.c.l.b16 %v511
        %v2659 = vunpack.c.h.b16 %v511
        %v2660 = vunpack.c.l.b16 %v512
        %v2661 = vunpack.c.h.b16 %v512
        %v2662 = vunpack.c.l.b16 %v513
        %v2663 = vunpack.c.h.b16 %v513
        %v2664 = vunpack.c.l.b16 %v514
        %v2665 = vunpack.c.h.b16 %v514
        %v2666 = vunpack.c.l.b16 %v515
        %v2667 = vunpack.c.h.b16 %v515
        %v2668 = vunpack.c.l.b16 %v516
        %v2669 = vunpack.c.h.b16 %v516
        %v2670 = vunpack.c.l.b16 %v517
        %v2671 = vunpack.c.h.b16 %v517
        %v2672 = vunpack.c.l.b16 %v518
        %v2673 = vunpack.c.h.b16 %v518
        %v2674 = vunpack.c.l.b16 %v519
        %v2675 = vunpack.c.h.b16 %v519
        %v2676 = vunpack.c.l.b16 %v520
        %v2677 = vunpack.c.h.b16 %v520
        %v2678 = vunpack.c.l.b16 %v521
        %v2679 = vunpack.c.h.b16 %v521
        %v2680 = vunpack.c.l.b16 %v522
        %v2681 = vunpack.c.h.b16 %v522
        %v2682 = vunpack.c.l.b16 %v523
        %v2683 = vunpack.c.h.b16 %v523
        %v2684 = vunpack.c.l.b16 %v524
        %v2685 = vunpack.c.h.b16 %v524
        %v2686 = vunpack.c.l.b16 %v525
        %v2687 = vunpack.c.h.b16 %v525
        %v2688 = vunpack.c.l.b16 %v526
        %v2689 = vunpack.c.h.b16 %v526
        %v2690 = vunpack.c.l.b16 %v527
        %v2691 = vunpack.c.h.b16 %v527
        %v2692 = vunpack.c.l.b16 %v528
        %v2693 = vunpack.c.h.b16 %v528
        %v2694 = vunpack.c.l.b16 %v529
        %v2695 = vunpack.c.h.b16 %v529
        %v2696 = vunpack.c.l.b16 %v530
        %v2697 = vunpack.c.h.b16 %v530
        %v2698 = vunpack.c.l.b16 %v531
        %v2699 = vunpack.c.h.b16 %v531
        %v2700 = vunpack.c.l.b16 %v532
        %v2701 = vunpack.c.h.b16 %v532
        %v2702 = vunpack.c.l.b16 %v533
        %v2703 = vunpack.c.h.b16 %v533
        %v2704 = vunpack.c.l.b16 %v534
        %v2705 = vunpack.c.h.b16 %v534
        %v2706 = vunpack.c.l.b16 %v535
        %v2707 = vunpack.c.h.b16 %v535
        %v2708 = vunpack.c.l.b16 %v536
        %v2709 = vunpack.c.h.b16 %v536
        %v2710 = vunpack.c.l.b16 %v537
        %v2711 = vunpack.c.h.b16 %v537
        %v2712 = vunpack.c.l.b16 %v538
        %v2713 = vunpack.c.h.b16 %v538
        %v2714 = vunpack.c.l.b16 %v539
        %v2715 = vunpack.c.h.b16 %v539
        %v2716 = vunpack.c.l.b16 %v540
        %v2717 = vunpack.c.h.b16 %v540
        %v2718 = vunpack.c.l.b16 %v541
        %v2719 = vunpack.c.h.b16 %v541
        %v2720 = vunpack.c.l.b16 %v542
        %v2721 = vunpack.c.h.b16 %v542
        %v2722 = vunpack.c.l.b16 %v543
        %v2723 = vunpack.c.h.b16 %v543
        %v2724 = vunpack.c.l.b16 %v544
        %v2725 = vunpack.c.h.b16 %v544
        %v2726 = vunpack.c.l.b16 %v545
        %v2727 = vunpack.c.h.b16 %v545
        %v2728 = vunpack.c.l.b16 %v546
        %v2729 = vunpack.c.h.b16 %v546
        %v2730 = vunpack.c.l.b16 %v547
        %v2731 = vunpack.c.h.b16 %v547
        %v2732 = vunpack.c.l.b16 %v548
        %v2733 = vunpack.c.h.b16 %v548
        %v2734 = vunpack.c.l.b16 %v549
        %v2735 = vunpack.c.h.b16 %v549
        %v2736 = vunpack.c.l.b16 %v550
        %v2737 = vunpack.c.h.b16 %v550
        %v2738 = vunpack.c.l.b16 %v551
        %v2739 = vunpack.c.h.b16 %v551
        %v2740 = vunpack.c.l.b16 %v552
        %v2741 = vunpack.c.h.b16 %v552
        %v2742 = vunpack.c.l.b16 %v553
        %v2743 = vunpack.c.h.b16 %v553
        %v2744 = vunpack.c.l.b16 %v554
        %v2745 = vunpack.c.h.b16 %v554
        %v2746 = vunpack.c.l.b16 %v555
        %v2747 = vunpack.c.h.b16 %v555
        %v2748 = vunpack.c.l.b16 %v556
        %v2749 = vunpack.c.h.b16 %v556
        %v2750 = vunpack.c.l.b16 %v557
        %v2751 = vunpack.c.h.b16 %v557
        %v2752 = vunpack.c.l.b16 %v558
        %v2753 = vunpack.c.h.b16 %v558
        %v2754 = vunpack.c.l.b16 %v559
        %v2755 = vunpack.c.h.b16 %v559
        %v2756 = vunpack.c.l.b16 %v560
        %v2757 = vunpack.c.h.b16 %v560
        %v2758 = vunpack.c.l.b16 %v561
        %v2759 = vunpack.c.h.b16 %v561
        %v2760 = vunpack.c.l.b16 %v562
        %v2761 = vunpack.c.h.b16 %v562
        %v2762 = vunpack.c.l.b16 %v563
        %v2763 = vunpack.c.h.b16 %v563
        %v2764 = vunpack.c.l.b16 %v564
        %v2765 = vunpack.c.h.b16 %v564
        %v2766 = vunpack.c.l.b16 %v565
        %v2767 = vunpack.c.h.b16 %v565
        %v2768 = vunpack.c.l.b16 %v566
        %v2769 = vunpack.c.h.b16 %v566
        %v2770 = vunpack.c.l.b16 %v567
        %v2771 = vunpack.c.h.b16 %v567
        %v2772 = vunpack.c.l.b16 %v568
        %v2773 = vunpack.c.h.b16 %v568
        %v2774 = vunpack.c.l.b16 %v569
        %v2775 = vunpack.c.h.b16 %v569
        %v2776 = vunpack.c.l.b16 %v570
        %v2777 = vunpack.c.h.b16 %v570
        %v2778 = vunpack.c.l.b16 %v571
        %v2779 = vunpack.c.h.b16 %v571
        %v2780 = vunpack.c.l.b16 %v572
        %v2781 = vunpack.c.h.b16 %v572
        %v2782 = vunpack.c.l.b16 %v573
        %v2783 = vunpack.c.h.b16 %v573
        %v2784 = vunpack.c.l.b16 %v574
        %v2785 = vunpack.c.h.b16 %v574
        %v2786 = vunpack.c.l.b16 %v575
        %v2787 = vunpack.c.h.b16 %v575
        %v2788 = vunpack.c.l.b16 %v576
        %v2789 = vunpack.c.h.b16 %v576
        %v2790 = vunpack.c.l.b16 %v577
        %v2791 = vunpack.c.h.b16 %v577
        %v2792 = vunpack.c.l.b16 %v578
        %v2793 = vunpack.c.h.b16 %v578
        %v2794 = vunpack.c.l.b16 %v579
        %v2795 = vunpack.c.h.b16 %v579
        %v2796 = vunpack.c.l.b16 %v580
        %v2797 = vunpack.c.h.b16 %v580
        %v2798 = vunpack.c.l.b16 %v581
        %v2799 = vunpack.c.h.b16 %v581
        %v2800 = vunpack.c.l.b16 %v582
        %v2801 = vunpack.c.h.b16 %v582
        %v2802 = vunpack.c.l.b16 %v583
        %v2803 = vunpack.c.h.b16 %v583
        %v2804 = vunpack.c.l.b16 %v584
        %v2805 = vunpack.c.h.b16 %v584
        %v2806 = vunpack.c.l.b16 %v585
        %v2807 = vunpack.c.h.b16 %v585
        %v2808 = vunpack.c.l.b16 %v586
        %v2809 = vunpack.c.h.b16 %v586
        %v2810 = vunpack.c.l.b16 %v587
        %v2811 = vunpack.c.h.b16 %v587
        %v2812 = vunpack.c.l.b16 %v588
        %v2813 = vunpack.c.h.b16 %v588
        %v2814 = vunpack.c.l.b16 %v589
        %v2815 = vunpack.c.h.b16 %v589
        %v2816 = vunpack.c.l.b16 %v590
        %v2817 = vunpack.c.h.b16 %v590
        %v2818 = vunpack.c.l.b16 %v591
        %v2819 = vunpack.c.h.b16 %v591
        %v2820 = vunpack.c.l.b16 %v592
        %v2821 = vunpack.c.h.b16 %v592
        %v2822 = vunpack.c.l.b16 %v593
        %v2823 = vunpack.c.h.b16 %v593
        %v2824 = vunpack.c.l.b16 %v594
        %v2825 = vunpack.c.h.b16 %v594
        %v2826 = vunpack.c.l.b16 %v595
        %v2827 = vunpack.c.h.b16 %v595
        %v2828 = vunpack.c.l.b16 %v596
        %v2829 = vunpack.c.h.b16 %v596
        %v2830 = vunpack.c.l.b16 %v597
        %v2831 = vunpack.c.h.b16 %v597
        %v2832 = vunpack.c.l.b16 %v598
        %v2833 = vunpack.c.h.b16 %v598
        %v2834 = vunpack.c.l.b16 %v599
        %v2835 = vunpack.c.h.b16 %v599
        %v2836 = vunpack.c.l.b16 %v600
        %v2837 = vunpack.c.h.b16 %v600
        %v2838 = vunpack.c.l.b16 %v601
        %v2839 = vunpack.c.h.b16 %v601
        %v2840 = vunpack.c.l.b16 %v602
        %v2841 = vunpack.c.h.b16 %v602
        %v2842 = vunpack.c.l.b16 %v603
        %v2843 = vunpack.c.h.b16 %v603
        %v2844 = vunpack.c.l.b16 %v604
        %v2845 = vunpack.c.h.b16 %v604
        %v2846 = vunpack.c.l.b16 %v605
        %v2847 = vunpack.c.h.b16 %v605
        %v2848 = vunpack.c.l.b16 %v606
        %v2849 = vunpack.c.h.b16 %v606
        %v2850 = vunpack.c.l.b16 %v607
        %v2851 = vunpack.c.h.b16 %v607
        %v2852 = vunpack.c.l.b16 %v608
        %v2853 = vunpack.c.h.b16 %v608
        %v2854 = vunpack.c.l.b16 %v609
        %v2855 = vunpack.c.h.b16 %v609
        %v2856 = vunpack.c.l.b16 %v610
        %v2857 = vunpack.c.h.b16 %v610
        %v2858 = vunpack.c.l.b16 %v611
        %v2859 = vunpack.c.h.b16 %v611
        %v2860 = vunpack.c.l.b16 %v612
        %v2861 = vunpack.c.h.b16 %v612
        %v2862 = vunpack.c.l.b16 %v613
        %v2863 = vunpack.c.h.b16 %v613
        %v2864 = vunpack.c.l.b16 %v614
        %v2865 = vunpack.c.h.b16 %v614
        %v2866 = vunpack.c.l.b16 %v615
        %v2867 = vunpack.c.h.b16 %v615
        %v2868 = vunpack.c.l.b16 %v616
        %v2869 = vunpack.c.h.b16 %v616
        %v2870 = vunpack.c.l.b16 %v617
        %v2871 = vunpack.c.h.b16 %v617
        %v2872 = vunpack.c.l.b16 %v618
        %v2873 = vunpack.c.h.b16 %v618
        %v2874 = vunpack.c.l.b16 %v619
        %v2875 = vunpack.c.h.b16 %v619
        %v2876 = vunpack.c.l.b16 %v620
        %v2877 = vunpack.c.h.b16 %v620
        %v2878 = vunpack.c.l.b16 %v621
        %v2879 = vunpack.c.h.b16 %v621
        %v2880 = vunpack.c.l.b16 %v622
        %v2881 = vunpack.c.h.b16 %v622
        %v2882 = vunpack.c.l.b16 %v623
        %v2883 = vunpack.c.h.b16 %v623
        %v2884 = vunpack.c.l.b16 %v624
        %v2885 = vunpack.c.h.b16 %v624
        %v2886 = vunpack.c.l.b16 %v625
        %v2887 = vunpack.c.h.b16 %v625
        %v2888 = vunpack.c.l.b16 %v626
        %v2889 = vunpack.c.h.b16 %v626
        %v2890 = vunpack.c.l.b16 %v627
        %v2891 = vunpack.c.h.b16 %v627
        %v2892 = vunpack.c.l.b16 %v628
        %v2893 = vunpack.c.h.b16 %v628
        %v2894 = vunpack.c.l.b16 %v629
        %v2895 = vunpack.c.h.b16 %v629
        %v2896 = vunpack.c.l.b16 %v630
        %v2897 = vunpack.c.h.b16 %v630
        %v2898 = vunpack.c.l.b16 %v631
        %v2899 = vunpack.c.h.b16 %v631
        %v2900 = vunpack.c.l.b16 %v632
        %v2901 = vunpack.c.h.b16 %v632
        %v2902 = vunpack.c.l.b16 %v633
        %v2903 = vunpack.c.h.b16 %v633
        %v2904 = vunpack.c.l.b16 %v634
        %v2905 = vunpack.c.h.b16 %v634
        %v2906 = vunpack.c.l.b16 %v635
        %v2907 = vunpack.c.h.b16 %v635
        %v2908 = vunpack.c.l.b16 %v636
        %v2909 = vunpack.c.h.b16 %v636
        %v2910 = vunpack.c.l.b16 %v637
        %v2911 = vunpack.c.h.b16 %v637
        %v2912 = vunpack.c.l.b16 %v638
        %v2913 = vunpack.c.h.b16 %v638
        %v2914 = vunpack.c.l.b16 %v639
        %v2915 = vunpack.c.h.b16 %v639
        %v2916 = vunpack.c.l.b16 %v640
        %v2917 = vunpack.c.h.b16 %v640
        %v2918 = vunpack.c.l.b16 %v641
        %v2919 = vunpack.c.h.b16 %v641
        %v2920 = vunpack.c.l.b16 %v642
        %v2921 = vunpack.c.h.b16 %v642
        %v2922 = vunpack.c.l.b16 %v643
        %v2923 = vunpack.c.h.b16 %v643
        %v2924 = vunpack.c.l.b16 %v644
        %v2925 = vunpack.c.h.b16 %v644
        %v2926 = vunpack.c.l.b16 %v645
        %v2927 = vunpack.c.h.b16 %v645
        %v2928 = vunpack.c.l.b16 %v646
        %v2929 = vunpack.c.h.b16 %v646
        %v2930 = vunpack.c.l.b16 %v647
        %v2931 = vunpack.c.h.b16 %v647
        %v2932 = vunpack.c.l.b16 %v648
        %v2933 = vunpack.c.h.b16 %v648
        %v2934 = vunpack.c.l.b16 %v649
        %v2935 = vunpack.c.h.b16 %v649
        %v2936 = vunpack.c.l.b16 %v650
        %v2937 = vunpack.c.h.b16 %v650
        %v2938 = vunpack.c.l.b16 %v651
        %v2939 = vunpack.c.h.b16 %v651
        %v2940 = vunpack.c.l.b16 %v652
        %v2941 = vunpack.c.h.b16 %v652
        %v2942 = vunpack.c.l.b16 %v653
        %v2943 = vunpack.c.h.b16 %v653
        %v2944 = vunpack.c.l.b16 %v654
        %v2945 = vunpack.c.h.b16 %v654
        %v2946 = vunpack.c.l.b16 %v655
        %v2947 = vunpack.c.h.b16 %v655
        %v2948 = vunpack.c.l.b16 %v656
        %v2949 = vunpack.c.h.b16 %v656
        %v2950 = vunpack.c.l.b16 %v657
        %v2951 = vunpack.c.h.b16 %v657
        %v2952 = vunpack.c.l.b16 %v658
        %v2953 = vunpack.c.h.b16 %v658
        %v2954 = vunpack.c.l.b16 %v659
        %v2955 = vunpack.c.h.b16 %v659
        %v2956 = vunpack.c.l.b16 %v660
        %v2957 = vunpack.c.h.b16 %v660
        %v2958 = vunpack.c.l.b16 %v661
        %v2959 = vunpack.c.h.b16 %v661
        %v2960 = vunpack.c.l.b16 %v662
        %v2961 = vunpack.c.h.b16 %v662
        %v2962 = vunpack.c.l.b16 %v663
        %v2963 = vunpack.c.h.b16 %v663
        %v2964 = vunpack.c.l.b16 %v664
        %v2965 = vunpack.c.h.b16 %v664
        %v2966 = vunpack.c.l.b16 %v665
        %v2967 = vunpack.c.h.b16 %v665
        %v2968 = vunpack.c.l.b16 %v666
        %v2969 = vunpack.c.h.b16 %v666
        %v2970 = vunpack.c.l.b16 %v667
        %v2971 = vunpack.c.h.b16 %v667
        %v2972 = vunpack.c.l.b16 %v668
        %v2973 = vunpack.c.h.b16 %v668
        %v2974 = vunpack.c.l.b16 %v669
        %v2975 = vunpack.c.h.b16 %v669
        %v2976 = vunpack.c.l.b16 %v670
        %v2977 = vunpack.c.h.b16 %v670
        %v2978 = vunpack.c.l.b16 %v671
        %v2979 = vunpack.c.h.b16 %v671
        %v2980 = vunpack.c.l.b16 %v672
        %v2981 = vunpack.c.h.b16 %v672
        %v2982 = vunpack.c.l.b16 %v673
        %v2983 = vunpack.c.h.b16 %v673
        %v2984 = vunpack.c.l.b16 %v674
        %v2985 = vunpack.c.h.b16 %v674
        %v2986 = vunpack.c.l.b16 %v675
        %v2987 = vunpack.c.h.b16 %v675
        %v2988 = vunpack.c.l.b16 %v676
        %v2989 = vunpack.c.h.b16 %v676
        %v2990 = vunpack.c.l.b16 %v677
        %v2991 = vunpack.c.h.b16 %v677
        %v2992 = vunpack.c.l.b16 %v678
        %v2993 = vunpack.c.h.b16 %v678
        %v2994 = vunpack.c.l.b16 %v679
        %v2995 = vunpack.c.h.b16 %v679
        %v2996 = vunpack.c.l.b16 %v680
        %v2997 = vunpack.c.h.b16 %v680
        %v2998 = vunpack.c.l.b16 %v681
        %v2999 = vunpack.c.h.b16 %v681
        %v3000 = vunpack.c.l.b16 %v682
        %v3001 = vunpack.c.h.b16 %v682
        %v3002 = vunpack.c.l.b16 %v683
        %v3003 = vunpack.c.h.b16 %v683
        %v3004 = vunpack.c.l.b16 %v684
        %v3005 = vunpack.c.h.b16 %v684
        %v3006 = vunpack.c.l.b16 %v685
        %v3007 = vunpack.c.h.b16 %v685
        %v3008 = vunpack.c.l.b16 %v686
        %v3009 = vunpack.c.h.b16 %v686
        %v3010 = vunpack.c.l.b16 %v687
        %v3011 = vunpack.c.h.b16 %v687
        %v3012 = vunpack.c.l.b16 %v688
        %v3013 = vunpack.c.h.b16 %v688
        %v3014 = vunpack.c.l.b16 %v689
        %v3015 = vunpack.c.h.b16 %v689
        %v3016 = vunpack.c.l.b16 %v690
        %v3017 = vunpack.c.h.b16 %v690
        %v3018 = vunpack.c.l.b16 %v691
        %v3019 = vunpack.c.h.b16 %v691
        %v3020 = vunpack.c.l.b16 %v692
        %v3021 = vunpack.c.h.b16 %v692
        %v3022 = vunpack.c.l.b16 %v693
        %v3023 = vunpack.c.h.b16 %v693
        %v3024 = vunpack.c.l.b16 %v694
        %v3025 = vunpack.c.h.b16 %v694
        %v3026 = vunpack.c.l.b16 %v695
        %v3027 = vunpack.c.h.b16 %v695
        %v3028 = vunpack.c.l.b16 %v696
        %v3029 = vunpack.c.h.b16 %v696
        %v3030 = vunpack.c.l.b16 %v697
        %v3031 = vunpack.c.h.b16 %v697
        %v3032 = vunpack.c.l.b16 %v698
        %v3033 = vunpack.c.h.b16 %v698
        %v3034 = vunpack.c.l.b16 %v699
        %v3035 = vunpack.c.h.b16 %v699
        %v3036 = vunpack.c.l.b16 %v700
        %v3037 = vunpack.c.h.b16 %v700
        %v3038 = vunpack.c.l.b16 %v701
        %v3039 = vunpack.c.h.b16 %v701
        %v3040 = vunpack.c.l.b16 %v702
        %v3041 = vunpack.c.h.b16 %v702
        %v3042 = vunpack.c.l.b16 %v703
        %v3043 = vunpack.c.h.b16 %v703
        %v3044 = vunpack.c.l.b16 %v704
        %v3045 = vunpack.c.h.b16 %v704
        %v3046 = vunpack.c.l.b16 %v705
        %v3047 = vunpack.c.h.b16 %v705
        %v3048 = vunpack.c.l.b16 %v706
        %v3049 = vunpack.c.h.b16 %v706
        %v3050 = vunpack.c.l.b16 %v707
        %v3051 = vunpack.c.h.b16 %v707
        %v3052 = vunpack.c.l.b16 %v708
        %v3053 = vunpack.c.h.b16 %v708
        %v3054 = vunpack.c.l.b16 %v709
        %v3055 = vunpack.c.h.b16 %v709
        %v3056 = vunpack.c.l.b16 %v710
        %v3057 = vunpack.c.h.b16 %v710
        %v3058 = vunpack.c.l.b16 %v711
        %v3059 = vunpack.c.h.b16 %v711
        %v3060 = vunpack.c.l.b16 %v712
        %v3061 = vunpack.c.h.b16 %v712
        %v3062 = vunpack.c.l.b16 %v713
        %v3063 = vunpack.c.h.b16 %v713
        %v3064 = vunpack.c.l.b16 %v714
        %v3065 = vunpack.c.h.b16 %v714
        %v3066 = vunpack.c.l.b16 %v715
        %v3067 = vunpack.c.h.b16 %v715
        %v3068 = vunpack.c.l.b16 %v716
        %v3069 = vunpack.c.h.b16 %v716
        %v3070 = vunpack.c.l.b16 %v717
        %v3071 = vunpack.c.h.b16 %v717
        %v3072 = vunpack.c.l.b16 %v718
        %v3073 = vunpack.c.h.b16 %v718
        %v3074 = vunpack.c.l.b16 %v719
        %v3075 = vunpack.c.h.b16 %v719
        %v3076 = vunpack.c.l.b16 %v720
        %v3077 = vunpack.c.h.b16 %v720
        %v3078 = vunpack.c.l.b16 %v721
        %v3079 = vunpack.c.h.b16 %v721
        %v3080 = vunpack.c.l.b16 %v722
        %v3081 = vunpack.c.h.b16 %v722
        %v3082 = vunpack.c.l.b16 %v723
        %v3083 = vunpack.c.h.b16 %v723
        %v3084 = vunpack.c.l.b16 %v724
        %v3085 = vunpack.c.h.b16 %v724
        %v3086 = vunpack.c.l.b16 %v725
        %v3087 = vunpack.c.h.b16 %v725
        %v3088 = vunpack.c.l.b16 %v726
        %v3089 = vunpack.c.h.b16 %v726
        %v3090 = vunpack.c.l.b16 %v727
        %v3091 = vunpack.c.h.b16 %v727
        %v3092 = vunpack.c.l.b16 %v728
        %v3093 = vunpack.c.h.b16 %v728
        %v3094 = vunpack.c.l.b16 %v729
        %v3095 = vunpack.c.h.b16 %v729
        %v3096 = vunpack.c.l.b16 %v730
        %v3097 = vunpack.c.h.b16 %v730
        %v3098 = vunpack.c.l.b16 %v731
        %v3099 = vunpack.c.h.b16 %v731
        %v3100 = vunpack.c.l.b16 %v732
        %v3101 = vunpack.c.h.b16 %v732
        %v3102 = vunpack.c.l.b16 %v733
        %v3103 = vunpack.c.h.b16 %v733
        %v3104 = vunpack.c.l.b16 %v734
        %v3105 = vunpack.c.h.b16 %v734
        %v3106 = vunpack.c.l.b16 %v735
        %v3107 = vunpack.c.h.b16 %v735
        %v3108 = vunpack.c.l.b16 %v736
        %v3109 = vunpack.c.h.b16 %v736
        %v3110 = vunpack.c.l.b16 %v737
        %v3111 = vunpack.c.h.b16 %v737
        %v3112 = vunpack.c.l.b16 %v738
        %v3113 = vunpack.c.h.b16 %v738
        %v3114 = vunpack.c.l.b16 %v739
        %v3115 = vunpack.c.h.b16 %v739
        %v3116 = vunpack.c.l.b16 %v740
        %v3117 = vunpack.c.h.b16 %v740
        %v3118 = vunpack.c.l.b16 %v741
        %v3119 = vunpack.c.h.b16 %v741
        %v3120 = vunpack.c.l.b16 %v742
        %v3121 = vunpack.c.h.b16 %v742
        %v3122 = vunpack.c.l.b16 %v743
        %v3123 = vunpack.c.h.b16 %v743
        %v3124 = vunpack.c.l.b16 %v744
        %v3125 = vunpack.c.h.b16 %v744
        %v3126 = vunpack.c.l.b16 %v745
        %v3127 = vunpack.c.h.b16 %v745
        %v3128 = vunpack.c.l.b16 %v746
        %v3129 = vunpack.c.h.b16 %v746
        %v3130 = vunpack.c.l.b16 %v747
        %v3131 = vunpack.c.h.b16 %v747
        %v3132 = vunpack.c.l.b16 %v748
        %v3133 = vunpack.c.h.b16 %v748
        %v3134 = vunpack.c.l.b16 %v749
        %v3135 = vunpack.c.h.b16 %v749
        %v3136 = vunpack.c.l.b16 %v750
        %v3137 = vunpack.c.h.b16 %v750
        %v3138 = vunpack.c.l.b16 %v751
        %v3139 = vunpack.c.h.b16 %v751
        %v3140 = vunpack.c.l.b16 %v752
        %v3141 = vunpack.c.h.b16 %v752
        %v3142 = vunpack.c.l.b16 %v753
        %v3143 = vunpack.c.h.b16 %v753
        %v3144 = vunpack.c.l.b16 %v754
        %v3145 = vunpack.c.h.b16 %v754
        %v3146 = vunpack.c.l.b16 %v755
        %v3147 = vunpack.c.h.b16 %v755
        %v3148 = vunpack.c.l.b16 %v756
        %v3149 = vunpack.c.h.b16 %v756
        %v3150 = vunpack.c.l.b16 %v757
        %v3151 = vunpack.c.h.b16 %v757
        %v3152 = vunpack.c.l.b16 %v758
        %v3153 = vunpack.c.h.b16 %v758
        %v3154 = vunpack.c.l.b16 %v759
        %v3155 = vunpack.c.h.b16 %v759
        %v3156 = vunpack.c.l.b16 %v760
        %v3157 = vunpack.c.h.b16 %v760
        %v3158 = vunpack.c.l.b16 %v761
        %v3159 = vunpack.c.h.b16 %v761
        %v3160 = vunpack.c.l.b16 %v762
        %v3161 = vunpack.c.h.b16 %v762
        %v3162 = vunpack.c.l.b16 %v763
        %v3163 = vunpack.c.h.b16 %v763
        %v3164 = vunpack.c.l.b16 %v764
        %v3165 = vunpack.c.h.b16 %v764
        %v3166 = vunpack.c.l.b16 %v765
        %v3167 = vunpack.c.h.b16 %v765
        %v3168 = vunpack.c.l.b16 %v766
        %v3169 = vunpack.c.h.b16 %v766
        %v3170 = vunpack.c.l.b16 %v767
        %v3171 = vunpack.c.h.b16 %v767
        %v3172 = vunpack.c.l.b16 %v768
        %v3173 = vunpack.c.h.b16 %v768
        %v3174 = vunpack.c.l.b16 %v769
        %v3175 = vunpack.c.h.b16 %v769
        %v3176 = vunpack.c.l.b16 %v770
        %v3177 = vunpack.c.h.b16 %v770
        %v3178 = vunpack.c.l.b16 %v771
        %v3179 = vunpack.c.h.b16 %v771
        %v3180 = vunpack.c.l.b16 %v772
        %v3181 = vunpack.c.h.b16 %v772
        %v3182 = vunpack.c.l.b16 %v773
        %v3183 = vunpack.c.h.b16 %v773
        %v3184 = vunpack.c.l.b16 %v774
        %v3185 = vunpack.c.h.b16 %v774
        %v3186 = vunpack.c.l.b16 %v775
        %v3187 = vunpack.c.h.b16 %v775
        %v3188 = vunpack.c.l.b16 %v776
        %v3189 = vunpack.c.h.b16 %v776
        %v3190 = vunpack.c.l.b16 %v777
        %v3191 = vunpack.c.h.b16 %v777
        %v3192 = vunpack.c.l.b16 %v778
        %v3193 = vunpack.c.h.b16 %v778
        %v3194 = vunpack.c.l.b16 %v779
        %v3195 = vunpack.c.h.b16 %v779
        %v3196 = vunpack.c.l.b16 %v780
        %v3197 = vunpack.c.h.b16 %v780
        %v3198 = vunpack.c.l.b16 %v781
        %v3199 = vunpack.c.h.b16 %v781
        %v3200 = vunpack.c.l.b16 %v782
        %v3201 = vunpack.c.h.b16 %v782
        %v3202 = vunpack.c.l.b16 %v783
        %v3203 = vunpack.c.h.b16 %v783
        %v3204 = vunpack.c.l.b16 %v784
        %v3205 = vunpack.c.h.b16 %v784
        %v3206 = vunpack.c.l.b16 %v785
        %v3207 = vunpack.c.h.b16 %v785
        %v3208 = vunpack.c.l.b16 %v786
        %v3209 = vunpack.c.h.b16 %v786
        %v3210 = vunpack.c.l.b16 %v787
        %v3211 = vunpack.c.h.b16 %v787
        %v3212 = vunpack.c.l.b16 %v788
        %v3213 = vunpack.c.h.b16 %v788
        %v3214 = vunpack.c.l.b16 %v789
        %v3215 = vunpack.c.h.b16 %v789
        %v3216 = vunpack.c.l.b16 %v790
        %v3217 = vunpack.c.h.b16 %v790
        %v3218 = vunpack.c.l.b16 %v791
        %v3219 = vunpack.c.h.b16 %v791
        %v3220 = vunpack.c.l.b16 %v792
        %v3221 = vunpack.c.h.b16 %v792
        %v3222 = vunpack.c.l.b16 %v793
        %v3223 = vunpack.c.h.b16 %v793
        %v3224 = vunpack.c.l.b16 %v794
        %v3225 = vunpack.c.h.b16 %v794
        %v3226 = vunpack.c.l.b16 %v795
        %v3227 = vunpack.c.h.b16 %v795
        %v3228 = vunpack.c.l.b16 %v796
        %v3229 = vunpack.c.h.b16 %v796
        %v3230 = vunpack.c.l.b16 %v797
        %v3231 = vunpack.c.h.b16 %v797
        %v3232 = vunpack.c.l.b16 %v798
        %v3233 = vunpack.c.h.b16 %v798
        %v3234 = vunpack.c.l.b16 %v799
        %v3235 = vunpack.c.h.b16 %v799
        %v3236 = vunpack.c.l.b16 %v800
        %v3237 = vunpack.c.h.b16 %v800
        %v3238 = vunpack.c.l.b16 %v801
        %v3239 = vunpack.c.h.b16 %v801
        %v3240 = vunpack.c.l.b16 %v802
        %v3241 = vunpack.c.h.b16 %v802
        %v3242 = vunpack.c.l.b16 %v803
        %v3243 = vunpack.c.h.b16 %v803
        %v3244 = vunpack.c.l.b16 %v804
        %v3245 = vunpack.c.h.b16 %v804
        %v3246 = vunpack.c.l.b16 %v805
        %v3247 = vunpack.c.h.b16 %v805
        %v3248 = vunpack.c.l.b16 %v806
        %v3249 = vunpack.c.h.b16 %v806
        %v3250 = vunpack.c.l.b16 %v807
        %v3251 = vunpack.c.h.b16 %v807
        %v3252 = vunpack.c.l.b16 %v808
        %v3253 = vunpack.c.h.b16 %v808
        %v3254 = vunpack.c.l.b16 %v809
        %v3255 = vunpack.c.h.b16 %v809
        %v3256 = vunpack.c.l.b16 %v810
        %v3257 = vunpack.c.h.b16 %v810
        %v3258 = vunpack.c.l.b16 %v811
        %v3259 = vunpack.c.h.b16 %v811
        %v3260 = vunpack.c.l.b16 %v812
        %v3261 = vunpack.c.h.b16 %v812
        %v3262 = vunpack.c.l.b16 %v813
        %v3263 = vunpack.c.h.b16 %v813
        %v3264 = vunpack.c.l.b16 %v814
        %v3265 = vunpack.c.h.b16 %v814
        %v3266 = vunpack.c.l.b16 %v815
        %v3267 = vunpack.c.h.b16 %v815
        %v3268 = vunpack.c.l.b16 %v816
        %v3269 = vunpack.c.h.b16 %v816
        %v3270 = vunpack.c.l.b16 %v817
        %v3271 = vunpack.c.h.b16 %v817
        %v3272 = vunpack.c.l.b16 %v818
        %v3273 = vunpack.c.h.b16 %v818
        %v3274 = vunpack.c.l.b16 %v819
        %v3275 = vunpack.c.h.b16 %v819
        %v3276 = vunpack.c.l.b16 %v820
        %v3277 = vunpack.c.h.b16 %v820
        %v3278 = vunpack.c.l.b16 %v821
        %v3279 = vunpack.c.h.b16 %v821
        %v3280 = vunpack.c.l.b16 %v822
        %v3281 = vunpack.c.h.b16 %v822
        %v3282 = vunpack.c.l.b16 %v823
        %v3283 = vunpack.c.h.b16 %v823
        %v3284 = vunpack.c.l.b16 %v824
        %v3285 = vunpack.c.h.b16 %v824
        %v3286 = vunpack.c.l.b16 %v825
        %v3287 = vunpack.c.h.b16 %v825
        %v3288 = vunpack.c.l.b16 %v826
        %v3289 = vunpack.c.h.b16 %v826
        %v3290 = vunpack.c.l.b16 %v827
        %v3291 = vunpack.c.h.b16 %v827
        %v3292 = vunpack.c.l.b16 %v828
        %v3293 = vunpack.c.h.b16 %v828
        %v3294 = vunpack.c.l.b16 %v829
        %v3295 = vunpack.c.h.b16 %v829
        %v3296 = vunpack.c.l.b16 %v830
        %v3297 = vunpack.c.h.b16 %v830
        %v3298 = vunpack.c.l.b16 %v831
        %v3299 = vunpack.c.h.b16 %v831
        %v3300 = vunpack.c.l.b16 %v832
        %v3301 = vunpack.c.h.b16 %v832
        %v3302 = vunpack.c.l.b16 %v833
        %v3303 = vunpack.c.h.b16 %v833
        %v3304 = vunpack.c.l.b16 %v834
        %v3305 = vunpack.c.h.b16 %v834
        %v3306 = vunpack.c.l.b16 %v835
        %v3307 = vunpack.c.h.b16 %v835
        %v3308 = vunpack.c.l.b16 %v836
        %v3309 = vunpack.c.h.b16 %v836
        %v3310 = vunpack.c.l.b16 %v837
        %v3311 = vunpack.c.h.b16 %v837
        %v3312 = vunpack.c.l.b16 %v838
        %v3313 = vunpack.c.h.b16 %v838
        %v3314 = vunpack.c.l.b16 %v839
        %v3315 = vunpack.c.h.b16 %v839
        %v3316 = vunpack.c.l.b16 %v840
        %v3317 = vunpack.c.h.b16 %v840
        %v3318 = vunpack.c.l.b16 %v841
        %v3319 = vunpack.c.h.b16 %v841
        %v3320 = vunpack.c.l.b16 %v842
        %v3321 = vunpack.c.h.b16 %v842
        %v3322 = vunpack.c.l.b16 %v843
        %v3323 = vunpack.c.h.b16 %v843
        %v3324 = vunpack.c.l.b16 %v844
        %v3325 = vunpack.c.h.b16 %v844
        %v3326 = vunpack.c.l.b16 %v845
        %v3327 = vunpack.c.h.b16 %v845
        %v3328 = vunpack.c.l.b16 %v846
        %v3329 = vunpack.c.h.b16 %v846
        %v3330 = vunpack.c.l.b16 %v847
        %v3331 = vunpack.c.h.b16 %v847
        %v3332 = vunpack.c.l.b16 %v848
        %v3333 = vunpack.c.h.b16 %v848
        %v3334 = vunpack.c.l.b16 %v849
        %v3335 = vunpack.c.h.b16 %v849
        %v3336 = vunpack.c.l.b16 %v850
        %v3337 = vunpack.c.h.b16 %v850
        %v3338 = vunpack.c.l.b16 %v851
        %v3339 = vunpack.c.h.b16 %v851
        %v3340 = vunpack.c.l.b16 %v852
        %v3341 = vunpack.c.h.b16 %v852
        %v3342 = vunpack.c.l.b16 %v853
        %v3343 = vunpack.c.h.b16 %v853
        %v3344 = vunpack.c.l.b16 %v854
        %v3345 = vunpack.c.h.b16 %v854
        %v3346 = vunpack.c.l.b16 %v855
        %v3347 = vunpack.c.h.b16 %v855
        %v3348 = vunpack.c.l.b16 %v856
        %v3349 = vunpack.c.h.b16 %v856
        %v3350 = vunpack.c.l.b16 %v857
        %v3351 = vunpack.c.h.b16 %v857
        %v3352 = vunpack.c.l.b16 %v858
        %v3353 = vunpack.c.h.b16 %v858
        %v3354 = vunpack.c.l.b16 %v859
        %v3355 = vunpack.c.h.b16 %v859
        %v3356 = vunpack.c.l.b16 %v860
        %v3357 = vunpack.c.h.b16 %v860
        %v3358 = vunpack.c.l.b16 %v861
        %v3359 = vunpack.c.h.b16 %v861
        %v3360 = vunpack.c.l.b16 %v862
        %v3361 = vunpack.c.h.b16 %v862
        %v3362 = vunpack.c.l.b16 %v863
        %v3363 = vunpack.c.h.b16 %v863
        %v3364 = vunpack.c.l.b16 %v864
        %v3365 = vunpack.c.h.b16 %v864
        %v3366 = vunpack.c.l.b16 %v865
        %v3367 = vunpack.c.h.b16 %v865
        %v3368 = vunpack.c.l.b16 %v866
        %v3369 = vunpack.c.h.b16 %v866
        %v3370 = vunpack.c.l.b16 %v867
        %v3371 = vunpack.c.h.b16 %v867
        %v3372 = vunpack.c.l.b16 %v868
        %v3373 = vunpack.c.h.b16 %v868
        %v3374 = vunpack.c.l.b16 %v869
        %v3375 = vunpack.c.h.b16 %v869
        %v3376 = vunpack.c.l.b16 %v870
        %v3377 = vunpack.c.h.b16 %v870
        %v3378 = vunpack.c.l.b16 %v871
        %v3379 = vunpack.c.h.b16 %v871
        %v3380 = vunpack.c.l.b16 %v872
        %v3381 = vunpack.c.h.b16 %v872
        %v3382 = vunpack.c.l.b16 %v873
        %v3383 = vunpack.c.h.b16 %v873
        %v3384 = vunpack.c.l.b16 %v874
        %v3385 = vunpack.c.h.b16 %v874
        %v3386 = vunpack.c.l.b16 %v875
        %v3387 = vunpack.c.h.b16 %v875
        %v3388 = vunpack.c.l.b16 %v876
        %v3389 = vunpack.c.h.b16 %v876
        %v3390 = vunpack.c.l.b16 %v877
        %v3391 = vunpack.c.h.b16 %v877
        %v3392 = vunpack.c.l.b16 %v878
        %v3393 = vunpack.c.h.b16 %v878
        %v3394 = vunpack.c.l.b16 %v879
        %v3395 = vunpack.c.h.b16 %v879
        %v3396 = vunpack.c.l.b16 %v880
        %v3397 = vunpack.c.h.b16 %v880
        %v3398 = vunpack.c.l.b16 %v881
        %v3399 = vunpack.c.h.b16 %v881
        %v3400 = vunpack.c.l.b16 %v882
        %v3401 = vunpack.c.h.b16 %v882
        %v3402 = vunpack.c.l.b16 %v883
        %v3403 = vunpack.c.h.b16 %v883
        %v3404 = vunpack.c.l.b16 %v884
        %v3405 = vunpack.c.h.b16 %v884
        %v3406 = vunpack.c.l.b16 %v885
        %v3407 = vunpack.c.h.b16 %v885
        %v3408 = vunpack.c.l.b16 %v886
        %v3409 = vunpack.c.h.b16 %v886
        %v3410 = vunpack.c.l.b16 %v887
        %v3411 = vunpack.c.h.b16 %v887
        %v3412 = vunpack.c.l.b16 %v888
        %v3413 = vunpack.c.h.b16 %v888
        %v3414 = vunpack.c.l.b16 %v889
        %v3415 = vunpack.c.h.b16 %v889
        %v3416 = vunpack.c.l.b16 %v890
        %v3417 = vunpack.c.h.b16 %v890
        %v3418 = vunpack.c.l.b16 %v891
        %v3419 = vunpack.c.h.b16 %v891
        %v3420 = vunpack.c.l.b16 %v892
        %v3421 = vunpack.c.h.b16 %v892
        %v3422 = vunpack.c.l.b16 %v893
        %v3423 = vunpack.c.h.b16 %v893
        %v3424 = vunpack.c.l.b16 %v894
        %v3425 = vunpack.c.h.b16 %v894
        %v3426 = vunpack.c.l.b16 %v895
        %v3427 = vunpack.c.h.b16 %v895
        %v3428 = vunpack.c.l.b16 %v896
        %v3429 = vunpack.c.h.b16 %v896
        %v3430 = vunpack.c.l.b16 %v897
        %v3431 = vunpack.c.h.b16 %v897
        %v3432 = vunpack.c.l.b16 %v898
        %v3433 = vunpack.c.h.b16 %v898
        %v3434 = vunpack.c.l.b16 %v899
        %v3435 = vunpack.c.h.b16 %v899
        %v3436 = vunpack.c.l.b16 %v900
        %v3437 = vunpack.c.h.b16 %v900
        %v3438 = vunpack.c.l.b16 %v901
        %v3439 = vunpack.c.h.b16 %v901
        %v3440 = vunpack.c.l.b16 %v902
        %v3441 = vunpack.c.h.b16 %v902
        %v3442 = vunpack.c.l.b16 %v903
        %v3443 = vunpack.c.h.b16 %v903
        %v3444 = vunpack.c.l.b16 %v904
        %v3445 = vunpack.c.h.b16 %v904
        %v3446 = vunpack.c.l.b16 %v905
        %v3447 = vunpack.c.h.b16 %v905
        %v3448 = vunpack.c.l.b16 %v906
        %v3449 = vunpack.c.h.b16 %v906
        %v3450 = vunpack.c.l.b16 %v907
        %v3451 = vunpack.c.h.b16 %v907
        %v3452 = vunpack.c.l.b16 %v908
        %v3453 = vunpack.c.h.b16 %v908
        %v3454 = vunpack.c.l.b16 %v909
        %v3455 = vunpack.c.h.b16 %v909
        %v3456 = vunpack.c.l.b16 %v910
        %v3457 = vunpack.c.h.b16 %v910
        %v3458 = vunpack.c.l.b16 %v911
        %v3459 = vunpack.c.h.b16 %v911
        %v3460 = vunpack.c.l.b16 %v912
        %v3461 = vunpack.c.h.b16 %v912
        %v3462 = vunpack.c.l.b16 %v913
        %v3463 = vunpack.c.h.b16 %v913
        %v3464 = vunpack.c.l.b16 %v914
        %v3465 = vunpack.c.h.b16 %v914
        %v3466 = vunpack.c.l.b16 %v915
        %v3467 = vunpack.c.h.b16 %v915
        %v3468 = vunpack.c.l.b16 %v916
        %v3469 = vunpack.c.h.b16 %v916
        %v3470 = vunpack.c.l.b16 %v917
        %v3471 = vunpack.c.h.b16 %v917
        %v3472 = vunpack.c.l.b16 %v918
        %v3473 = vunpack.c.h.b16 %v918
        %v3474 = vunpack.c.l.b16 %v919
        %v3475 = vunpack.c.h.b16 %v919
        %v3476 = vunpack.c.l.b16 %v920
        %v3477 = vunpack.c.h.b16 %v920
        %v3478 = vunpack.c.l.b16 %v921
        %v3479 = vunpack.c.h.b16 %v921
        %v3480 = vunpack.c.l.b16 %v922
        %v3481 = vunpack.c.h.b16 %v922
        %v3482 = vunpack.c.l.b16 %v923
        %v3483 = vunpack.c.h.b16 %v923
        %v3484 = vunpack.c.l.b16 %v924
        %v3485 = vunpack.c.h.b16 %v924
        %v3486 = vunpack.c.l.b16 %v925
        %v3487 = vunpack.c.h.b16 %v925
        %v3488 = vunpack.c.l.b16 %v926
        %v3489 = vunpack.c.h.b16 %v926
        %v3490 = vunpack.c.l.b16 %v927
        %v3491 = vunpack.c.h.b16 %v927
        %v3492 = vunpack.c.l.b16 %v928
        %v3493 = vunpack.c.h.b16 %v928
        %v3494 = vunpack.c.l.b16 %v929
        %v3495 = vunpack.c.h.b16 %v929
        %v3496 = vunpack.c.l.b16 %v930
        %v3497 = vunpack.c.h.b16 %v930
        %v3498 = vunpack.c.l.b16 %v931
        %v3499 = vunpack.c.h.b16 %v931
        %v3500 = vunpack.c.l.b16 %v932
        %v3501 = vunpack.c.h.b16 %v932
        %v3502 = vunpack.c.l.b16 %v933
        %v3503 = vunpack.c.h.b16 %v933
        %v3504 = vunpack.c.l.b16 %v934
        %v3505 = vunpack.c.h.b16 %v934
        %v3506 = vunpack.c.l.b16 %v935
        %v3507 = vunpack.c.h.b16 %v935
        %v3508 = vunpack.c.l.b16 %v936
        %v3509 = vunpack.c.h.b16 %v936
        %v3510 = vunpack.c.l.b16 %v937
        %v3511 = vunpack.c.h.b16 %v937
        %v3512 = vpack.c.b16 %v2192, %v2104
        %v3513 = vpack.c.b16 %v2193, %v2105
        %v3514 = vpack.c.b16 %v2194, %v2106
        %v3515 = vpack.c.b16 %v2195, %v2107
        %v3516 = vpack.c.b16 %v2196, %v2108
        %v3517 = vpack.c.b16 %v2197, %v2109
        %v3518 = vpack.c.b16 %v2198, %v2110
        %v3519 = vpack.c.b16 %v2199, %v2111
        %v3520 = vpack.c.b16 %v2200, %v2112
        %v3521 = vpack.c.b16 %v2201, %v2113
        %v3522 = vpack.c.b16 %v2202, %v2114
        %v3523 = vpack.c.b16 %v2203, %v2115
        %v3524 = vpack.c.b16 %v2204, %v2116
        %v3525 = vpack.c.b16 %v2205, %v2117
        %v3526 = vpack.c.b16 %v2206, %v2118
        %v3527 = vpack.c.b16 %v2207, %v2119
        %v3528 = vpack.c.b16 %v2208, %v2120
        %v3529 = vpack.c.b16 %v2209, %v2121
        %v3530 = vpack.c.b16 %v2210, %v2122
        %v3531 = vpack.c.b16 %v2211, %v2123
        %v3532 = vpack.c.b16 %v2212, %v2124
        %v3533 = vpack.c.b16 %v2213, %v2125
        %v3534 = vpack.c.b16 %v2214, %v2126
        %v3535 = vpack.c.b16 %v2215, %v2127
        %v3536 = vpack.c.b16 %v2216, %v2128
        %v3537 = vpack.c.b16 %v2217, %v2129
        %v3538 = vpack.c.b16 %v2218, %v2130
        %v3539 = vpack.c.b16 %v2219, %v2131
        %v3540 = vpack.c.b16 %v2220, %v2132
        %v3541 = vpack.c.b16 %v2221, %v2133
        %v3542 = vpack.c.b16 %v2222, %v2134
        %v3543 = vpack.c.b16 %v2223, %v2135
        %v3544 = vpack.c.b16 %v2224, %v2136
        %v3545 = vpack.c.b16 %v2225, %v2137
        %v3546 = vpack.c.b16 %v2226, %v2138
        %v3547 = vpack.c.b16 %v2227, %v2139
        %v3548 = vpack.c.b16 %v2228, %v2140
        %v3549 = vpack.c.b16 %v2229, %v2141
        %v3550 = vpack.c.b16 %v2230, %v2142
        %v3551 = vpack.c.b16 %v2231, %v2143
        %v3552 = vpack.c.b16 %v2232, %v2144
        %v3553 = vpack.c.b16 %v2233, %v2145
        %v3554 = vpack.c.b16 %v2234, %v2146
        %v3555 = vpack.c.b16 %v2235, %v2147
        %v3556 = vpack.c.b16 %v2236, %v2148
        %v3557 = vpack.c.b16 %v2237, %v2149
        %v3558 = vpack.c.b16 %v2238, %v2150
        %v3559 = vpack.c.b16 %v2239, %v2151
        %v3560 = vpack.c.b16 %v2240, %v2152
        %v3561 = vpack.c.b16 %v2241, %v2153
        %v3562 = vpack.c.b16 %v2242, %v2154
        %v3563 = vpack.c.b16 %v2243, %v2155
        %v3564 = vpack.c.b16 %v2244, %v2156
        %v3565 = vpack.c.b16 %v2245, %v2157
        %v3566 = vpack.c.b16 %v2246, %v2158
        %v3567 = vpack.c.b16 %v2247, %v2159
        %v3568 = vpack.c.b16 %v2248, %v2160
        %v3569 = vpack.c.b16 %v2249, %v2161
        %v3570 = vpack.c.b16 %v2250, %v2162
        %v3571 = vpack.c.b16 %v2251, %v2163
        %v3572 = vpack.c.b16 %v2252, %v2164
        %v3573 = vpack.c.b16 %v2253, %v2165
        %v3574 = vpack.c.b16 %v2254, %v2166
        %v3575 = vpack.c.b16 %v2255, %v2167
        %v3576 = vpack.c.b16 %v2256, %v2168
        %v3577 = vpack.c.b16 %v2257, %v2169
        %v3578 = vpack.c.b16 %v2258, %v2170
        %v3579 = vpack.c.b16 %v2259, %v2171
        %v3580 = vpack.c.b16 %v2260, %v2172
        %v3581 = vpack.c.b16 %v2261, %v2173
        %v3582 = vpack.c.b16 %v2262, %v2174
        %v3583 = vpack.c.b16 %v2263, %v2175
        %v3584 = vpack.c.b16 %v2264, %v2176
        %v3585 = vpack.c.b16 %v2265, %v2177
        %v3586 = vpack.c.b16 %v2266, %v2178
        %v3587 = vpack.c.b16 %v2267, %v2179
        %v3588 = vpack.c.b16 %v2268, %v2180
        %v3589 = vpack.c.b16 %v2269, %v2181
        %v3590 = vpack.c.b16 %v2270, %v2182
        %v3591 = vpack.c.b16 %v2271, %v2183
        %v3592 = vpack.c.b16 %v2272, %v2184
        %v3593 = vpack.c.b16 %v2273, %v2185
        %v3594 = vpack.c.b16 %v2274, %v2186
        %v3595 = vpack.c.b16 %v2275, %v2187
        %v3596 = vpack.c.b16 %v2276, %v2188
        %v3597 = vpack.c.b16 %v2277, %v2189
        %v3598 = vpack.c.b16 %v2278, %v2190
        %v3599 = vpack.c.b16 %v2279, %v2191
        %v3600 = vpack.c.b16 %v2368, %v2280
        %v3601 = vpack.c.b16 %v2369, %v2281
        %v3602 = vpack.c.b16 %v2370, %v2282
        %v3603 = vpack.c.b16 %v2371, %v2283
        %v3604 = vpack.c.b16 %v2372, %v2284
        %v3605 = vpack.c.b16 %v2373, %v2285
        %v3606 = vpack.c.b16 %v2374, %v2286
        %v3607 = vpack.c.b16 %v2375, %v2287
        %v3608 = vpack.c.b16 %v2376, %v2288
        %v3609 = vpack.c.b16 %v2377, %v2289
        %v3610 = vpack.c.b16 %v2378, %v2290
        %v3611 = vpack.c.b16 %v2379, %v2291
        %v3612 = vpack.c.b16 %v2380, %v2292
        %v3613 = vpack.c.b16 %v2381, %v2293
        %v3614 = vpack.c.b16 %v2382, %v2294
        %v3615 = vpack.c.b16 %v2383, %v2295
        %v3616 = vpack.c.b16 %v2384, %v2296
        %v3617 = vpack.c.b16 %v2385, %v2297
        %v3618 = vpack.c.b16 %v2386, %v2298
        %v3619 = vpack.c.b16 %v2387, %v2299
        %v3620 = vpack.c.b16 %v2388, %v2300
        %v3621 = vpack.c.b16 %v2389, %v2301
        %v3622 = vpack.c.b16 %v2390, %v2302
        %v3623 = vpack.c.b16 %v2391, %v2303
        %v3624 = vpack.c.b16 %v2392, %v2304
        %v3625 = vpack.c.b16 %v2393, %v2305
        %v3626 = vpack.c.b16 %v2394, %v2306
        %v3627 = vpack.c.b16 %v2395, %v2307
        %v3628 = vpack.c.b16 %v2396, %v2308
        %v3629 = vpack.c.b16 %v2397, %v2309
        %v3630 = vpack.c.b16 %v2398, %v2310
        %v3631 = vpack.c.b16 %v2399, %v2311
        %v3632 = vpack.c.b16 %v2400, %v2312
        %v3633 = vpack.c.b16 %v2401, %v2313
        %v3634 = vpack.c.b16 %v2402, %v2314
        %v3635 = vpack.c.b16 %v2403, %v2315
        %v3636 = vpack.c.b16 %v2404, %v2316
        %v3637 = vpack.c.b16 %v2405, %v2317
        %v3638 = vpack.c.b16 %v2406, %v2318
        %v3639 = vpack.c.b16 %v2407, %v2319
        %v3640 = vpack.c.b16 %v2408, %v2320
        %v3641 = vpack.c.b16 %v2409, %v2321
        %v3642 = vpack.c.b16 %v2410, %v2322
        %v3643 = vpack.c.b16 %v2411, %v2323
        %v3644 = vpack.c.b16 %v2412, %v2324
        %v3645 = vpack.c.b16 %v2413, %v2325
        %v3646 = vpack.c.b16 %v2414, %v2326
        %v3647 = vpack.c.b16 %v2415, %v2327
        %v3648 = vpack.c.b16 %v2416, %v2328
        %v3649 = vpack.c.b16 %v2417, %v2329
        %v3650 = vpack.c.b16 %v2418, %v2330
        %v3651 = vpack.c.b16 %v2419, %v2331
        %v3652 = vpack.c.b16 %v2420, %v2332
        %v3653 = vpack.c.b16 %v2421, %v2333
        %v3654 = vpack.c.b16 %v2422, %v2334
        %v3655 = vpack.c.b16 %v2423, %v2335
        %v3656 = vpack.c.b16 %v2424, %v2336
        %v3657 = vpack.c.b16 %v2425, %v2337
        %v3658 = vpack.c.b16 %v2426, %v2338
        %v3659 = vpack.c.b16 %v2427, %v2339
        %v3660 = vpack.c.b16 %v2428, %v2340
        %v3661 = vpack.c.b16 %v2429, %v2341
        %v3662 = vpack.c.b16 %v2430, %v2342
        %v3663 = vpack.c.b16 %v2431, %v2343
        %v3664 = vpack.c.b16 %v2432, %v2344
        %v3665 = vpack.c.b16 %v2433, %v2345
        %v3666 = vpack.c.b16 %v2434, %v2346
        %v3667 = vpack.c.b16 %v2435, %v2347
        %v3668 = vpack.c.b16 %v2436, %v2348
        %v3669 = vpack.c.b16 %v2437, %v2349
        %v3670 = vpack.c.b16 %v2438, %v2350
        %v3671 = vpack.c.b16 %v2439, %v2351
        %v3672 = vpack.c.b16 %v2440, %v2352
        %v3673 = vpack.c.b16 %v2441, %v2353
        %v3674 = vpack.c.b16 %v2442, %v2354
        %v3675 = vpack.c.b16 %v2443, %v2355
        %v3676 = vpack.c.b16 %v2444, %v2356
        %v3677 = vpack.c.b16 %v2445, %v2357
        %v3678 = vpack.c.b16 %v2446, %v2358
        %v3679 = vpack.c.b16 %v2447, %v2359
        %v3680 = vpack.c.b16 %v2448, %v2360
        %v3681 = vpack.c.b16 %v2449, %v2361
        %v3682 = vpack.c.b16 %v2450, %v2362
        %v3683 = vpack.c.b16 %v2451, %v2363
        %v3684 = vpack.c.b16 %v2452, %v2364
        %v3685 = vpack.c.b16 %v2453, %v2365
        %v3686 = vpack.c.b16 %v2454, %v2366
        %v3687 = vpack.c.b16 %v2455, %v2367
        %v3688 = vpack.c.b16 %v2544, %v2456
        %v3689 = vpack.c.b16 %v2545, %v2457
        %v3690 = vpack.c.b16 %v2546, %v2458
        %v3691 = vpack.c.b16 %v2547, %v2459
        %v3692 = vpack.c.b16 %v2548, %v2460
        %v3693 = vpack.c.b16 %v2549, %v2461
        %v3694 = vpack.c.b16 %v2550, %v2462
        %v3695 = vpack.c.b16 %v2551, %v2463
        %v3696 = vpack.c.b16 %v2552, %v2464
        %v3697 = vpack.c.b16 %v2553, %v2465
        %v3698 = vpack.c.b16 %v2554, %v2466
        %v3699 = vpack.c.b16 %v2555, %v2467
        %v3700 = vpack.c.b16 %v2556, %v2468
        %v3701 = vpack.c.b16 %v2557, %v2469
        %v3702 = vpack.c.b16 %v2558, %v2470
        %v3703 = vpack.c.b16 %v2559, %v2471
        %v3704 = vpack.c.b16 %v2560, %v2472
        %v3705 = vpack.c.b16 %v2561, %v2473
        %v3706 = vpack.c.b16 %v2562, %v2474
        %v3707 = vpack.c.b16 %v2563, %v2475
        %v3708 = vpack.c.b16 %v2564, %v2476
        %v3709 = vpack.c.b16 %v2565, %v2477
        %v3710 = vpack.c.b16 %v2566, %v2478
        %v3711 = vpack.c.b16 %v2567, %v2479
        %v3712 = vpack.c.b16 %v2568, %v2480
        %v3713 = vpack.c.b16 %v2569, %v2481
        %v3714 = vpack.c.b16 %v2570, %v2482
        %v3715 = vpack.c.b16 %v2571, %v2483
        %v3716 = vpack.c.b16 %v2572, %v2484
        %v3717 = vpack.c.b16 %v2573, %v2485
        %v3718 = vpack.c.b16 %v2574, %v2486
        %v3719 = vpack.c.b16 %v2575, %v2487
        %v3720 = vpack.c.b16 %v2576, %v2488
        %v3721 = vpack.c.b16 %v2577, %v2489
        %v3722 = vpack.c.b16 %v2578, %v2490
        %v3723 = vpack.c.b16 %v2579, %v2491
        %v3724 = vpack.c.b16 %v2580, %v2492
        %v3725 = vpack.c.b16 %v2581, %v2493
        %v3726 = vpack.c.b16 %v2582, %v2494
        %v3727 = vpack.c.b16 %v2583, %v2495
        %v3728 = vpack.c.b16 %v2584, %v2496
        %v3729 = vpack.c.b16 %v2585, %v2497
        %v3730 = vpack.c.b16 %v2586, %v2498
        %v3731 = vpack.c.b16 %v2587, %v2499
        %v3732 = vpack.c.b16 %v2588, %v2500
        %v3733 = vpack.c.b16 %v2589, %v2501
        %v3734 = vpack.c.b16 %v2590, %v2502
        %v3735 = vpack.c.b16 %v2591, %v2503
        %v3736 = vpack.c.b16 %v2592, %v2504
        %v3737 = vpack.c.b16 %v2593, %v2505
        %v3738 = vpack.c.b16 %v2594, %v2506
        %v3739 = vpack.c.b16 %v2595, %v2507
        %v3740 = vpack.c.b16 %v2596, %v2508
        %v3741 = vpack.c.b16 %v2597, %v2509
        %v3742 = vpack.c.b16 %v2598, %v2510
        %v3743 = vpack.c.b16 %v2599, %v2511
        %v3744 = vpack.c.b16 %v2600, %v2512
        %v3745 = vpack.c.b16 %v2601, %v2513
        %v3746 = vpack.c.b16 %v2602, %v2514
        %v3747 = vpack.c.b16 %v2603, %v2515
        %v3748 = vpack.c.b16 %v2604, %v2516
        %v3749 = vpack.c.b16 %v2605, %v2517
        %v3750 = vpack.c.b16 %v2606, %v2518
        %v3751 = vpack.c.b16 %v2607, %v2519
        %v3752 = vpack.c.b16 %v2608, %v2520
        %v3753 = vpack.c.b16 %v2609, %v2521
        %v3754 = vpack.c.b16 %v2610, %v2522
        %v3755 = vpack.c.b16 %v2611, %v2523
        %v3756 = vpack.c.b16 %v2612, %v2524
        %v3757 = vpack.c.b16 %v2613, %v2525
        %v3758 = vpack.c.b16 %v2614, %v2526
        %v3759 = vpack.c.b16 %v2615, %v2527
        %v3760 = vpack.c.b16 %v2616, %v2528
        %v3761 = vpack.c.b16 %v2617, %v2529
        %v3762 = vpack.c.b16 %v2618, %v2530
        %v3763 = vpack.c.b16 %v2619, %v2531
        %v3764 = vpack.c.b16 %v2620, %v2532
        %v3765 = vpack.c.b16 %v2621, %v2533
        %v3766 = vpack.c.b16 %v2622, %v2534
        %v3767 = vpack.c.b16 %v2623, %v2535
        %v3768 = vpack.c.b16 %v2624, %v2536
        %v3769 = vpack.c.b16 %v2625, %v2537
        %v3770 = vpack.c.b16 %v2626, %v2538
        %v3771 = vpack.c.b16 %v2627, %v2539
        %v3772 = vpack.c.b16 %v2628, %v2540
        %v3773 = vpack.c.b16 %v2629, %v2541
        %v3774 = vpack.c.b16 %v2630, %v2542
        %v3775 = vpack.c.b16 %v2631, %v2543
        %v3776 = vpack.c.b16 %v2720, %v2632
        %v3777 = vpack.c.b16 %v2721, %v2633
        %v3778 = vpack.c.b16 %v2722, %v2634
        %v3779 = vpack.c.b16 %v2723, %v2635
        %v3780 = vpack.c.b16 %v2724, %v2636
        %v3781 = vpack.c.b16 %v2725, %v2637
        %v3782 = vpack.c.b16 %v2726, %v2638
        %v3783 = vpack.c.b16 %v2727, %v2639
        %v3784 = vpack.c.b16 %v2728, %v2640
        %v3785 = vpack.c.b16 %v2729, %v2641
        %v3786 = vpack.c.b16 %v2730, %v2642
        %v3787 = vpack.c.b16 %v2731, %v2643
        %v3788 = vpack.c.b16 %v2732, %v2644
        %v3789 = vpack.c.b16 %v2733, %v2645
        %v3790 = vpack.c.b16 %v2734, %v2646
        %v3791 = vpack.c.b16 %v2735, %v2647
        %v3792 = vpack.c.b16 %v2736, %v2648
        %v3793 = vpack.c.b16 %v2737, %v2649
        %v3794 = vpack.c.b16 %v2738, %v2650
        %v3795 = vpack.c.b16 %v2739, %v2651
        %v3796 = vpack.c.b16 %v2740, %v2652
        %v3797 = vpack.c.b16 %v2741, %v2653
        %v3798 = vpack.c.b16 %v2742, %v2654
        %v3799 = vpack.c.b16 %v2743, %v2655
        %v3800 = vpack.c.b16 %v2744, %v2656
        %v3801 = vpack.c.b16 %v2745, %v2657
        %v3802 = vpack.c.b16 %v2746, %v2658
        %v3803 = vpack.c.b16 %v2747, %v2659
        %v3804 = vpack.c.b16 %v2748, %v2660
        %v3805 = vpack.c.b16 %v2749, %v2661
        %v3806 = vpack.c.b16 %v2750, %v2662
        %v3807 = vpack.c.b16 %v2751, %v2663
        %v3808 = vpack.c.b16 %v2752, %v2664
        %v3809 = vpack.c.b16 %v2753, %v2665
        %v3810 = vpack.c.b16 %v2754, %v2666
        %v3811 = vpack.c.b16 %v2755, %v2667
        %v3812 = vpack.c.b16 %v2756, %v2668
        %v3813 = vpack.c.b16 %v2757, %v2669
        %v3814 = vpack.c.b16 %v2758, %v2670
        %v3815 = vpack.c.b16 %v2759, %v2671
        %v3816 = vpack.c.b16 %v2760, %v2672
        %v3817 = vpack.c.b16 %v2761, %v2673
        %v3818 = vpack.c.b16 %v2762, %v2674
        %v3819 = vpack.c.b16 %v2763, %v2675
        %v3820 = vpack.c.b16 %v2764, %v2676
        %v3821 = vpack.c.b16 %v2765, %v2677
        %v3822 = vpack.c.b16 %v2766, %v2678
        %v3823 = vpack.c.b16 %v2767, %v2679
        %v3824 = vpack.c.b16 %v2768, %v2680
        %v3825 = vpack.c.b16 %v2769, %v2681
        %v3826 = vpack.c.b16 %v2770, %v2682
        %v3827 = vpack.c.b16 %v2771, %v2683
        %v3828 = vpack.c.b16 %v2772, %v2684
        %v3829 = vpack.c.b16 %v2773, %v2685
        %v3830 = vpack.c.b16 %v2774, %v2686
        %v3831 = vpack.c.b16 %v2775, %v2687
        %v3832 = vpack.c.b16 %v2776, %v2688
        %v3833 = vpack.c.b16 %v2777, %v2689
        %v3834 = vpack.c.b16 %v2778, %v2690
        %v3835 = vpack.c.b16 %v2779, %v2691
        %v3836 = vpack.c.b16 %v2780, %v2692
        %v3837 = vpack.c.b16 %v2781, %v2693
        %v3838 = vpack.c.b16 %v2782, %v2694
        %v3839 = vpack.c.b16 %v2783, %v2695
        %v3840 = vpack.c.b16 %v2784, %v2696
        %v3841 = vpack.c.b16 %v2785, %v2697
        %v3842 = vpack.c.b16 %v2786, %v2698
        %v3843 = vpack.c.b16 %v2787, %v2699
        %v3844 = vpack.c.b16 %v2788, %v2700
        %v3845 = vpack.c.b16 %v2789, %v2701
        %v3846 = vpack.c.b16 %v2790, %v2702
        %v3847 = vpack.c.b16 %v2791, %v2703
        %v3848 = vpack.c.b16 %v2792, %v2704
        %v3849 = vpack.c.b16 %v2793, %v2705
        %v3850 = vpack.c.b16 %v2794, %v2706
        %v3851 = vpack.c.b16 %v2795, %v2707
        %v3852 = vpack.c.b16 %v2796, %v2708
        %v3853 = vpack.c.b16 %v2797, %v2709
        %v3854 = vpack.c.b16 %v2798, %v2710
        %v3855 = vpack.c.b16 %v2799, %v2711
        %v3856 = vpack.c.b16 %v2800, %v2712
        %v3857 = vpack.c.b16 %v2801, %v2713
        %v3858 = vpack.c.b16 %v2802, %v2714
        %v3859 = vpack.c.b16 %v2803, %v2715
        %v3860 = vpack.c.b16 %v2804, %v2716
        %v3861 = vpack.c.b16 %v2805, %v2717
        %v3862 = vpack.c.b16 %v2806, %v2718
        %v3863 = vpack.c.b16 %v2807, %v2719
        %v3864 = vpack.c.b16 %v2896, %v2808
        %v3865 = vpack.c.b16 %v2897, %v2809
        %v3866 = vpack.c.b16 %v2898, %v2810
        %v3867 = vpack.c.b16 %v2899, %v2811
        %v3868 = vpack.c.b16 %v2900, %v2812
        %v3869 = vpack.c.b16 %v2901, %v2813
        %v3870 = vpack.c.b16 %v2902, %v2814
        %v3871 = vpack.c.b16 %v2903, %v2815
        %v3872 = vpack.c.b16 %v2904, %v2816
        %v3873 = vpack.c.b16 %v2905, %v2817
        %v3874 = vpack.c.b16 %v2906, %v2818
        %v3875 = vpack.c.b16 %v2907, %v2819
        %v3876 = vpack.c.b16 %v2908, %v2820
        %v3877 = vpack.c.b16 %v2909, %v2821
        %v3878 = vpack.c.b16 %v2910, %v2822
        %v3879 = vpack.c.b16 %v2911, %v2823
        %v3880 = vpack.c.b16 %v2912, %v2824
        %v3881 = vpack.c.b16 %v2913, %v2825
        %v3882 = vpack.c.b16 %v2914, %v2826
        %v3883 = vpack.c.b16 %v2915, %v2827
        %v3884 = vpack.c.b16 %v2916, %v2828
        %v3885 = vpack.c.b16 %v2917, %v2829
        %v3886 = vpack.c.b16 %v2918, %v2830
        %v3887 = vpack.c.b16 %v2919, %v2831
        %v3888 = vpack.c.b16 %v2920, %v2832
        %v3889 = vpack.c.b16 %v2921, %v2833
        %v3890 = vpack.c.b16 %v2922, %v2834
        %v3891 = vpack.c.b16 %v2923, %v2835
        %v3892 = vpack.c.b16 %v2924, %v2836
        %v3893 = vpack.c.b16 %v2925, %v2837
        %v3894 = vpack.c.b16 %v2926, %v2838
        %v3895 = vpack.c.b16 %v2927, %v2839
        %v3896 = vpack.c.b16 %v2928, %v2840
        %v3897 = vpack.c.b16 %v2929, %v2841
        %v3898 = vpack.c.b16 %v2930, %v2842
        %v3899 = vpack.c.b16 %v2931, %v2843
        %v3900 = vpack.c.b16 %v2932, %v2844
        %v3901 = vpack.c.b16 %v2933, %v2845
        %v3902 = vpack.c.b16 %v2934, %v2846
        %v3903 = vpack.c.b16 %v2935, %v2847
        %v3904 = vpack.c.b16 %v2936, %v2848
        %v3905 = vpack.c.b16 %v2937, %v2849
        %v3906 = vpack.c.b16 %v2938, %v2850
        %v3907 = vpack.c.b16 %v2939, %v2851
        %v3908 = vpack.c.b16 %v2940, %v2852
        %v3909 = vpack.c.b16 %v2941, %v2853
        %v3910 = vpack.c.b16 %v2942, %v2854
        %v3911 = vpack.c.b16 %v2943, %v2855
        %v3912 = vpack.c.b16 %v2944, %v2856
        %v3913 = vpack.c.b16 %v2945, %v2857
        %v3914 = vpack.c.b16 %v2946, %v2858
        %v3915 = vpack.c.b16 %v2947, %v2859
        %v3916 = vpack.c.b16 %v2948, %v2860
        %v3917 = vpack.c.b16 %v2949, %v2861
        %v3918 = vpack.c.b16 %v2950, %v2862
        %v3919 = vpack.c.b16 %v2951, %v2863
        %v3920 = vpack.c.b16 %v2952, %v2864
        %v3921 = vpack.c.b16 %v2953, %v2865
        %v3922 = vpack.c.b16 %v2954, %v2866
        %v3923 = vpack.c.b16 %v2955, %v2867
        %v3924 = vpack.c.b16 %v2956, %v2868
        %v3925 = vpack.c.b16 %v2957, %v2869
        %v3926 = vpack.c.b16 %v2958, %v2870
        %v3927 = vpack.c.b16 %v2959, %v2871
        %v3928 = vpack.c.b16 %v2960, %v2872
        %v3929 = vpack.c.b16 %v2961, %v2873
        %v3930 = vpack.c.b16 %v2962, %v2874
        %v3931 = vpack.c.b16 %v2963, %v2875
        %v3932 = vpack.c.b16 %v2964, %v2876
        %v3933 = vpack.c.b16 %v2965, %v2877
        %v3934 = vpack.c.b16 %v2966, %v2878
        %v3935 = vpack.c.b16 %v2967, %v2879
        %v3936 = vpack.c.b16 %v2968, %v2880
        %v3937 = vpack.c.b16 %v2969, %v2881
        %v3938 = vpack.c.b16 %v2970, %v2882
        %v3939 = vpack.c.b16 %v2971, %v2883
        %v3940 = vpack.c.b16 %v2972, %v2884
        %v3941 = vpack.c.b16 %v2973, %v2885
        %v3942 = vpack.c.b16 %v2974, %v2886
        %v3943 = vpack.c.b16 %v2975, %v2887
        %v3944 = vpack.c.b16 %v2976, %v2888
        %v3945 = vpack.c.b16 %v2977, %v2889
        %v3946 = vpack.c.b16 %v2978, %v2890
        %v3947 = vpack.c.b16 %v2979, %v2891
        %v3948 = vpack.c.b16 %v2980, %v2892
        %v3949 = vpack.c.b16 %v2981, %v2893
        %v3950 = vpack.c.b16 %v2982, %v2894
        %v3951 = vpack.c.b16 %v2983, %v2895
        %v3952 = vpack.c.b16 %v3072, %v2984
        %v3953 = vpack.c.b16 %v3073, %v2985
        %v3954 = vpack.c.b16 %v3074, %v2986
        %v3955 = vpack.c.b16 %v3075, %v2987
        %v3956 = vpack.c.b16 %v3076, %v2988
        %v3957 = vpack.c.b16 %v3077, %v2989
        %v3958 = vpack.c.b16 %v3078, %v2990
        %v3959 = vpack.c.b16 %v3079, %v2991
        %v3960 = vpack.c.b16 %v3080, %v2992
        %v3961 = vpack.c.b16 %v3081, %v2993
        %v3962 = vpack.c.b16 %v3082, %v2994
        %v3963 = vpack.c.b16 %v3083, %v2995
        %v3964 = vpack.c.b16 %v3084, %v2996
        %v3965 = vpack.c.b16 %v3085, %v2997
        %v3966 = vpack.c.b16 %v3086, %v2998
        %v3967 = vpack.c.b16 %v3087, %v2999
        %v3968 = vpack.c.b16 %v3088, %v3000
        %v3969 = vpack.c.b16 %v3089, %v3001
        %v3970 = vpack.c.b16 %v3090, %v3002
        %v3971 = vpack.c.b16 %v3091, %v3003
        %v3972 = vpack.c.b16 %v3092, %v3004
        %v3973 = vpack.c.b16 %v3093, %v3005
        %v3974 = vpack.c.b16 %v3094, %v3006
        %v3975 = vpack.c.b16 %v3095, %v3007
        %v3976 = vpack.c.b16 %v3096, %v3008
        %v3977 = vpack.c.b16 %v3097, %v3009
        %v3978 = vpack.c.b16 %v3098, %v3010
        %v3979 = vpack.c.b16 %v3099, %v3011
        %v3980 = vpack.c.b16 %v3100, %v3012
        %v3981 = vpack.c.b16 %v3101, %v3013
        %v3982 = vpack.c.b16 %v3102, %v3014
        %v3983 = vpack.c.b16 %v3103, %v3015
        %v3984 = vpack.c.b16 %v3104, %v3016
        %v3985 = vpack.c.b16 %v3105, %v3017
        %v3986 = vpack.c.b16 %v3106, %v3018
        %v3987 = vpack.c.b16 %v3107, %v3019
        %v3988 = vpack.c.b16 %v3108, %v3020
        %v3989 = vpack.c.b16 %v3109, %v3021
        %v3990 = vpack.c.b16 %v3110, %v3022
        %v3991 = vpack.c.b16 %v3111, %v3023
        %v3992 = vpack.c.b16 %v3112, %v3024
        %v3993 = vpack.c.b16 %v3113, %v3025
        %v3994 = vpack.c.b16 %v3114, %v3026
        %v3995 = vpack.c.b16 %v3115, %v3027
        %v3996 = vpack.c.b16 %v3116, %v3028
        %v3997 = vpack.c.b16 %v3117, %v3029
        %v3998 = vpack.c.b16 %v3118, %v3030
        %v3999 = vpack.c.b16 %v3119, %v3031
        %v4000 = vpack.c.b16 %v3120, %v3032
        %v4001 = vpack.c.b16 %v3121, %v3033
        %v4002 = vpack.c.b16 %v3122, %v3034
        %v4003 = vpack.c.b16 %v3123, %v3035
        %v4004 = vpack.c.b16 %v3124, %v3036
        %v4005 = vpack.c.b16 %v3125, %v3037
        %v4006 = vpack.c.b16 %v3126, %v3038
        %v4007 = vpack.c.b16 %v3127, %v3039
        %v4008 = vpack.c.b16 %v3128, %v3040
        %v4009 = vpack.c.b16 %v3129, %v3041
        %v4010 = vpack.c.b16 %v3130, %v3042
        %v4011 = vpack.c.b16 %v3131, %v3043
        %v4012 = vpack.c.b16 %v3132, %v3044
        %v4013 = vpack.c.b16 %v3133, %v3045
        %v4014 = vpack.c.b16 %v3134, %v3046
        %v4015 = vpack.c.b16 %v3135, %v3047
        %v4016 = vpack.c.b16 %v3136, %v3048
        %v4017 = vpack.c.b16 %v3137, %v3049
        %v4018 = vpack.c.b16 %v3138, %v3050
        %v4019 = vpack.c.b16 %v3139, %v3051
        %v4020 = vpack.c.b16 %v3140, %v3052
        %v4021 = vpack.c.b16 %v3141, %v3053
        %v4022 = vpack.c.b16 %v3142, %v3054
        %v4023 = vpack.c.b16 %v3143, %v3055
        %v4024 = vpack.c.b16 %v3144, %v3056
        %v4025 = vpack.c.b16 %v3145, %v3057
        %v4026 = vpack.c.b16 %v3146, %v3058
        %v4027 = vpack.c.b16 %v3147, %v3059
        %v4028 = vpack.c.b16 %v3148, %v3060
        %v4029 = vpack.c.b16 %v3149, %v3061
        %v4030 = vpack.c.b16 %v3150, %v3062
        %v4031 = vpack.c.b16 %v3151, %v3063
        %v4032 = vpack.c.b16 %v3152, %v3064
        %v4033 = vpack.c.b16 %v3153, %v3065
        %v4034 = vpack.c.b16 %v3154, %v3066
        %v4035 = vpack.c.b16 %v3155, %v3067
        %v4036 = vpack.c.b16 %v3156, %v3068
        %v4037 = vpack.c.b16 %v3157, %v3069
        %v4038 = vpack.c.b16 %v3158, %v3070
        %v4039 = vpack.c.b16 %v3159, %v3071
        %v4040 = vpack.c.b16 %v3248, %v3160
        %v4041 = vpack.c.b16 %v3249, %v3161
        %v4042 = vpack.c.b16 %v3250, %v3162
        %v4043 = vpack.c.b16 %v3251, %v3163
        %v4044 = vpack.c.b16 %v3252, %v3164
        %v4045 = vpack.c.b16 %v3253, %v3165
        %v4046 = vpack.c.b16 %v3254, %v3166
        %v4047 = vpack.c.b16 %v3255, %v3167
        %v4048 = vpack.c.b16 %v3256, %v3168
        %v4049 = vpack.c.b16 %v3257, %v3169
        %v4050 = vpack.c.b16 %v3258, %v3170
        %v4051 = vpack.c.b16 %v3259, %v3171
        %v4052 = vpack.c.b16 %v3260, %v3172
        %v4053 = vpack.c.b16 %v3261, %v3173
        %v4054 = vpack.c.b16 %v3262, %v3174
        %v4055 = vpack.c.b16 %v3263, %v3175
        %v4056 = vpack.c.b16 %v3264, %v3176
        %v4057 = vpack.c.b16 %v3265, %v3177
        %v4058 = vpack.c.b16 %v3266, %v3178
        %v4059 = vpack.c.b16 %v3267, %v3179
        %v4060 = vpack.c.b16 %v3268, %v3180
        %v4061 = vpack.c.b16 %v3269, %v3181
        %v4062 = vpack.c.b16 %v3270, %v3182
        %v4063 = vpack.c.b16 %v3271, %v3183
        %v4064 = vpack.c.b16 %v3272, %v3184
        %v4065 = vpack.c.b16 %v3273, %v3185
        %v4066 = vpack.c.b16 %v3274, %v3186
        %v4067 = vpack.c.b16 %v3275, %v3187
        %v4068 = vpack.c.b16 %v3276, %v3188
        %v4069 = vpack.c.b16 %v3277, %v3189
        %v4070 = vpack.c.b16 %v3278, %v3190
        %v4071 = vpack.c.b16 %v3279, %v3191
        %v4072 = vpack.c.b16 %v3280, %v3192
        %v4073 = vpack.c.b16 %v3281, %v3193
        %v4074 = vpack.c.b16 %v3282, %v3194
        %v4075 = vpack.c.b16 %v3283, %v3195
        %v4076 = vpack.c.b16 %v3284, %v3196
        %v4077 = vpack.c.b16 %v3285, %v3197
        %v4078 = vpack.c.b16 %v3286, %v3198
        %v4079 = vpack.c.b16 %v3287, %v3199
        %v4080 = vpack.c.b16 %v3288, %v3200
        %v4081 = vpack.c.b16 %v3289, %v3201
        %v4082 = vpack.c.b16 %v3290, %v3202
        %v4083 = vpack.c.b16 %v3291, %v3203
        %v4084 = vpack.c.b16 %v3292, %v3204
        %v4085 = vpack.c.b16 %v3293, %v3205
        %v4086 = vpack.c.b16 %v3294, %v3206
        %v4087 = vpack.c.b16 %v3295, %v3207
        %v4088 = vpack.c.b16 %v3296, %v3208
        %v4089 = vpack.c.b16 %v3297, %v3209
        %v4090 = vpack.c.b16 %v3298, %v3210
        %v4091 = vpack.c.b16 %v3299, %v3211
        %v4092 = vpack.c.b16 %v3300, %v3212
        %v4093 = vpack.c.b16 %v3301, %v3213
        %v4094 = vpack.c.b16 %v3302, %v3214
        %v4095 = vpack.c.b16 %v3303, %v3215
        %v4096 = vpack.c.b16 %v3304, %v3216
        %v4097 = vpack.c.b16 %v3305, %v3217
        %v4098 = vpack.c.b16 %v3306, %v3218
        %v4099 = vpack.c.b16 %v3307, %v3219
        %v4100 = vpack.c.b16 %v3308, %v3220
        %v4101 = vpack.c.b16 %v3309, %v3221
        %v4102 = vpack.c.b16 %v3310, %v3222
        %v4103 = vpack.c.b16 %v3311, %v3223
        %v4104 = vpack.c.b16 %v3312, %v3224
        %v4105 = vpack.c.b16 %v3313, %v3225
        %v4106 = vpack.c.b16 %v3314, %v3226
        %v4107 = vpack.c.b16 %v3315, %v3227
        %v4108 = vpack.c.b16 %v3316, %v3228
        %v4109 = vpack.c.b16 %v3317, %v3229
        %v4110 = vpack.c.b16 %v3318, %v3230
        %v4111 = vpack.c.b16 %v3319, %v3231
        %v4112 = vpack.c.b16 %v3320, %v3232
        %v4113 = vpack.c.b16 %v3321, %v3233
        %v4114 = vpack.c.b16 %v3322, %v3234
        %v4115 = vpack.c.b16 %v3323, %v3235
        %v4116 = vpack.c.b16 %v3324, %v3236
        %v4117 = vpack.c.b16 %v3325, %v3237
        %v4118 = vpack.c.b16 %v3326, %v3238
        %v4119 = vpack.c.b16 %v3327, %v3239
        %v4120 = vpack.c.b16 %v3328, %v3240
        %v4121 = vpack.c.b16 %v3329, %v3241
        %v4122 = vpack.c.b16 %v3330, %v3242
        %v4123 = vpack.c.b16 %v3331, %v3243
        %v4124 = vpack.c.b16 %v3332, %v3244
        %v4125 = vpack.c.b16 %v3333, %v3245
        %v4126 = vpack.c.b16 %v3334, %v3246
        %v4127 = vpack.c.b16 %v3335, %v3247
        %v4128 = vpack.c.b16 %v3424, %v3336
        %v4129 = vpack.c.b16 %v3425, %v3337
        %v4130 = vpack.c.b16 %v3426, %v3338
        %v4131 = vpack.c.b16 %v3427, %v3339
        %v4132 = vpack.c.b16 %v3428, %v3340
        %v4133 = vpack.c.b16 %v3429, %v3341
        %v4134 = vpack.c.b16 %v3430, %v3342
        %v4135 = vpack.c.b16 %v3431, %v3343
        %v4136 = vpack.c.b16 %v3432, %v3344
        %v4137 = vpack.c.b16 %v3433, %v3345
        %v4138 = vpack.c.b16 %v3434, %v3346
        %v4139 = vpack.c.b16 %v3435, %v3347
        %v4140 = vpack.c.b16 %v3436, %v3348
        %v4141 = vpack.c.b16 %v3437, %v3349
        %v4142 = vpack.c.b16 %v3438, %v3350
        %v4143 = vpack.c.b16 %v3439, %v3351
        %v4144 = vpack.c.b16 %v3440, %v3352
        %v4145 = vpack.c.b16 %v3441, %v3353
        %v4146 = vpack.c.b16 %v3442, %v3354
        %v4147 = vpack.c.b16 %v3443, %v3355
        %v4148 = vpack.c.b16 %v3444, %v3356
        %v4149 = vpack.c.b16 %v3445, %v3357
        %v4150 = vpack.c.b16 %v3446, %v3358
        %v4151 = vpack.c.b16 %v3447, %v3359
        %v4152 = vpack.c.b16 %v3448, %v3360
        %v4153 = vpack.c.b16 %v3449, %v3361
        %v4154 = vpack.c.b16 %v3450, %v3362
        %v4155 = vpack.c.b16 %v3451, %v3363
        %v4156 = vpack.c.b16 %v3452, %v3364
        %v4157 = vpack.c.b16 %v3453, %v3365
        %v4158 = vpack.c.b16 %v3454, %v3366
        %v4159 = vpack.c.b16 %v3455, %v3367
        %v4160 = vpack.c.b16 %v3456, %v3368
        %v4161 = vpack.c.b16 %v3457, %v3369
        %v4162 = vpack.c.b16 %v3458, %v3370
        %v4163 = vpack.c.b16 %v3459, %v3371
        %v4164 = vpack.c.b16 %v3460, %v3372
        %v4165 = vpack.c.b16 %v3461, %v3373
        %v4166 = vpack.c.b16 %v3462, %v3374
        %v4167 = vpack.c.b16 %v3463, %v3375
        %v4168 = vpack.c.b16 %v3464, %v3376
        %v4169 = vpack.c.b16 %v3465, %v3377
        %v4170 = vpack.c.b16 %v3466, %v3378
        %v4171 = vpack.c.b16 %v3467, %v3379
        %v4172 = vpack.c.b16 %v3468, %v3380
        %v4173 = vpack.c.b16 %v3469, %v3381
        %v4174 = vpack.c.b16 %v3470, %v3382
        %v4175 = vpack.c.b16 %v3471, %v3383
        %v4176 = vpack.c.b16 %v3472, %v3384
        %v4177 = vpack.c.b16 %v3473, %v3385
        %v4178 = vpack.c.b16 %v3474, %v3386
        %v4179 = vpack.c.b16 %v3475, %v3387
        %v4180 = vpack.c.b16 %v3476, %v3388
        %v4181 = vpack.c.b16 %v3477, %v3389
        %v4182 = vpack.c.b16 %v3478, %v3390
        %v4183 = vpack.c.b16 %v3479, %v3391
        %v4184 = vpack.c.b16 %v3480, %v3392
        %v4185 = vpack.c.b16 %v3481, %v3393
        %v4186 = vpack.c.b16 %v3482, %v3394
        %v4187 = vpack.c.b16 %v3483, %v3395
        %v4188 = vpack.c.b16 %v3484, %v3396
        %v4189 = vpack.c.b16 %v3485, %v3397
        %v4190 = vpack.c.b16 %v3486, %v3398
        %v4191 = vpack.c.b16 %v3487, %v3399
        %v4192 = vpack.c.b16 %v3488, %v3400
        %v4193 = vpack.c.b16 %v3489, %v3401
        %v4194 = vpack.c.b16 %v3490, %v3402
        %v4195 = vpack.c.b16 %v3491, %v3403
        %v4196 = vpack.c.b16 %v3492, %v3404
        %v4197 = vpack.c.b16 %v3493, %v3405
        %v4198 = vpack.c.b16 %v3494, %v3406
        %v4199 = vpack.c.b16 %v3495, %v3407
        %v4200 = vpack.c.b16 %v3496, %v3408
        %v4201 = vpack.c.b16 %v3497, %v3409
        %v4202 = vpack.c.b16 %v3498, %v3410
        %v4203 = vpack.c.b16 %v3499, %v3411
        %v4204 = vpack.c.b16 %v3500, %v3412
        %v4205 = vpack.c.b16 %v3501, %v3413
        %v4206 = vpack.c.b16 %v3502, %v3414
        %v4207 = vpack.c.b16 %v3503, %v3415
        %v4208 = vpack.c.b16 %v3504, %v3416
        %v4209 = vpack.c.b16 %v3505, %v3417
        %v4210 = vpack.c.b16 %v3506, %v3418
        %v4211 = vpack.c.b16 %v3507, %v3419
        %v4212 = vpack.c.b16 %v3508, %v3420
        %v4213 = vpack.c.b16 %v3509, %v3421
        %v4214 = vpack.c.b16 %v3510, %v3422
        %v4215 = vpack.c.b16 %v3511, %v3423
        %4920 = vmatprep.subr.bf16.mxu0 %v4129
        %4921 = vmatpush1.bf16.msra.mxu0 %v4128
        %4922 = vmatprep.subr.bf16.mxu0 %v4041
        %4923 = vmatpush1.bf16.msra.mxu0 %v4040
        %4924 = vmatprep.subr.bf16.mxu0 %v3953
        %4925 = vmatpush1.bf16.msra.mxu0 %v3952
        %4926 = vmatprep.subr.bf16.mxu0 %v3865
        %4927 = vmatpush1.bf16.msra.mxu0 %v3864
        %4928 = vmatprep.subr.bf16.mxu0 %v3777
        %4929 = vmatpush1.bf16.msra.mxu0 %v3776
        %4930 = vmatprep.subr.bf16.mxu0 %v3689
        %4931 = vmatpush1.bf16.msra.mxu0 %v3688
        %4932 = vmatprep.subr.bf16.mxu0 %v3601
        %4933 = vmatpush1.bf16.msra.mxu0 %v3600
        %4934 = vmatprep.subr.bf16.mxu0 %v3513
        %4935 = vmatpush1.bf16.msra.mxu0 %v3512
        %4936 = vmatprep.subr.bf16.mxu0 0
        %4937 = vmatpush2.bf16.msra.mxu0 0
        %4938 = vmatprep.subr.bf16.mxu0 0
        %4939 = vmatpush2.bf16.msra.mxu0 0
        %4940 = vmatprep.subr.bf16.mxu0 0
        %4941 = vmatpush2.bf16.msra.mxu0 0
        %4942 = vmatprep.subr.bf16.mxu0 0
        %4943 = vmatpush2.bf16.msra.mxu0 0
        %4944 = vmatprep.subr.bf16.mxu0 0
        %4945 = vmatpush2.bf16.msra.mxu0 0
        %4946 = vmatprep.subr.bf16.mxu0 0
        %4947 = vmatpush2.bf16.msra.mxu0 0
        %4948 = vmatprep.subr.bf16.mxu0 0
        %4949 = vmatpush2.bf16.msra.mxu0 0
        %4950 = vmatprep.subr.bf16.mxu0 0
        %4951 = vmatpush2.bf16.msra.mxu0 0
        %4952 = vmatprep.mubr.bf16.mxu0 0
        %4953 = vmatmul.mubr.bf16.gmra.mxu0 %v233
        %v4954 = vpop.f32.mrf.mxu0
        %v4955 = vadd.f32 %v963, %v4954
        %v4956 = vpop.f32.mrf.mxu0
        %v4957 = vadd.f32 %v967, %v4956
        %v4958 = vpop.f32.mrf.mxu0
        %v4959 = vpop.f32.mrf.mxu0
        %4960 = vdwg.mxu0
        %4961 = vmatprep.subr.bf16.mxu0 %v4131
        %4962 = vmatpush1.bf16.msra.mxu0 %v4130
        %4963 = vmatprep.subr.bf16.mxu0 %v4043
        %4964 = vmatpush1.bf16.msra.mxu0 %v4042
        %4965 = vmatprep.subr.bf16.mxu0 %v3955
        %4966 = vmatpush1.bf16.msra.mxu0 %v3954
        %4967 = vmatprep.subr.bf16.mxu0 %v3867
        %4968 = vmatpush1.bf16.msra.mxu0 %v3866
        %4969 = vmatprep.subr.bf16.mxu0 %v3779
        %4970 = vmatpush1.bf16.msra.mxu0 %v3778
        %4971 = vmatprep.subr.bf16.mxu0 %v3691
        %4972 = vmatpush1.bf16.msra.mxu0 %v3690
        %4973 = vmatprep.subr.bf16.mxu0 %v3603
        %4974 = vmatpush1.bf16.msra.mxu0 %v3602
        %4975 = vmatprep.subr.bf16.mxu0 %v3515
        %4976 = vmatpush1.bf16.msra.mxu0 %v3514
        %4977 = vmatprep.subr.bf16.mxu0 0
        %4978 = vmatpush2.bf16.msra.mxu0 0
        %4979 = vmatprep.subr.bf16.mxu0 0
        %4980 = vmatpush2.bf16.msra.mxu0 0
        %4981 = vmatprep.subr.bf16.mxu0 0
        %4982 = vmatpush2.bf16.msra.mxu0 0
        %4983 = vmatprep.subr.bf16.mxu0 0
        %4984 = vmatpush2.bf16.msra.mxu0 0
        %4985 = vmatprep.subr.bf16.mxu0 0
        %4986 = vmatpush2.bf16.msra.mxu0 0
        %4987 = vmatprep.subr.bf16.mxu0 0
        %4988 = vmatpush2.bf16.msra.mxu0 0
        %4989 = vmatprep.subr.bf16.mxu0 0
        %4990 = vmatpush2.bf16.msra.mxu0 0
        %4991 = vmatprep.subr.bf16.mxu0 0
        %4992 = vmatpush2.bf16.msra.mxu0 0
        %4993 = vmatprep.mubr.bf16.mxu0 0
        %4994 = vmatmul.mubr.bf16.gmra.mxu0 %v233
        %v4995 = vpop.f32.mrf.mxu0
        %v4996 = vadd.f32 %v971, %v4995
        %v4997 = vpop.f32.mrf.mxu0
        %v4998 = vadd.f32 %v975, %v4997
        %v4999 = vpop.f32.mrf.mxu0
        %v5000 = vpop.f32.mrf.mxu0
        %5001 = vdwg.mxu0
        %5002 = vmatprep.subr.bf16.mxu0 %v4133
        %5003 = vmatpush1.bf16.msra.mxu0 %v4132
        %5004 = vmatprep.subr.bf16.mxu0 %v4045
        %5005 = vmatpush1.bf16.msra.mxu0 %v4044
        %5006 = vmatprep.subr.bf16.mxu0 %v3957
        %5007 = vmatpush1.bf16.msra.mxu0 %v3956
        %5008 = vmatprep.subr.bf16.mxu0 %v3869
        %5009 = vmatpush1.bf16.msra.mxu0 %v3868
        %5010 = vmatprep.subr.bf16.mxu0 %v3781
        %5011 = vmatpush1.bf16.msra.mxu0 %v3780
        %5012 = vmatprep.subr.bf16.mxu0 %v3693
        %5013 = vmatpush1.bf16.msra.mxu0 %v3692
        %5014 = vmatprep.subr.bf16.mxu0 %v3605
        %5015 = vmatpush1.bf16.msra.mxu0 %v3604
        %5016 = vmatprep.subr.bf16.mxu0 %v3517
        %5017 = vmatpush1.bf16.msra.mxu0 %v3516
        %5018 = vmatprep.subr.bf16.mxu0 0
        %5019 = vmatpush2.bf16.msra.mxu0 0
        %5020 = vmatprep.subr.bf16.mxu0 0
        %5021 = vmatpush2.bf16.msra.mxu0 0
        %5022 = vmatprep.subr.bf16.mxu0 0
        %5023 = vmatpush2.bf16.msra.mxu0 0
        %5024 = vmatprep.subr.bf16.mxu0 0
        %5025 = vmatpush2.bf16.msra.mxu0 0
        %5026 = vmatprep.subr.bf16.mxu0 0
        %5027 = vmatpush2.bf16.msra.mxu0 0
        %5028 = vmatprep.subr.bf16.mxu0 0
        %5029 = vmatpush2.bf16.msra.mxu0 0
        %5030 = vmatprep.subr.bf16.mxu0 0
        %5031 = vmatpush2.bf16.msra.mxu0 0
        %5032 = vmatprep.subr.bf16.mxu0 0
        %5033 = vmatpush2.bf16.msra.mxu0 0
        %5034 = vmatprep.mubr.bf16.mxu0 0
        %5035 = vmatmul.mubr.bf16.gmra.mxu0 %v233
        %v5036 = vpop.f32.mrf.mxu0
        %v5037 = vadd.f32 %v979, %v5036
        %v5038 = vpop.f32.mrf.mxu0
        %v5039 = vadd.f32 %v983, %v5038
        %v5040 = vpop.f32.mrf.mxu0
        %v5041 = vpop.f32.mrf.mxu0
        %5042 = vdwg.mxu0
        %5043 = vmatprep.subr.bf16.mxu0 %v4135
        %5044 = vmatpush1.bf16.msra.mxu0 %v4134
        %5045 = vmatprep.subr.bf16.mxu0 %v4047
        %5046 = vmatpush1.bf16.msra.mxu0 %v4046
        %5047 = vmatprep.subr.bf16.mxu0 %v3959
        %5048 = vmatpush1.bf16.msra.mxu0 %v3958
        %5049 = vmatprep.subr.bf16.mxu0 %v3871
        %5050 = vmatpush1.bf16.msra.mxu0 %v3870
        %5051 = vmatprep.subr.bf16.mxu0 %v3783
        %5052 = vmatpush1.bf16.msra.mxu0 %v3782
        %5053 = vmatprep.subr.bf16.mxu0 %v3695
        %5054 = vmatpush1.bf16.msra.mxu0 %v3694
        %5055 = vmatprep.subr.bf16.mxu0 %v3607
        %5056 = vmatpush1.bf16.msra.mxu0 %v3606
        %5057 = vmatprep.subr.bf16.mxu0 %v3519
        %5058 = vmatpush1.bf16.msra.mxu0 %v3518
        %5059 = vmatprep.subr.bf16.mxu0 0
        %5060 = vmatpush2.bf16.msra.mxu0 0
        %5061 = vmatprep.subr.bf16.mxu0 0
        %5062 = vmatpush2.bf16.msra.mxu0 0
        %5063 = vmatprep.subr.bf16.mxu0 0
        %5064 = vmatpush2.bf16.msra.mxu0 0
        %5065 = vmatprep.subr.bf16.mxu0 0
        %5066 = vmatpush2.bf16.msra.mxu0 0
        %5067 = vmatprep.subr.bf16.mxu0 0
        %5068 = vmatpush2.bf16.msra.mxu0 0
        %5069 = vmatprep.subr.bf16.mxu0 0
        %5070 = vmatpush2.bf16.msra.mxu0 0
        %5071 = vmatprep.subr.bf16.mxu0 0
        %5072 = vmatpush2.bf16.msra.mxu0 0
        %5073 = vmatprep.subr.bf16.mxu0 0
        %5074 = vmatpush2.bf16.msra.mxu0 0
        %5075 = vmatprep.mubr.bf16.mxu0 0
        %5076 = vmatmul.mubr.bf16.gmra.mxu0 %v233
        %v5077 = vpop.f32.mrf.mxu0
        %v5078 = vadd.f32 %v987, %v5077
        %v5079 = vpop.f32.mrf.mxu0
        %v5080 = vadd.f32 %v991, %v5079
        %v5081 = vpop.f32.mrf.mxu0
        %v5082 = vpop.f32.mrf.mxu0
        %5083 = vdwg.mxu0
        %5084 = vmatprep.subr.bf16.mxu0 %v4137
        %5085 = vmatpush1.bf16.msra.mxu0 %v4136
        %5086 = vmatprep.subr.bf16.mxu0 %v4049
        %5087 = vmatpush1.bf16.msra.mxu0 %v4048
        %5088 = vmatprep.subr.bf16.mxu0 %v3961
        %5089 = vmatpush1.bf16.msra.mxu0 %v3960
        %5090 = vmatprep.subr.bf16.mxu0 %v3873
        %5091 = vmatpush1.bf16.msra.mxu0 %v3872
        %5092 = vmatprep.subr.bf16.mxu0 %v3785
        %5093 = vmatpush1.bf16.msra.mxu0 %v3784
        %5094 = vmatprep.subr.bf16.mxu0 %v3697
        %5095 = vmatpush1.bf16.msra.mxu0 %v3696
        %5096 = vmatprep.subr.bf16.mxu0 %v3609
        %5097 = vmatpush1.bf16.msra.mxu0 %v3608
        %5098 = vmatprep.subr.bf16.mxu0 %v3521
        %5099 = vmatpush1.bf16.msra.mxu0 %v3520
        %5100 = vmatprep.subr.bf16.mxu0 0
        %5101 = vmatpush2.bf16.msra.mxu0 0
        %5102 = vmatprep.subr.bf16.mxu0 0
        %5103 = vmatpush2.bf16.msra.mxu0 0
        %5104 = vmatprep.subr.bf16.mxu0 0
        %5105 = vmatpush2.bf16.msra.mxu0 0
        %5106 = vmatprep.subr.bf16.mxu0 0
        %5107 = vmatpush2.bf16.msra.mxu0 0
        %5108 = vmatprep.subr.bf16.mxu0 0
        %5109 = vmatpush2.bf16.msra.mxu0 0
        %5110 = vmatprep.subr.bf16.mxu0 0
        %5111 = vmatpush2.bf16.msra.mxu0 0
        %5112 = vmatprep.subr.bf16.mxu0 0
        %5113 = vmatpush2.bf16.msra.mxu0 0
        %5114 = vmatprep.subr.bf16.mxu0 0
        %5115 = vmatpush2.bf16.msra.mxu0 0
        %5116 = vmatprep.mubr.bf16.mxu0 0
        %5117 = vmatmul.mubr.bf16.gmra.mxu0 %v233
        %v5118 = vpop.f32.mrf.mxu0
        %v5119 = vadd.f32 %v995, %v5118
        %v5120 = vpop.f32.mrf.mxu0
        %v5121 = vadd.f32 %v999, %v5120
        %v5122 = vpop.f32.mrf.mxu0
        %v5123 = vpop.f32.mrf.mxu0
        %5124 = vdwg.mxu0
        %5125 = vmatprep.subr.bf16.mxu0 %v4139
        %5126 = vmatpush1.bf16.msra.mxu0 %v4138
        %5127 = vmatprep.subr.bf16.mxu0 %v4051
        %5128 = vmatpush1.bf16.msra.mxu0 %v4050
        %5129 = vmatprep.subr.bf16.mxu0 %v3963
        %5130 = vmatpush1.bf16.msra.mxu0 %v3962
        %5131 = vmatprep.subr.bf16.mxu0 %v3875
        %5132 = vmatpush1.bf16.msra.mxu0 %v3874
        %5133 = vmatprep.subr.bf16.mxu0 %v3787
        %5134 = vmatpush1.bf16.msra.mxu0 %v3786
        %5135 = vmatprep.subr.bf16.mxu0 %v3699
        %5136 = vmatpush1.bf16.msra.mxu0 %v3698
        %5137 = vmatprep.subr.bf16.mxu0 %v3611
        %5138 = vmatpush1.bf16.msra.mxu0 %v3610
        %5139 = vmatprep.subr.bf16.mxu0 %v3523
        %5140 = vmatpush1.bf16.msra.mxu0 %v3522
        %5141 = vmatprep.subr.bf16.mxu0 0
        %5142 = vmatpush2.bf16.msra.mxu0 0
        %5143 = vmatprep.subr.bf16.mxu0 0
        %5144 = vmatpush2.bf16.msra.mxu0 0
        %5145 = vmatprep.subr.bf16.mxu0 0
        %5146 = vmatpush2.bf16.msra.mxu0 0
        %5147 = vmatprep.subr.bf16.mxu0 0
        %5148 = vmatpush2.bf16.msra.mxu0 0
        %5149 = vmatprep.subr.bf16.mxu0 0
        %5150 = vmatpush2.bf16.msra.mxu0 0
        %5151 = vmatprep.subr.bf16.mxu0 0
        %5152 = vmatpush2.bf16.msra.mxu0 0
        %5153 = vmatprep.subr.bf16.mxu0 0
        %5154 = vmatpush2.bf16.msra.mxu0 0
        %5155 = vmatprep.subr.bf16.mxu0 0
        %5156 = vmatpush2.bf16.msra.mxu0 0
        %5157 = vmatprep.mubr.bf16.mxu0 0
        %5158 = vmatmul.mubr.bf16.gmra.mxu0 %v233
        %v5159 = vpop.f32.mrf.mxu0
        %v5160 = vadd.f32 %v1003, %v5159
        %v5161 = vpop.f32.mrf.mxu0
        %v5162 = vadd.f32 %v1007, %v5161
        %v5163 = vpop.f32.mrf.mxu0
        %v5164 = vpop.f32.mrf.mxu0
        %5165 = vdwg.mxu0
        %5166 = vmatprep.subr.bf16.mxu0 %v4141
        %5167 = vmatpush1.bf16.msra.mxu0 %v4140
        %5168 = vmatprep.subr.bf16.mxu0 %v4053
        %5169 = vmatpush1.bf16.msra.mxu0 %v4052
        %5170 = vmatprep.subr.bf16.mxu0 %v3965
        %5171 = vmatpush1.bf16.msra.mxu0 %v3964
        %5172 = vmatprep.subr.bf16.mxu0 %v3877
        %5173 = vmatpush1.bf16.msra.mxu0 %v3876
        %5174 = vmatprep.subr.bf16.mxu0 %v3789
        %5175 = vmatpush1.bf16.msra.mxu0 %v3788
        %5176 = vmatprep.subr.bf16.mxu0 %v3701
        %5177 = vmatpush1.bf16.msra.mxu0 %v3700
        %5178 = vmatprep.subr.bf16.mxu0 %v3613
        %5179 = vmatpush1.bf16.msra.mxu0 %v3612
        %5180 = vmatprep.subr.bf16.mxu0 %v3525
        %5181 = vmatpush1.bf16.msra.mxu0 %v3524
        %5182 = vmatprep.subr.bf16.mxu0 0
        %5183 = vmatpush2.bf16.msra.mxu0 0
        %5184 = vmatprep.subr.bf16.mxu0 0
        %5185 = vmatpush2.bf16.msra.mxu0 0
        %5186 = vmatprep.subr.bf16.mxu0 0
        %5187 = vmatpush2.bf16.msra.mxu0 0
        %5188 = vmatprep.subr.bf16.mxu0 0
        %5189 = vmatpush2.bf16.msra.mxu0 0
        %5190 = vmatprep.subr.bf16.mxu0 0
        %5191 = vmatpush2.bf16.msra.mxu0 0
        %5192 = vmatprep.subr.bf16.mxu0 0
        %5193 = vmatpush2.bf16.msra.mxu0 0
        %5194 = vmatprep.subr.bf16.mxu0 0
        %5195 = vmatpush2.bf16.msra.mxu0 0
        %5196 = vmatprep.subr.bf16.mxu0 0
        %5197 = vmatpush2.bf16.msra.mxu0 0
        %5198 = vmatprep.mubr.bf16.mxu0 0
        %5199 = vmatmul.mubr.bf16.gmra.mxu0 %v233
        %v5200 = vpop.f32.mrf.mxu0
        %v5201 = vadd.f32 %v1011, %v5200
        %v5202 = vpop.f32.mrf.mxu0
        %v5203 = vadd.f32 %v1015, %v5202
        %v5204 = vpop.f32.mrf.mxu0
        %v5205 = vpop.f32.mrf.mxu0
        %5206 = vdwg.mxu0
        %5207 = vmatprep.subr.bf16.mxu0 %v4143
        %5208 = vmatpush1.bf16.msra.mxu0 %v4142
        %5209 = vmatprep.subr.bf16.mxu0 %v4055
        %5210 = vmatpush1.bf16.msra.mxu0 %v4054
        %5211 = vmatprep.subr.bf16.mxu0 %v3967
        %5212 = vmatpush1.bf16.msra.mxu0 %v3966
        %5213 = vmatprep.subr.bf16.mxu0 %v3879
        %5214 = vmatpush1.bf16.msra.mxu0 %v3878
        %5215 = vmatprep.subr.bf16.mxu0 %v3791
        %5216 = vmatpush1.bf16.msra.mxu0 %v3790
        %5217 = vmatprep.subr.bf16.mxu0 %v3703
        %5218 = vmatpush1.bf16.msra.mxu0 %v3702
        %5219 = vmatprep.subr.bf16.mxu0 %v3615
        %5220 = vmatpush1.bf16.msra.mxu0 %v3614
        %5221 = vmatprep.subr.bf16.mxu0 %v3527
        %5222 = vmatpush1.bf16.msra.mxu0 %v3526
        %5223 = vmatprep.subr.bf16.mxu0 0
        %5224 = vmatpush2.bf16.msra.mxu0 0
        %5225 = vmatprep.subr.bf16.mxu0 0
        %5226 = vmatpush2.bf16.msra.mxu0 0
        %5227 = vmatprep.subr.bf16.mxu0 0
        %5228 = vmatpush2.bf16.msra.mxu0 0
        %5229 = vmatprep.subr.bf16.mxu0 0
        %5230 = vmatpush2.bf16.msra.mxu0 0
        %5231 = vmatprep.subr.bf16.mxu0 0
        %5232 = vmatpush2.bf16.msra.mxu0 0
        %5233 = vmatprep.subr.bf16.mxu0 0
        %5234 = vmatpush2.bf16.msra.mxu0 0
        %5235 = vmatprep.subr.bf16.mxu0 0
        %5236 = vmatpush2.bf16.msra.mxu0 0
        %5237 = vmatprep.subr.bf16.mxu0 0
        %5238 = vmatpush2.bf16.msra.mxu0 0
        %5239 = vmatprep.mubr.bf16.mxu0 0
        %5240 = vmatmul.mubr.bf16.gmra.mxu0 %v233
        %v5241 = vpop.f32.mrf.mxu0
        %v5242 = vadd.f32 %v1019, %v5241
        %v5243 = vpop.f32.mrf.mxu0
        %v5244 = vadd.f32 %v1023, %v5243
        %v5245 = vpop.f32.mrf.mxu0
        %v5246 = vpop.f32.mrf.mxu0
        %5247 = vdwg.mxu0
        %5248 = vmatprep.subr.bf16.mxu0 %v4145
        %5249 = vmatpush1.bf16.msra.mxu0 %v4144
        %5250 = vmatprep.subr.bf16.mxu0 %v4057
        %5251 = vmatpush1.bf16.msra.mxu0 %v4056
        %5252 = vmatprep.subr.bf16.mxu0 %v3969
        %5253 = vmatpush1.bf16.msra.mxu0 %v3968
        %5254 = vmatprep.subr.bf16.mxu0 %v3881
        %5255 = vmatpush1.bf16.msra.mxu0 %v3880
        %5256 = vmatprep.subr.bf16.mxu0 %v3793
        %5257 = vmatpush1.bf16.msra.mxu0 %v3792
        %5258 = vmatprep.subr.bf16.mxu0 %v3705
        %5259 = vmatpush1.bf16.msra.mxu0 %v3704
        %5260 = vmatprep.subr.bf16.mxu0 %v3617
        %5261 = vmatpush1.bf16.msra.mxu0 %v3616
        %5262 = vmatprep.subr.bf16.mxu0 %v3529
        %5263 = vmatpush1.bf16.msra.mxu0 %v3528
        %5264 = vmatprep.subr.bf16.mxu0 0
        %5265 = vmatpush2.bf16.msra.mxu0 0
        %5266 = vmatprep.subr.bf16.mxu0 0
        %5267 = vmatpush2.bf16.msra.mxu0 0
        %5268 = vmatprep.subr.bf16.mxu0 0
        %5269 = vmatpush2.bf16.msra.mxu0 0
        %5270 = vmatprep.subr.bf16.mxu0 0
        %5271 = vmatpush2.bf16.msra.mxu0 0
        %5272 = vmatprep.subr.bf16.mxu0 0
        %5273 = vmatpush2.bf16.msra.mxu0 0
        %5274 = vmatprep.subr.bf16.mxu0 0
        %5275 = vmatpush2.bf16.msra.mxu0 0
        %5276 = vmatprep.subr.bf16.mxu0 0
        %5277 = vmatpush2.bf16.msra.mxu0 0
        %5278 = vmatprep.subr.bf16.mxu0 0
        %5279 = vmatpush2.bf16.msra.mxu0 0
        %5280 = vmatprep.mubr.bf16.mxu0 0
        %5281 = vmatmul.mubr.bf16.gmra.mxu0 %v233
        %v5282 = vpop.f32.mrf.mxu0
        %v5283 = vadd.f32 %v1027, %v5282
        %v5284 = vpop.f32.mrf.mxu0
        %v5285 = vadd.f32 %v1031, %v5284
        %v5286 = vpop.f32.mrf.mxu0
        %v5287 = vpop.f32.mrf.mxu0
        %5288 = vdwg.mxu0
        %5289 = vmatprep.subr.bf16.mxu0 %v4147
        %5290 = vmatpush1.bf16.msra.mxu0 %v4146
        %5291 = vmatprep.subr.bf16.mxu0 %v4059
        %5292 = vmatpush1.bf16.msra.mxu0 %v4058
        %5293 = vmatprep.subr.bf16.mxu0 %v3971
        %5294 = vmatpush1.bf16.msra.mxu0 %v3970
        %5295 = vmatprep.subr.bf16.mxu0 %v3883
        %5296 = vmatpush1.bf16.msra.mxu0 %v3882
        %5297 = vmatprep.subr.bf16.mxu0 %v3795
        %5298 = vmatpush1.bf16.msra.mxu0 %v3794
        %5299 = vmatprep.subr.bf16.mxu0 %v3707
        %5300 = vmatpush1.bf16.msra.mxu0 %v3706
        %5301 = vmatprep.subr.bf16.mxu0 %v3619
        %5302 = vmatpush1.bf16.msra.mxu0 %v3618
        %5303 = vmatprep.subr.bf16.mxu0 %v3531
        %5304 = vmatpush1.bf16.msra.mxu0 %v3530
        %5305 = vmatprep.subr.bf16.mxu0 0
        %5306 = vmatpush2.bf16.msra.mxu0 0
        %5307 = vmatprep.subr.bf16.mxu0 0
        %5308 = vmatpush2.bf16.msra.mxu0 0
        %5309 = vmatprep.subr.bf16.mxu0 0
        %5310 = vmatpush2.bf16.msra.mxu0 0
        %5311 = vmatprep.subr.bf16.mxu0 0
        %5312 = vmatpush2.bf16.msra.mxu0 0
        %5313 = vmatprep.subr.bf16.mxu0 0
        %5314 = vmatpush2.bf16.msra.mxu0 0
        %5315 = vmatprep.subr.bf16.mxu0 0
        %5316 = vmatpush2.bf16.msra.mxu0 0
        %5317 = vmatprep.subr.bf16.mxu0 0
        %5318 = vmatpush2.bf16.msra.mxu0 0
        %5319 = vmatprep.subr.bf16.mxu0 0
        %5320 = vmatpush2.bf16.msra.mxu0 0
        %5321 = vmatprep.mubr.bf16.mxu0 0
        %5322 = vmatmul.mubr.bf16.gmra.mxu0 %v233
        %v5323 = vpop.f32.mrf.mxu0
        %v5324 = vadd.f32 %v1035, %v5323
        %v5325 = vpop.f32.mrf.mxu0
        %v5326 = vadd.f32 %v1039, %v5325
        %v5327 = vpop.f32.mrf.mxu0
        %v5328 = vpop.f32.mrf.mxu0
        %5329 = vdwg.mxu0
        %5330 = vmatprep.subr.bf16.mxu0 %v4149
        %5331 = vmatpush1.bf16.msra.mxu0 %v4148
        %5332 = vmatprep.subr.bf16.mxu0 %v4061
        %5333 = vmatpush1.bf16.msra.mxu0 %v4060
        %5334 = vmatprep.subr.bf16.mxu0 %v3973
        %5335 = vmatpush1.bf16.msra.mxu0 %v3972
        %5336 = vmatprep.subr.bf16.mxu0 %v3885
        %5337 = vmatpush1.bf16.msra.mxu0 %v3884
        %5338 = vmatprep.subr.bf16.mxu0 %v3797
        %5339 = vmatpush1.bf16.msra.mxu0 %v3796
        %5340 = vmatprep.subr.bf16.mxu0 %v3709
        %5341 = vmatpush1.bf16.msra.mxu0 %v3708
        %5342 = vmatprep.subr.bf16.mxu0 %v3621
        %5343 = vmatpush1.bf16.msra.mxu0 %v3620
        %5344 = vmatprep.subr.bf16.mxu0 %v3533
        %5345 = vmatpush1.bf16.msra.mxu0 %v3532
        %5346 = vmatprep.subr.bf16.mxu0 0
        %5347 = vmatpush2.bf16.msra.mxu0 0
        %5348 = vmatprep.subr.bf16.mxu0 0
        %5349 = vmatpush2.bf16.msra.mxu0 0
        %5350 = vmatprep.subr.bf16.mxu0 0
        %5351 = vmatpush2.bf16.msra.mxu0 0
        %5352 = vmatprep.subr.bf16.mxu0 0
        %5353 = vmatpush2.bf16.msra.mxu0 0
        %5354 = vmatprep.subr.bf16.mxu0 0
        %5355 = vmatpush2.bf16.msra.mxu0 0
        %5356 = vmatprep.subr.bf16.mxu0 0
        %5357 = vmatpush2.bf16.msra.mxu0 0
        %5358 = vmatprep.subr.bf16.mxu0 0
        %5359 = vmatpush2.bf16.msra.mxu0 0
        %5360 = vmatprep.subr.bf16.mxu0 0
        %5361 = vmatpush2.bf16.msra.mxu0 0
        %5362 = vmatprep.mubr.bf16.mxu0 0
        %5363 = vmatmul.mubr.bf16.gmra.mxu0 %v233
        %v5364 = vpop.f32.mrf.mxu0
        %v5365 = vadd.f32 %v1043, %v5364
        %v5366 = vpop.f32.mrf.mxu0
        %v5367 = vadd.f32 %v1047, %v5366
        %v5368 = vpop.f32.mrf.mxu0
        %v5369 = vpop.f32.mrf.mxu0
        %5370 = vdwg.mxu0
        %5371 = vmatprep.subr.bf16.mxu0 %v4151
        %5372 = vmatpush1.bf16.msra.mxu0 %v4150
        %5373 = vmatprep.subr.bf16.mxu0 %v4063
        %5374 = vmatpush1.bf16.msra.mxu0 %v4062
        %5375 = vmatprep.subr.bf16.mxu0 %v3975
        %5376 = vmatpush1.bf16.msra.mxu0 %v3974
        %5377 = vmatprep.subr.bf16.mxu0 %v3887
        %5378 = vmatpush1.bf16.msra.mxu0 %v3886
        %5379 = vmatprep.subr.bf16.mxu0 %v3799
        %5380 = vmatpush1.bf16.msra.mxu0 %v3798
        %5381 = vmatprep.subr.bf16.mxu0 %v3711
        %5382 = vmatpush1.bf16.msra.mxu0 %v3710
        %5383 = vmatprep.subr.bf16.mxu0 %v3623
        %5384 = vmatpush1.bf16.msra.mxu0 %v3622
        %5385 = vmatprep.subr.bf16.mxu0 %v3535
        %5386 = vmatpush1.bf16.msra.mxu0 %v3534
        %5387 = vmatprep.subr.bf16.mxu0 0
        %5388 = vmatpush2.bf16.msra.mxu0 0
        %5389 = vmatprep.subr.bf16.mxu0 0
        %5390 = vmatpush2.bf16.msra.mxu0 0
        %5391 = vmatprep.subr.bf16.mxu0 0
        %5392 = vmatpush2.bf16.msra.mxu0 0
        %5393 = vmatprep.subr.bf16.mxu0 0
        %5394 = vmatpush2.bf16.msra.mxu0 0
        %5395 = vmatprep.subr.bf16.mxu0 0
        %5396 = vmatpush2.bf16.msra.mxu0 0
        %5397 = vmatprep.subr.bf16.mxu0 0
        %5398 = vmatpush2.bf16.msra.mxu0 0
        %5399 = vmatprep.subr.bf16.mxu0 0
        %5400 = vmatpush2.bf16.msra.mxu0 0
        %5401 = vmatprep.subr.bf16.mxu0 0
        %5402 = vmatpush2.bf16.msra.mxu0 0
        %5403 = vmatprep.mubr.bf16.mxu0 0
        %5404 = vmatmul.mubr.bf16.gmra.mxu0 %v233
        %v5405 = vpop.f32.mrf.mxu0
        %v5406 = vadd.f32 %v1051, %v5405
        %v5407 = vpop.f32.mrf.mxu0
        %v5408 = vadd.f32 %v1055, %v5407
        %v5409 = vpop.f32.mrf.mxu0
        %v5410 = vpop.f32.mrf.mxu0
        %5411 = vdwg.mxu0
        %5412 = vmatprep.subr.bf16.mxu0 %v4153
        %5413 = vmatpush1.bf16.msra.mxu0 %v4152
        %5414 = vmatprep.subr.bf16.mxu0 %v4065
        %5415 = vmatpush1.bf16.msra.mxu0 %v4064
        %5416 = vmatprep.subr.bf16.mxu0 %v3977
        %5417 = vmatpush1.bf16.msra.mxu0 %v3976
        %5418 = vmatprep.subr.bf16.mxu0 %v3889
        %5419 = vmatpush1.bf16.msra.mxu0 %v3888
        %5420 = vmatprep.subr.bf16.mxu0 %v3801
        %5421 = vmatpush1.bf16.msra.mxu0 %v3800
        %5422 = vmatprep.subr.bf16.mxu0 %v3713
        %5423 = vmatpush1.bf16.msra.mxu0 %v3712
        %5424 = vmatprep.subr.bf16.mxu0 %v3625
        %5425 = vmatpush1.bf16.msra.mxu0 %v3624
        %5426 = vmatprep.subr.bf16.mxu0 %v3537
        %5427 = vmatpush1.bf16.msra.mxu0 %v3536
        %5428 = vmatprep.subr.bf16.mxu0 0
        %5429 = vmatpush2.bf16.msra.mxu0 0
        %5430 = vmatprep.subr.bf16.mxu0 0
        %5431 = vmatpush2.bf16.msra.mxu0 0
        %5432 = vmatprep.subr.bf16.mxu0 0
        %5433 = vmatpush2.bf16.msra.mxu0 0
        %5434 = vmatprep.subr.bf16.mxu0 0
        %5435 = vmatpush2.bf16.msra.mxu0 0
        %5436 = vmatprep.subr.bf16.mxu0 0
        %5437 = vmatpush2.bf16.msra.mxu0 0
        %5438 = vmatprep.subr.bf16.mxu0 0
        %5439 = vmatpush2.bf16.msra.mxu0 0
        %5440 = vmatprep.subr.bf16.mxu0 0
        %5441 = vmatpush2.bf16.msra.mxu0 0
        %5442 = vmatprep.subr.bf16.mxu0 0
        %5443 = vmatpush2.bf16.msra.mxu0 0
        %5444 = vmatprep.mubr.bf16.mxu0 0
        %5445 = vmatmul.mubr.bf16.gmra.mxu0 %v233
        %v5446 = vpop.f32.mrf.mxu0
        %v5447 = vadd.f32 %v1059, %v5446
        %v5448 = vpop.f32.mrf.mxu0
        %v5449 = vadd.f32 %v1063, %v5448
        %v5450 = vpop.f32.mrf.mxu0
        %v5451 = vpop.f32.mrf.mxu0
        %5452 = vdwg.mxu0
        %5453 = vmatprep.subr.bf16.mxu0 %v4155
        %5454 = vmatpush1.bf16.msra.mxu0 %v4154
        %5455 = vmatprep.subr.bf16.mxu0 %v4067
        %5456 = vmatpush1.bf16.msra.mxu0 %v4066
        %5457 = vmatprep.subr.bf16.mxu0 %v3979
        %5458 = vmatpush1.bf16.msra.mxu0 %v3978
        %5459 = vmatprep.subr.bf16.mxu0 %v3891
        %5460 = vmatpush1.bf16.msra.mxu0 %v3890
        %5461 = vmatprep.subr.bf16.mxu0 %v3803
        %5462 = vmatpush1.bf16.msra.mxu0 %v3802
        %5463 = vmatprep.subr.bf16.mxu0 %v3715
        %5464 = vmatpush1.bf16.msra.mxu0 %v3714
        %5465 = vmatprep.subr.bf16.mxu0 %v3627
        %5466 = vmatpush1.bf16.msra.mxu0 %v3626
        %5467 = vmatprep.subr.bf16.mxu0 %v3539
        %5468 = vmatpush1.bf16.msra.mxu0 %v3538
        %5469 = vmatprep.subr.bf16.mxu0 0
        %5470 = vmatpush2.bf16.msra.mxu0 0
        %5471 = vmatprep.subr.bf16.mxu0 0
        %5472 = vmatpush2.bf16.msra.mxu0 0
        %5473 = vmatprep.subr.bf16.mxu0 0
        %5474 = vmatpush2.bf16.msra.mxu0 0
        %5475 = vmatprep.subr.bf16.mxu0 0
        %5476 = vmatpush2.bf16.msra.mxu0 0
        %5477 = vmatprep.subr.bf16.mxu0 0
        %5478 = vmatpush2.bf16.msra.mxu0 0
        %5479 = vmatprep.subr.bf16.mxu0 0
        %5480 = vmatpush2.bf16.msra.mxu0 0
        %5481 = vmatprep.subr.bf16.mxu0 0
        %5482 = vmatpush2.bf16.msra.mxu0 0
        %5483 = vmatprep.subr.bf16.mxu0 0
        %5484 = vmatpush2.bf16.msra.mxu0 0
        %5485 = vmatprep.mubr.bf16.mxu0 0
        %5486 = vmatmul.mubr.bf16.gmra.mxu0 %v233
        %v5487 = vpop.f32.mrf.mxu0
        %v5488 = vadd.f32 %v1067, %v5487
        %v5489 = vpop.f32.mrf.mxu0
        %v5490 = vadd.f32 %v1071, %v5489
        %v5491 = vpop.f32.mrf.mxu0
        %v5492 = vpop.f32.mrf.mxu0
        %5493 = vdwg.mxu0
        %5494 = vmatprep.subr.bf16.mxu0 %v4157
        %5495 = vmatpush1.bf16.msra.mxu0 %v4156
        %5496 = vmatprep.subr.bf16.mxu0 %v4069
        %5497 = vmatpush1.bf16.msra.mxu0 %v4068
        %5498 = vmatprep.subr.bf16.mxu0 %v3981
        %5499 = vmatpush1.bf16.msra.mxu0 %v3980
        %5500 = vmatprep.subr.bf16.mxu0 %v3893
        %5501 = vmatpush1.bf16.msra.mxu0 %v3892
        %5502 = vmatprep.subr.bf16.mxu0 %v3805
        %5503 = vmatpush1.bf16.msra.mxu0 %v3804
        %5504 = vmatprep.subr.bf16.mxu0 %v3717
        %5505 = vmatpush1.bf16.msra.mxu0 %v3716
        %5506 = vmatprep.subr.bf16.mxu0 %v3629
        %5507 = vmatpush1.bf16.msra.mxu0 %v3628
        %5508 = vmatprep.subr.bf16.mxu0 %v3541
        %5509 = vmatpush1.bf16.msra.mxu0 %v3540
        %5510 = vmatprep.subr.bf16.mxu0 0
        %5511 = vmatpush2.bf16.msra.mxu0 0
        %5512 = vmatprep.subr.bf16.mxu0 0
        %5513 = vmatpush2.bf16.msra.mxu0 0
        %5514 = vmatprep.subr.bf16.mxu0 0
        %5515 = vmatpush2.bf16.msra.mxu0 0
        %5516 = vmatprep.subr.bf16.mxu0 0
        %5517 = vmatpush2.bf16.msra.mxu0 0
        %5518 = vmatprep.subr.bf16.mxu0 0
        %5519 = vmatpush2.bf16.msra.mxu0 0
        %5520 = vmatprep.subr.bf16.mxu0 0
        %5521 = vmatpush2.bf16.msra.mxu0 0
        %5522 = vmatprep.subr.bf16.mxu0 0
        %5523 = vmatpush2.bf16.msra.mxu0 0
        %5524 = vmatprep.subr.bf16.mxu0 0
        %5525 = vmatpush2.bf16.msra.mxu0 0
        %5526 = vmatprep.mubr.bf16.mxu0 0
        %5527 = vmatmul.mubr.bf16.gmra.mxu0 %v233
        %v5528 = vpop.f32.mrf.mxu0
        %v5529 = vadd.f32 %v1075, %v5528
        %v5530 = vpop.f32.mrf.mxu0
        %v5531 = vadd.f32 %v1079, %v5530
        %v5532 = vpop.f32.mrf.mxu0
        %v5533 = vpop.f32.mrf.mxu0
        %5534 = vdwg.mxu0
        %5535 = vmatprep.subr.bf16.mxu0 %v4159
        %5536 = vmatpush1.bf16.msra.mxu0 %v4158
        %5537 = vmatprep.subr.bf16.mxu0 %v4071
        %5538 = vmatpush1.bf16.msra.mxu0 %v4070
        %5539 = vmatprep.subr.bf16.mxu0 %v3983
        %5540 = vmatpush1.bf16.msra.mxu0 %v3982
        %5541 = vmatprep.subr.bf16.mxu0 %v3895
        %5542 = vmatpush1.bf16.msra.mxu0 %v3894
        %5543 = vmatprep.subr.bf16.mxu0 %v3807
        %5544 = vmatpush1.bf16.msra.mxu0 %v3806
        %5545 = vmatprep.subr.bf16.mxu0 %v3719
        %5546 = vmatpush1.bf16.msra.mxu0 %v3718
        %5547 = vmatprep.subr.bf16.mxu0 %v3631
        %5548 = vmatpush1.bf16.msra.mxu0 %v3630
        %5549 = vmatprep.subr.bf16.mxu0 %v3543
        %5550 = vmatpush1.bf16.msra.mxu0 %v3542
        %5551 = vmatprep.subr.bf16.mxu0 0
        %5552 = vmatpush2.bf16.msra.mxu0 0
        %5553 = vmatprep.subr.bf16.mxu0 0
        %5554 = vmatpush2.bf16.msra.mxu0 0
        %5555 = vmatprep.subr.bf16.mxu0 0
        %5556 = vmatpush2.bf16.msra.mxu0 0
        %5557 = vmatprep.subr.bf16.mxu0 0
        %5558 = vmatpush2.bf16.msra.mxu0 0
        %5559 = vmatprep.subr.bf16.mxu0 0
        %5560 = vmatpush2.bf16.msra.mxu0 0
        %5561 = vmatprep.subr.bf16.mxu0 0
        %5562 = vmatpush2.bf16.msra.mxu0 0
        %5563 = vmatprep.subr.bf16.mxu0 0
        %5564 = vmatpush2.bf16.msra.mxu0 0
        %5565 = vmatprep.subr.bf16.mxu0 0
        %5566 = vmatpush2.bf16.msra.mxu0 0
        %5567 = vmatprep.mubr.bf16.mxu0 0
        %5568 = vmatmul.mubr.bf16.gmra.mxu0 %v233
        %v5569 = vpop.f32.mrf.mxu0
        %v5570 = vadd.f32 %v1083, %v5569
        %v5571 = vpop.f32.mrf.mxu0
        %v5572 = vadd.f32 %v1087, %v5571
        %v5573 = vpop.f32.mrf.mxu0
        %v5574 = vpop.f32.mrf.mxu0
        %5575 = vdwg.mxu0
        %5576 = vmatprep.subr.bf16.mxu0 %v4161
        %5577 = vmatpush1.bf16.msra.mxu0 %v4160
        %5578 = vmatprep.subr.bf16.mxu0 %v4073
        %5579 = vmatpush1.bf16.msra.mxu0 %v4072
        %5580 = vmatprep.subr.bf16.mxu0 %v3985
        %5581 = vmatpush1.bf16.msra.mxu0 %v3984
        %5582 = vmatprep.subr.bf16.mxu0 %v3897
        %5583 = vmatpush1.bf16.msra.mxu0 %v3896
        %5584 = vmatprep.subr.bf16.mxu0 %v3809
        %5585 = vmatpush1.bf16.msra.mxu0 %v3808
        %5586 = vmatprep.subr.bf16.mxu0 %v3721
        %5587 = vmatpush1.bf16.msra.mxu0 %v3720
        %5588 = vmatprep.subr.bf16.mxu0 %v3633
        %5589 = vmatpush1.bf16.msra.mxu0 %v3632
        %5590 = vmatprep.subr.bf16.mxu0 %v3545
        %5591 = vmatpush1.bf16.msra.mxu0 %v3544
        %5592 = vmatprep.subr.bf16.mxu0 0
        %5593 = vmatpush2.bf16.msra.mxu0 0
        %5594 = vmatprep.subr.bf16.mxu0 0
        %5595 = vmatpush2.bf16.msra.mxu0 0
        %5596 = vmatprep.subr.bf16.mxu0 0
        %5597 = vmatpush2.bf16.msra.mxu0 0
        %5598 = vmatprep.subr.bf16.mxu0 0
        %5599 = vmatpush2.bf16.msra.mxu0 0
        %5600 = vmatprep.subr.bf16.mxu0 0
        %5601 = vmatpush2.bf16.msra.mxu0 0
        %5602 = vmatprep.subr.bf16.mxu0 0
        %5603 = vmatpush2.bf16.msra.mxu0 0
        %5604 = vmatprep.subr.bf16.mxu0 0
        %5605 = vmatpush2.bf16.msra.mxu0 0
        %5606 = vmatprep.subr.bf16.mxu0 0
        %5607 = vmatpush2.bf16.msra.mxu0 0
        %5608 = vmatprep.mubr.bf16.mxu0 0
        %5609 = vmatmul.mubr.bf16.gmra.mxu0 %v233
        %v5610 = vpop.f32.mrf.mxu0
        %v5611 = vadd.f32 %v1091, %v5610
        %v5612 = vpop.f32.mrf.mxu0
        %v5613 = vadd.f32 %v1095, %v5612
        %v5614 = vpop.f32.mrf.mxu0
        %v5615 = vpop.f32.mrf.mxu0
        %5616 = vdwg.mxu0
        %5617 = vmatprep.subr.bf16.mxu0 %v4163
        %5618 = vmatpush1.bf16.msra.mxu0 %v4162
        %5619 = vmatprep.subr.bf16.mxu0 %v4075
        %5620 = vmatpush1.bf16.msra.mxu0 %v4074
        %5621 = vmatprep.subr.bf16.mxu0 %v3987
        %5622 = vmatpush1.bf16.msra.mxu0 %v3986
        %5623 = vmatprep.subr.bf16.mxu0 %v3899
        %5624 = vmatpush1.bf16.msra.mxu0 %v3898
        %5625 = vmatprep.subr.bf16.mxu0 %v3811
        %5626 = vmatpush1.bf16.msra.mxu0 %v3810
        %5627 = vmatprep.subr.bf16.mxu0 %v3723
        %5628 = vmatpush1.bf16.msra.mxu0 %v3722
        %5629 = vmatprep.subr.bf16.mxu0 %v3635
        %5630 = vmatpush1.bf16.msra.mxu0 %v3634
        %5631 = vmatprep.subr.bf16.mxu0 %v3547
        %5632 = vmatpush1.bf16.msra.mxu0 %v3546
        %5633 = vmatprep.subr.bf16.mxu0 0
        %5634 = vmatpush2.bf16.msra.mxu0 0
        %5635 = vmatprep.subr.bf16.mxu0 0
        %5636 = vmatpush2.bf16.msra.mxu0 0
        %5637 = vmatprep.subr.bf16.mxu0 0
        %5638 = vmatpush2.bf16.msra.mxu0 0
        %5639 = vmatprep.subr.bf16.mxu0 0
        %5640 = vmatpush2.bf16.msra.mxu0 0
        %5641 = vmatprep.subr.bf16.mxu0 0
        %5642 = vmatpush2.bf16.msra.mxu0 0
        %5643 = vmatprep.subr.bf16.mxu0 0
        %5644 = vmatpush2.bf16.msra.mxu0 0
        %5645 = vmatprep.subr.bf16.mxu0 0
        %5646 = vmatpush2.bf16.msra.mxu0 0
        %5647 = vmatprep.subr.bf16.mxu0 0
        %5648 = vmatpush2.bf16.msra.mxu0 0
        %5649 = vmatprep.mubr.bf16.mxu0 0
        %5650 = vmatmul.mubr.bf16.gmra.mxu0 %v233
        %v5651 = vpop.f32.mrf.mxu0
        %v5652 = vadd.f32 %v1099, %v5651
        %v5653 = vpop.f32.mrf.mxu0
        %v5654 = vadd.f32 %v1103, %v5653
        %v5655 = vpop.f32.mrf.mxu0
        %v5656 = vpop.f32.mrf.mxu0
        %5657 = vdwg.mxu0
        %5658 = vmatprep.subr.bf16.mxu0 %v4165
        %5659 = vmatpush1.bf16.msra.mxu0 %v4164
        %5660 = vmatprep.subr.bf16.mxu0 %v4077
        %5661 = vmatpush1.bf16.msra.mxu0 %v4076
        %5662 = vmatprep.subr.bf16.mxu0 %v3989
        %5663 = vmatpush1.bf16.msra.mxu0 %v3988
        %5664 = vmatprep.subr.bf16.mxu0 %v3901
        %5665 = vmatpush1.bf16.msra.mxu0 %v3900
        %5666 = vmatprep.subr.bf16.mxu0 %v3813
        %5667 = vmatpush1.bf16.msra.mxu0 %v3812
        %5668 = vmatprep.subr.bf16.mxu0 %v3725
        %5669 = vmatpush1.bf16.msra.mxu0 %v3724
        %5670 = vmatprep.subr.bf16.mxu0 %v3637
        %5671 = vmatpush1.bf16.msra.mxu0 %v3636
        %5672 = vmatprep.subr.bf16.mxu0 %v3549
        %5673 = vmatpush1.bf16.msra.mxu0 %v3548
        %5674 = vmatprep.subr.bf16.mxu0 0
        %5675 = vmatpush2.bf16.msra.mxu0 0
        %5676 = vmatprep.subr.bf16.mxu0 0
        %5677 = vmatpush2.bf16.msra.mxu0 0
        %5678 = vmatprep.subr.bf16.mxu0 0
        %5679 = vmatpush2.bf16.msra.mxu0 0
        %5680 = vmatprep.subr.bf16.mxu0 0
        %5681 = vmatpush2.bf16.msra.mxu0 0
        %5682 = vmatprep.subr.bf16.mxu0 0
        %5683 = vmatpush2.bf16.msra.mxu0 0
        %5684 = vmatprep.subr.bf16.mxu0 0
        %5685 = vmatpush2.bf16.msra.mxu0 0
        %5686 = vmatprep.subr.bf16.mxu0 0
        %5687 = vmatpush2.bf16.msra.mxu0 0
        %5688 = vmatprep.subr.bf16.mxu0 0
        %5689 = vmatpush2.bf16.msra.mxu0 0
        %5690 = vmatprep.mubr.bf16.mxu0 0
        %5691 = vmatmul.mubr.bf16.gmra.mxu0 %v233
        %v5692 = vpop.f32.mrf.mxu0
        %v5693 = vadd.f32 %v1107, %v5692
        %v5694 = vpop.f32.mrf.mxu0
        %v5695 = vadd.f32 %v1111, %v5694
        %v5696 = vpop.f32.mrf.mxu0
        %v5697 = vpop.f32.mrf.mxu0
        %5698 = vdwg.mxu0
        %5699 = vmatprep.subr.bf16.mxu0 %v4167
        %5700 = vmatpush1.bf16.msra.mxu0 %v4166
        %5701 = vmatprep.subr.bf16.mxu0 %v4079
        %5702 = vmatpush1.bf16.msra.mxu0 %v4078
        %5703 = vmatprep.subr.bf16.mxu0 %v3991
        %5704 = vmatpush1.bf16.msra.mxu0 %v3990
        %5705 = vmatprep.subr.bf16.mxu0 %v3903
        %5706 = vmatpush1.bf16.msra.mxu0 %v3902
        %5707 = vmatprep.subr.bf16.mxu0 %v3815
        %5708 = vmatpush1.bf16.msra.mxu0 %v3814
        %5709 = vmatprep.subr.bf16.mxu0 %v3727
        %5710 = vmatpush1.bf16.msra.mxu0 %v3726
        %5711 = vmatprep.subr.bf16.mxu0 %v3639
        %5712 = vmatpush1.bf16.msra.mxu0 %v3638
        %5713 = vmatprep.subr.bf16.mxu0 %v3551
        %5714 = vmatpush1.bf16.msra.mxu0 %v3550
        %5715 = vmatprep.subr.bf16.mxu0 0
        %5716 = vmatpush2.bf16.msra.mxu0 0
        %5717 = vmatprep.subr.bf16.mxu0 0
        %5718 = vmatpush2.bf16.msra.mxu0 0
        %5719 = vmatprep.subr.bf16.mxu0 0
        %5720 = vmatpush2.bf16.msra.mxu0 0
        %5721 = vmatprep.subr.bf16.mxu0 0
        %5722 = vmatpush2.bf16.msra.mxu0 0
        %5723 = vmatprep.subr.bf16.mxu0 0
        %5724 = vmatpush2.bf16.msra.mxu0 0
        %5725 = vmatprep.subr.bf16.mxu0 0
        %5726 = vmatpush2.bf16.msra.mxu0 0
        %5727 = vmatprep.subr.bf16.mxu0 0
        %5728 = vmatpush2.bf16.msra.mxu0 0
        %5729 = vmatprep.subr.bf16.mxu0 0
        %5730 = vmatpush2.bf16.msra.mxu0 0
        %5731 = vmatprep.mubr.bf16.mxu0 0
        %5732 = vmatmul.mubr.bf16.gmra.mxu0 %v233
        %v5733 = vpop.f32.mrf.mxu0
        %v5734 = vadd.f32 %v1115, %v5733
        %v5735 = vpop.f32.mrf.mxu0
        %v5736 = vadd.f32 %v1119, %v5735
        %v5737 = vpop.f32.mrf.mxu0
        %v5738 = vpop.f32.mrf.mxu0
        %5739 = vdwg.mxu0
        %5740 = vmatprep.subr.bf16.mxu0 %v4169
        %5741 = vmatpush1.bf16.msra.mxu0 %v4168
        %5742 = vmatprep.subr.bf16.mxu0 %v4081
        %5743 = vmatpush1.bf16.msra.mxu0 %v4080
        %5744 = vmatprep.subr.bf16.mxu0 %v3993
        %5745 = vmatpush1.bf16.msra.mxu0 %v3992
        %5746 = vmatprep.subr.bf16.mxu0 %v3905
        %5747 = vmatpush1.bf16.msra.mxu0 %v3904
        %5748 = vmatprep.subr.bf16.mxu0 %v3817
        %5749 = vmatpush1.bf16.msra.mxu0 %v3816
        %5750 = vmatprep.subr.bf16.mxu0 %v3729
        %5751 = vmatpush1.bf16.msra.mxu0 %v3728
        %5752 = vmatprep.subr.bf16.mxu0 %v3641
        %5753 = vmatpush1.bf16.msra.mxu0 %v3640
        %5754 = vmatprep.subr.bf16.mxu0 %v3553
        %5755 = vmatpush1.bf16.msra.mxu0 %v3552
        %5756 = vmatprep.subr.bf16.mxu0 0
        %5757 = vmatpush2.bf16.msra.mxu0 0
        %5758 = vmatprep.subr.bf16.mxu0 0
        %5759 = vmatpush2.bf16.msra.mxu0 0
        %5760 = vmatprep.subr.bf16.mxu0 0
        %5761 = vmatpush2.bf16.msra.mxu0 0
        %5762 = vmatprep.subr.bf16.mxu0 0
        %5763 = vmatpush2.bf16.msra.mxu0 0
        %5764 = vmatprep.subr.bf16.mxu0 0
        %5765 = vmatpush2.bf16.msra.mxu0 0
        %5766 = vmatprep.subr.bf16.mxu0 0
        %5767 = vmatpush2.bf16.msra.mxu0 0
        %5768 = vmatprep.subr.bf16.mxu0 0
        %5769 = vmatpush2.bf16.msra.mxu0 0
        %5770 = vmatprep.subr.bf16.mxu0 0
        %5771 = vmatpush2.bf16.msra.mxu0 0
        %5772 = vmatprep.mubr.bf16.mxu0 0
        %5773 = vmatmul.mubr.bf16.gmra.mxu0 %v233
        %v5774 = vpop.f32.mrf.mxu0
        %v5775 = vadd.f32 %v1123, %v5774
        %v5776 = vpop.f32.mrf.mxu0
        %v5777 = vadd.f32 %v1127, %v5776
        %v5778 = vpop.f32.mrf.mxu0
        %v5779 = vpop.f32.mrf.mxu0
        %5780 = vdwg.mxu0
        %5781 = vmatprep.subr.bf16.mxu0 %v4171
        %5782 = vmatpush1.bf16.msra.mxu0 %v4170
        %5783 = vmatprep.subr.bf16.mxu0 %v4083
        %5784 = vmatpush1.bf16.msra.mxu0 %v4082
        %5785 = vmatprep.subr.bf16.mxu0 %v3995
        %5786 = vmatpush1.bf16.msra.mxu0 %v3994
        %5787 = vmatprep.subr.bf16.mxu0 %v3907
        %5788 = vmatpush1.bf16.msra.mxu0 %v3906
        %5789 = vmatprep.subr.bf16.mxu0 %v3819
        %5790 = vmatpush1.bf16.msra.mxu0 %v3818
        %5791 = vmatprep.subr.bf16.mxu0 %v3731
        %5792 = vmatpush1.bf16.msra.mxu0 %v3730
        %5793 = vmatprep.subr.bf16.mxu0 %v3643
        %5794 = vmatpush1.bf16.msra.mxu0 %v3642
        %5795 = vmatprep.subr.bf16.mxu0 %v3555
        %5796 = vmatpush1.bf16.msra.mxu0 %v3554
        %5797 = vmatprep.subr.bf16.mxu0 0
        %5798 = vmatpush2.bf16.msra.mxu0 0
        %5799 = vmatprep.subr.bf16.mxu0 0
        %5800 = vmatpush2.bf16.msra.mxu0 0
        %5801 = vmatprep.subr.bf16.mxu0 0
        %5802 = vmatpush2.bf16.msra.mxu0 0
        %5803 = vmatprep.subr.bf16.mxu0 0
        %5804 = vmatpush2.bf16.msra.mxu0 0
        %5805 = vmatprep.subr.bf16.mxu0 0
        %5806 = vmatpush2.bf16.msra.mxu0 0
        %5807 = vmatprep.subr.bf16.mxu0 0
        %5808 = vmatpush2.bf16.msra.mxu0 0
        %5809 = vmatprep.subr.bf16.mxu0 0
        %5810 = vmatpush2.bf16.msra.mxu0 0
        %5811 = vmatprep.subr.bf16.mxu0 0
        %5812 = vmatpush2.bf16.msra.mxu0 0
        %5813 = vmatprep.mubr.bf16.mxu0 0
        %5814 = vmatmul.mubr.bf16.gmra.mxu0 %v233
        %v5815 = vpop.f32.mrf.mxu0
        %v5816 = vadd.f32 %v1131, %v5815
        %v5817 = vpop.f32.mrf.mxu0
        %v5818 = vadd.f32 %v1135, %v5817
        %v5819 = vpop.f32.mrf.mxu0
        %v5820 = vpop.f32.mrf.mxu0
        %5821 = vdwg.mxu0
        %5822 = vmatprep.subr.bf16.mxu0 %v4173
        %5823 = vmatpush1.bf16.msra.mxu0 %v4172
        %5824 = vmatprep.subr.bf16.mxu0 %v4085
        %5825 = vmatpush1.bf16.msra.mxu0 %v4084
        %5826 = vmatprep.subr.bf16.mxu0 %v3997
        %5827 = vmatpush1.bf16.msra.mxu0 %v3996
        %5828 = vmatprep.subr.bf16.mxu0 %v3909
        %5829 = vmatpush1.bf16.msra.mxu0 %v3908
        %5830 = vmatprep.subr.bf16.mxu0 %v3821
        %5831 = vmatpush1.bf16.msra.mxu0 %v3820
        %5832 = vmatprep.subr.bf16.mxu0 %v3733
        %5833 = vmatpush1.bf16.msra.mxu0 %v3732
        %5834 = vmatprep.subr.bf16.mxu0 %v3645
        %5835 = vmatpush1.bf16.msra.mxu0 %v3644
        %5836 = vmatprep.subr.bf16.mxu0 %v3557
        %5837 = vmatpush1.bf16.msra.mxu0 %v3556
        %5838 = vmatprep.subr.bf16.mxu0 0
        %5839 = vmatpush2.bf16.msra.mxu0 0
        %5840 = vmatprep.subr.bf16.mxu0 0
        %5841 = vmatpush2.bf16.msra.mxu0 0
        %5842 = vmatprep.subr.bf16.mxu0 0
        %5843 = vmatpush2.bf16.msra.mxu0 0
        %5844 = vmatprep.subr.bf16.mxu0 0
        %5845 = vmatpush2.bf16.msra.mxu0 0
        %5846 = vmatprep.subr.bf16.mxu0 0
        %5847 = vmatpush2.bf16.msra.mxu0 0
        %5848 = vmatprep.subr.bf16.mxu0 0
        %5849 = vmatpush2.bf16.msra.mxu0 0
        %5850 = vmatprep.subr.bf16.mxu0 0
        %5851 = vmatpush2.bf16.msra.mxu0 0
        %5852 = vmatprep.subr.bf16.mxu0 0
        %5853 = vmatpush2.bf16.msra.mxu0 0
        %5854 = vmatprep.mubr.bf16.mxu0 0
        %5855 = vmatmul.mubr.bf16.gmra.mxu0 %v233
        %v5856 = vpop.f32.mrf.mxu0
        %v5857 = vadd.f32 %v1139, %v5856
        %v5858 = vpop.f32.mrf.mxu0
        %v5859 = vadd.f32 %v1143, %v5858
        %v5860 = vpop.f32.mrf.mxu0
        %v5861 = vpop.f32.mrf.mxu0
        %5862 = vdwg.mxu0
        %5863 = vmatprep.subr.bf16.mxu0 %v4175
        %5864 = vmatpush1.bf16.msra.mxu0 %v4174
        %5865 = vmatprep.subr.bf16.mxu0 %v4087
        %5866 = vmatpush1.bf16.msra.mxu0 %v4086
        %5867 = vmatprep.subr.bf16.mxu0 %v3999
        %5868 = vmatpush1.bf16.msra.mxu0 %v3998
        %5869 = vmatprep.subr.bf16.mxu0 %v3911
        %5870 = vmatpush1.bf16.msra.mxu0 %v3910
        %5871 = vmatprep.subr.bf16.mxu0 %v3823
        %5872 = vmatpush1.bf16.msra.mxu0 %v3822
        %5873 = vmatprep.subr.bf16.mxu0 %v3735
        %5874 = vmatpush1.bf16.msra.mxu0 %v3734
        %5875 = vmatprep.subr.bf16.mxu0 %v3647
        %5876 = vmatpush1.bf16.msra.mxu0 %v3646
        %5877 = vmatprep.subr.bf16.mxu0 %v3559
        %5878 = vmatpush1.bf16.msra.mxu0 %v3558
        %5879 = vmatprep.subr.bf16.mxu0 0
        %5880 = vmatpush2.bf16.msra.mxu0 0
        %5881 = vmatprep.subr.bf16.mxu0 0
        %5882 = vmatpush2.bf16.msra.mxu0 0
        %5883 = vmatprep.subr.bf16.mxu0 0
        %5884 = vmatpush2.bf16.msra.mxu0 0
        %5885 = vmatprep.subr.bf16.mxu0 0
        %5886 = vmatpush2.bf16.msra.mxu0 0
        %5887 = vmatprep.subr.bf16.mxu0 0
        %5888 = vmatpush2.bf16.msra.mxu0 0
        %5889 = vmatprep.subr.bf16.mxu0 0
        %5890 = vmatpush2.bf16.msra.mxu0 0
        %5891 = vmatprep.subr.bf16.mxu0 0
        %5892 = vmatpush2.bf16.msra.mxu0 0
        %5893 = vmatprep.subr.bf16.mxu0 0
        %5894 = vmatpush2.bf16.msra.mxu0 0
        %5895 = vmatprep.mubr.bf16.mxu0 0
        %5896 = vmatmul.mubr.bf16.gmra.mxu0 %v233
        %v5897 = vpop.f32.mrf.mxu0
        %v5898 = vadd.f32 %v1147, %v5897
        %v5899 = vpop.f32.mrf.mxu0
        %v5900 = vadd.f32 %v1151, %v5899
        %v5901 = vpop.f32.mrf.mxu0
        %v5902 = vpop.f32.mrf.mxu0
        %5903 = vdwg.mxu0
        %5904 = vmatprep.subr.bf16.mxu0 %v4177
        %5905 = vmatpush1.bf16.msra.mxu0 %v4176
        %5906 = vmatprep.subr.bf16.mxu0 %v4089
        %5907 = vmatpush1.bf16.msra.mxu0 %v4088
        %5908 = vmatprep.subr.bf16.mxu0 %v4001
        %5909 = vmatpush1.bf16.msra.mxu0 %v4000
        %5910 = vmatprep.subr.bf16.mxu0 %v3913
        %5911 = vmatpush1.bf16.msra.mxu0 %v3912
        %5912 = vmatprep.subr.bf16.mxu0 %v3825
        %5913 = vmatpush1.bf16.msra.mxu0 %v3824
        %5914 = vmatprep.subr.bf16.mxu0 %v3737
        %5915 = vmatpush1.bf16.msra.mxu0 %v3736
        %5916 = vmatprep.subr.bf16.mxu0 %v3649
        %5917 = vmatpush1.bf16.msra.mxu0 %v3648
        %5918 = vmatprep.subr.bf16.mxu0 %v3561
        %5919 = vmatpush1.bf16.msra.mxu0 %v3560
        %5920 = vmatprep.subr.bf16.mxu0 0
        %5921 = vmatpush2.bf16.msra.mxu0 0
        %5922 = vmatprep.subr.bf16.mxu0 0
        %5923 = vmatpush2.bf16.msra.mxu0 0
        %5924 = vmatprep.subr.bf16.mxu0 0
        %5925 = vmatpush2.bf16.msra.mxu0 0
        %5926 = vmatprep.subr.bf16.mxu0 0
        %5927 = vmatpush2.bf16.msra.mxu0 0
        %5928 = vmatprep.subr.bf16.mxu0 0
        %5929 = vmatpush2.bf16.msra.mxu0 0
        %5930 = vmatprep.subr.bf16.mxu0 0
        %5931 = vmatpush2.bf16.msra.mxu0 0
        %5932 = vmatprep.subr.bf16.mxu0 0
        %5933 = vmatpush2.bf16.msra.mxu0 0
        %5934 = vmatprep.subr.bf16.mxu0 0
        %5935 = vmatpush2.bf16.msra.mxu0 0
        %5936 = vmatprep.mubr.bf16.mxu0 0
        %5937 = vmatmul.mubr.bf16.gmra.mxu0 %v233
        %v5938 = vpop.f32.mrf.mxu0
        %v5939 = vadd.f32 %v1155, %v5938
        %v5940 = vpop.f32.mrf.mxu0
        %v5941 = vadd.f32 %v1159, %v5940
        %v5942 = vpop.f32.mrf.mxu0
        %v5943 = vpop.f32.mrf.mxu0
        %5944 = vdwg.mxu0
        %5945 = vmatprep.subr.bf16.mxu0 %v4179
        %5946 = vmatpush1.bf16.msra.mxu0 %v4178
        %5947 = vmatprep.subr.bf16.mxu0 %v4091
        %5948 = vmatpush1.bf16.msra.mxu0 %v4090
        %5949 = vmatprep.subr.bf16.mxu0 %v4003
        %5950 = vmatpush1.bf16.msra.mxu0 %v4002
        %5951 = vmatprep.subr.bf16.mxu0 %v3915
        %5952 = vmatpush1.bf16.msra.mxu0 %v3914
        %5953 = vmatprep.subr.bf16.mxu0 %v3827
        %5954 = vmatpush1.bf16.msra.mxu0 %v3826
        %5955 = vmatprep.subr.bf16.mxu0 %v3739
        %5956 = vmatpush1.bf16.msra.mxu0 %v3738
        %5957 = vmatprep.subr.bf16.mxu0 %v3651
        %5958 = vmatpush1.bf16.msra.mxu0 %v3650
        %5959 = vmatprep.subr.bf16.mxu0 %v3563
        %5960 = vmatpush1.bf16.msra.mxu0 %v3562
        %5961 = vmatprep.subr.bf16.mxu0 0
        %5962 = vmatpush2.bf16.msra.mxu0 0
        %5963 = vmatprep.subr.bf16.mxu0 0
        %5964 = vmatpush2.bf16.msra.mxu0 0
        %5965 = vmatprep.subr.bf16.mxu0 0
        %5966 = vmatpush2.bf16.msra.mxu0 0
        %5967 = vmatprep.subr.bf16.mxu0 0
        %5968 = vmatpush2.bf16.msra.mxu0 0
        %5969 = vmatprep.subr.bf16.mxu0 0
        %5970 = vmatpush2.bf16.msra.mxu0 0
        %5971 = vmatprep.subr.bf16.mxu0 0
        %5972 = vmatpush2.bf16.msra.mxu0 0
        %5973 = vmatprep.subr.bf16.mxu0 0
        %5974 = vmatpush2.bf16.msra.mxu0 0
        %5975 = vmatprep.subr.bf16.mxu0 0
        %5976 = vmatpush2.bf16.msra.mxu0 0
        %5977 = vmatprep.mubr.bf16.mxu0 0
        %5978 = vmatmul.mubr.bf16.gmra.mxu0 %v233
        %v5979 = vpop.f32.mrf.mxu0
        %v5980 = vadd.f32 %v1163, %v5979
        %v5981 = vpop.f32.mrf.mxu0
        %v5982 = vadd.f32 %v1167, %v5981
        %v5983 = vpop.f32.mrf.mxu0
        %v5984 = vpop.f32.mrf.mxu0
        %5985 = vdwg.mxu0
        %5986 = vmatprep.subr.bf16.mxu0 %v4181
        %5987 = vmatpush1.bf16.msra.mxu0 %v4180
        %5988 = vmatprep.subr.bf16.mxu0 %v4093
        %5989 = vmatpush1.bf16.msra.mxu0 %v4092
        %5990 = vmatprep.subr.bf16.mxu0 %v4005
        %5991 = vmatpush1.bf16.msra.mxu0 %v4004
        %5992 = vmatprep.subr.bf16.mxu0 %v3917
        %5993 = vmatpush1.bf16.msra.mxu0 %v3916
        %5994 = vmatprep.subr.bf16.mxu0 %v3829
        %5995 = vmatpush1.bf16.msra.mxu0 %v3828
        %5996 = vmatprep.subr.bf16.mxu0 %v3741
        %5997 = vmatpush1.bf16.msra.mxu0 %v3740
        %5998 = vmatprep.subr.bf16.mxu0 %v3653
        %5999 = vmatpush1.bf16.msra.mxu0 %v3652
        %6000 = vmatprep.subr.bf16.mxu0 %v3565
        %6001 = vmatpush1.bf16.msra.mxu0 %v3564
        %6002 = vmatprep.subr.bf16.mxu0 0
        %6003 = vmatpush2.bf16.msra.mxu0 0
        %6004 = vmatprep.subr.bf16.mxu0 0
        %6005 = vmatpush2.bf16.msra.mxu0 0
        %6006 = vmatprep.subr.bf16.mxu0 0
        %6007 = vmatpush2.bf16.msra.mxu0 0
        %6008 = vmatprep.subr.bf16.mxu0 0
        %6009 = vmatpush2.bf16.msra.mxu0 0
        %6010 = vmatprep.subr.bf16.mxu0 0
        %6011 = vmatpush2.bf16.msra.mxu0 0
        %6012 = vmatprep.subr.bf16.mxu0 0
        %6013 = vmatpush2.bf16.msra.mxu0 0
        %6014 = vmatprep.subr.bf16.mxu0 0
        %6015 = vmatpush2.bf16.msra.mxu0 0
        %6016 = vmatprep.subr.bf16.mxu0 0
        %6017 = vmatpush2.bf16.msra.mxu0 0
        %6018 = vmatprep.mubr.bf16.mxu0 0
        %6019 = vmatmul.mubr.bf16.gmra.mxu0 %v233
        %v6020 = vpop.f32.mrf.mxu0
        %v6021 = vadd.f32 %v1171, %v6020
        %v6022 = vpop.f32.mrf.mxu0
        %v6023 = vadd.f32 %v1175, %v6022
        %v6024 = vpop.f32.mrf.mxu0
        %v6025 = vpop.f32.mrf.mxu0
        %6026 = vdwg.mxu0
        %6027 = vmatprep.subr.bf16.mxu0 %v4183
        %6028 = vmatpush1.bf16.msra.mxu0 %v4182
        %6029 = vmatprep.subr.bf16.mxu0 %v4095
        %6030 = vmatpush1.bf16.msra.mxu0 %v4094
        %6031 = vmatprep.subr.bf16.mxu0 %v4007
        %6032 = vmatpush1.bf16.msra.mxu0 %v4006
        %6033 = vmatprep.subr.bf16.mxu0 %v3919
        %6034 = vmatpush1.bf16.msra.mxu0 %v3918
        %6035 = vmatprep.subr.bf16.mxu0 %v3831
        %6036 = vmatpush1.bf16.msra.mxu0 %v3830
        %6037 = vmatprep.subr.bf16.mxu0 %v3743
        %6038 = vmatpush1.bf16.msra.mxu0 %v3742
        %6039 = vmatprep.subr.bf16.mxu0 %v3655
        %6040 = vmatpush1.bf16.msra.mxu0 %v3654
        %6041 = vmatprep.subr.bf16.mxu0 %v3567
        %6042 = vmatpush1.bf16.msra.mxu0 %v3566
        %6043 = vmatprep.subr.bf16.mxu0 0
        %6044 = vmatpush2.bf16.msra.mxu0 0
        %6045 = vmatprep.subr.bf16.mxu0 0
        %6046 = vmatpush2.bf16.msra.mxu0 0
        %6047 = vmatprep.subr.bf16.mxu0 0
        %6048 = vmatpush2.bf16.msra.mxu0 0
        %6049 = vmatprep.subr.bf16.mxu0 0
        %6050 = vmatpush2.bf16.msra.mxu0 0
        %6051 = vmatprep.subr.bf16.mxu0 0
        %6052 = vmatpush2.bf16.msra.mxu0 0
        %6053 = vmatprep.subr.bf16.mxu0 0
        %6054 = vmatpush2.bf16.msra.mxu0 0
        %6055 = vmatprep.subr.bf16.mxu0 0
        %6056 = vmatpush2.bf16.msra.mxu0 0
        %6057 = vmatprep.subr.bf16.mxu0 0
        %6058 = vmatpush2.bf16.msra.mxu0 0
        %6059 = vmatprep.mubr.bf16.mxu0 0
        %6060 = vmatmul.mubr.bf16.gmra.mxu0 %v233
        %v6061 = vpop.f32.mrf.mxu0
        %v6062 = vadd.f32 %v1179, %v6061
        %v6063 = vpop.f32.mrf.mxu0
        %v6064 = vadd.f32 %v1183, %v6063
        %v6065 = vpop.f32.mrf.mxu0
        %v6066 = vpop.f32.mrf.mxu0
        %6067 = vdwg.mxu0
        %6068 = vmatprep.subr.bf16.mxu0 %v4185
        %6069 = vmatpush1.bf16.msra.mxu0 %v4184
        %6070 = vmatprep.subr.bf16.mxu0 %v4097
        %6071 = vmatpush1.bf16.msra.mxu0 %v4096
        %6072 = vmatprep.subr.bf16.mxu0 %v4009
        %6073 = vmatpush1.bf16.msra.mxu0 %v4008
        %6074 = vmatprep.subr.bf16.mxu0 %v3921
        %6075 = vmatpush1.bf16.msra.mxu0 %v3920
        %6076 = vmatprep.subr.bf16.mxu0 %v3833
        %6077 = vmatpush1.bf16.msra.mxu0 %v3832
        %6078 = vmatprep.subr.bf16.mxu0 %v3745
        %6079 = vmatpush1.bf16.msra.mxu0 %v3744
        %6080 = vmatprep.subr.bf16.mxu0 %v3657
        %6081 = vmatpush1.bf16.msra.mxu0 %v3656
        %6082 = vmatprep.subr.bf16.mxu0 %v3569
        %6083 = vmatpush1.bf16.msra.mxu0 %v3568
        %6084 = vmatprep.subr.bf16.mxu0 0
        %6085 = vmatpush2.bf16.msra.mxu0 0
        %6086 = vmatprep.subr.bf16.mxu0 0
        %6087 = vmatpush2.bf16.msra.mxu0 0
        %6088 = vmatprep.subr.bf16.mxu0 0
        %6089 = vmatpush2.bf16.msra.mxu0 0
        %6090 = vmatprep.subr.bf16.mxu0 0
        %6091 = vmatpush2.bf16.msra.mxu0 0
        %6092 = vmatprep.subr.bf16.mxu0 0
        %6093 = vmatpush2.bf16.msra.mxu0 0
        %6094 = vmatprep.subr.bf16.mxu0 0
        %6095 = vmatpush2.bf16.msra.mxu0 0
        %6096 = vmatprep.subr.bf16.mxu0 0
        %6097 = vmatpush2.bf16.msra.mxu0 0
        %6098 = vmatprep.subr.bf16.mxu0 0
        %6099 = vmatpush2.bf16.msra.mxu0 0
        %6100 = vmatprep.mubr.bf16.mxu0 0
        %6101 = vmatmul.mubr.bf16.gmra.mxu0 %v233
        %v6102 = vpop.f32.mrf.mxu0
        %v6103 = vadd.f32 %v1187, %v6102
        %v6104 = vpop.f32.mrf.mxu0
        %v6105 = vadd.f32 %v1191, %v6104
        %v6106 = vpop.f32.mrf.mxu0
        %v6107 = vpop.f32.mrf.mxu0
        %6108 = vdwg.mxu0
        %6109 = vmatprep.subr.bf16.mxu0 %v4187
        %6110 = vmatpush1.bf16.msra.mxu0 %v4186
        %6111 = vmatprep.subr.bf16.mxu0 %v4099
        %6112 = vmatpush1.bf16.msra.mxu0 %v4098
        %6113 = vmatprep.subr.bf16.mxu0 %v4011
        %6114 = vmatpush1.bf16.msra.mxu0 %v4010
        %6115 = vmatprep.subr.bf16.mxu0 %v3923
        %6116 = vmatpush1.bf16.msra.mxu0 %v3922
        %6117 = vmatprep.subr.bf16.mxu0 %v3835
        %6118 = vmatpush1.bf16.msra.mxu0 %v3834
        %6119 = vmatprep.subr.bf16.mxu0 %v3747
        %6120 = vmatpush1.bf16.msra.mxu0 %v3746
        %6121 = vmatprep.subr.bf16.mxu0 %v3659
        %6122 = vmatpush1.bf16.msra.mxu0 %v3658
        %6123 = vmatprep.subr.bf16.mxu0 %v3571
        %6124 = vmatpush1.bf16.msra.mxu0 %v3570
        %6125 = vmatprep.subr.bf16.mxu0 0
        %6126 = vmatpush2.bf16.msra.mxu0 0
        %6127 = vmatprep.subr.bf16.mxu0 0
        %6128 = vmatpush2.bf16.msra.mxu0 0
        %6129 = vmatprep.subr.bf16.mxu0 0
        %6130 = vmatpush2.bf16.msra.mxu0 0
        %6131 = vmatprep.subr.bf16.mxu0 0
        %6132 = vmatpush2.bf16.msra.mxu0 0
        %6133 = vmatprep.subr.bf16.mxu0 0
        %6134 = vmatpush2.bf16.msra.mxu0 0
        %6135 = vmatprep.subr.bf16.mxu0 0
        %6136 = vmatpush2.bf16.msra.mxu0 0
        %6137 = vmatprep.subr.bf16.mxu0 0
        %6138 = vmatpush2.bf16.msra.mxu0 0
        %6139 = vmatprep.subr.bf16.mxu0 0
        %6140 = vmatpush2.bf16.msra.mxu0 0
        %6141 = vmatprep.mubr.bf16.mxu0 0
        %6142 = vmatmul.mubr.bf16.gmra.mxu0 %v233
        %v6143 = vpop.f32.mrf.mxu0
        %v6144 = vadd.f32 %v1195, %v6143
        %v6145 = vpop.f32.mrf.mxu0
        %v6146 = vadd.f32 %v1199, %v6145
        %v6147 = vpop.f32.mrf.mxu0
        %v6148 = vpop.f32.mrf.mxu0
        %6149 = vdwg.mxu0
        %6150 = vmatprep.subr.bf16.mxu0 %v4189
        %6151 = vmatpush1.bf16.msra.mxu0 %v4188
        %6152 = vmatprep.subr.bf16.mxu0 %v4101
        %6153 = vmatpush1.bf16.msra.mxu0 %v4100
        %6154 = vmatprep.subr.bf16.mxu0 %v4013
        %6155 = vmatpush1.bf16.msra.mxu0 %v4012
        %6156 = vmatprep.subr.bf16.mxu0 %v3925
        %6157 = vmatpush1.bf16.msra.mxu0 %v3924
        %6158 = vmatprep.subr.bf16.mxu0 %v3837
        %6159 = vmatpush1.bf16.msra.mxu0 %v3836
        %6160 = vmatprep.subr.bf16.mxu0 %v3749
        %6161 = vmatpush1.bf16.msra.mxu0 %v3748
        %6162 = vmatprep.subr.bf16.mxu0 %v3661
        %6163 = vmatpush1.bf16.msra.mxu0 %v3660
        %6164 = vmatprep.subr.bf16.mxu0 %v3573
        %6165 = vmatpush1.bf16.msra.mxu0 %v3572
        %6166 = vmatprep.subr.bf16.mxu0 0
        %6167 = vmatpush2.bf16.msra.mxu0 0
        %6168 = vmatprep.subr.bf16.mxu0 0
        %6169 = vmatpush2.bf16.msra.mxu0 0
        %6170 = vmatprep.subr.bf16.mxu0 0
        %6171 = vmatpush2.bf16.msra.mxu0 0
        %6172 = vmatprep.subr.bf16.mxu0 0
        %6173 = vmatpush2.bf16.msra.mxu0 0
        %6174 = vmatprep.subr.bf16.mxu0 0
        %6175 = vmatpush2.bf16.msra.mxu0 0
        %6176 = vmatprep.subr.bf16.mxu0 0
        %6177 = vmatpush2.bf16.msra.mxu0 0
        %6178 = vmatprep.subr.bf16.mxu0 0
        %6179 = vmatpush2.bf16.msra.mxu0 0
        %6180 = vmatprep.subr.bf16.mxu0 0
        %6181 = vmatpush2.bf16.msra.mxu0 0
        %6182 = vmatprep.mubr.bf16.mxu0 0
        %6183 = vmatmul.mubr.bf16.gmra.mxu0 %v233
        %v6184 = vpop.f32.mrf.mxu0
        %v6185 = vadd.f32 %v1203, %v6184
        %v6186 = vpop.f32.mrf.mxu0
        %v6187 = vadd.f32 %v1207, %v6186
        %v6188 = vpop.f32.mrf.mxu0
        %v6189 = vpop.f32.mrf.mxu0
        %6190 = vdwg.mxu0
        %6191 = vmatprep.subr.bf16.mxu0 %v4191
        %6192 = vmatpush1.bf16.msra.mxu0 %v4190
        %6193 = vmatprep.subr.bf16.mxu0 %v4103
        %6194 = vmatpush1.bf16.msra.mxu0 %v4102
        %6195 = vmatprep.subr.bf16.mxu0 %v4015
        %6196 = vmatpush1.bf16.msra.mxu0 %v4014
        %6197 = vmatprep.subr.bf16.mxu0 %v3927
        %6198 = vmatpush1.bf16.msra.mxu0 %v3926
        %6199 = vmatprep.subr.bf16.mxu0 %v3839
        %6200 = vmatpush1.bf16.msra.mxu0 %v3838
        %6201 = vmatprep.subr.bf16.mxu0 %v3751
        %6202 = vmatpush1.bf16.msra.mxu0 %v3750
        %6203 = vmatprep.subr.bf16.mxu0 %v3663
        %6204 = vmatpush1.bf16.msra.mxu0 %v3662
        %6205 = vmatprep.subr.bf16.mxu0 %v3575
        %6206 = vmatpush1.bf16.msra.mxu0 %v3574
        %6207 = vmatprep.subr.bf16.mxu0 0
        %6208 = vmatpush2.bf16.msra.mxu0 0
        %6209 = vmatprep.subr.bf16.mxu0 0
        %6210 = vmatpush2.bf16.msra.mxu0 0
        %6211 = vmatprep.subr.bf16.mxu0 0
        %6212 = vmatpush2.bf16.msra.mxu0 0
        %6213 = vmatprep.subr.bf16.mxu0 0
        %6214 = vmatpush2.bf16.msra.mxu0 0
        %6215 = vmatprep.subr.bf16.mxu0 0
        %6216 = vmatpush2.bf16.msra.mxu0 0
        %6217 = vmatprep.subr.bf16.mxu0 0
        %6218 = vmatpush2.bf16.msra.mxu0 0
        %6219 = vmatprep.subr.bf16.mxu0 0
        %6220 = vmatpush2.bf16.msra.mxu0 0
        %6221 = vmatprep.subr.bf16.mxu0 0
        %6222 = vmatpush2.bf16.msra.mxu0 0
        %6223 = vmatprep.mubr.bf16.mxu0 0
        %6224 = vmatmul.mubr.bf16.gmra.mxu0 %v233
        %v6225 = vpop.f32.mrf.mxu0
        %v6226 = vadd.f32 %v1211, %v6225
        %v6227 = vpop.f32.mrf.mxu0
        %v6228 = vadd.f32 %v1215, %v6227
        %v6229 = vpop.f32.mrf.mxu0
        %v6230 = vpop.f32.mrf.mxu0
        %6231 = vdwg.mxu0
        %6232 = vmatprep.subr.bf16.mxu0 %v4193
        %6233 = vmatpush1.bf16.msra.mxu0 %v4192
        %6234 = vmatprep.subr.bf16.mxu0 %v4105
        %6235 = vmatpush1.bf16.msra.mxu0 %v4104
        %6236 = vmatprep.subr.bf16.mxu0 %v4017
        %6237 = vmatpush1.bf16.msra.mxu0 %v4016
        %6238 = vmatprep.subr.bf16.mxu0 %v3929
        %6239 = vmatpush1.bf16.msra.mxu0 %v3928
        %6240 = vmatprep.subr.bf16.mxu0 %v3841
        %6241 = vmatpush1.bf16.msra.mxu0 %v3840
        %6242 = vmatprep.subr.bf16.mxu0 %v3753
        %6243 = vmatpush1.bf16.msra.mxu0 %v3752
        %6244 = vmatprep.subr.bf16.mxu0 %v3665
        %6245 = vmatpush1.bf16.msra.mxu0 %v3664
        %6246 = vmatprep.subr.bf16.mxu0 %v3577
        %6247 = vmatpush1.bf16.msra.mxu0 %v3576
        %6248 = vmatprep.subr.bf16.mxu0 0
        %6249 = vmatpush2.bf16.msra.mxu0 0
        %6250 = vmatprep.subr.bf16.mxu0 0
        %6251 = vmatpush2.bf16.msra.mxu0 0
        %6252 = vmatprep.subr.bf16.mxu0 0
        %6253 = vmatpush2.bf16.msra.mxu0 0
        %6254 = vmatprep.subr.bf16.mxu0 0
        %6255 = vmatpush2.bf16.msra.mxu0 0
        %6256 = vmatprep.subr.bf16.mxu0 0
        %6257 = vmatpush2.bf16.msra.mxu0 0
        %6258 = vmatprep.subr.bf16.mxu0 0
        %6259 = vmatpush2.bf16.msra.mxu0 0
        %6260 = vmatprep.subr.bf16.mxu0 0
        %6261 = vmatpush2.bf16.msra.mxu0 0
        %6262 = vmatprep.subr.bf16.mxu0 0
        %6263 = vmatpush2.bf16.msra.mxu0 0
        %6264 = vmatprep.mubr.bf16.mxu0 0
        %6265 = vmatmul.mubr.bf16.gmra.mxu0 %v233
        %v6266 = vpop.f32.mrf.mxu0
        %v6267 = vadd.f32 %v1219, %v6266
        %v6268 = vpop.f32.mrf.mxu0
        %v6269 = vadd.f32 %v1223, %v6268
        %v6270 = vpop.f32.mrf.mxu0
        %v6271 = vpop.f32.mrf.mxu0
        %6272 = vdwg.mxu0
        %6273 = vmatprep.subr.bf16.mxu0 %v4195
        %6274 = vmatpush1.bf16.msra.mxu0 %v4194
        %6275 = vmatprep.subr.bf16.mxu0 %v4107
        %6276 = vmatpush1.bf16.msra.mxu0 %v4106
        %6277 = vmatprep.subr.bf16.mxu0 %v4019
        %6278 = vmatpush1.bf16.msra.mxu0 %v4018
        %6279 = vmatprep.subr.bf16.mxu0 %v3931
        %6280 = vmatpush1.bf16.msra.mxu0 %v3930
        %6281 = vmatprep.subr.bf16.mxu0 %v3843
        %6282 = vmatpush1.bf16.msra.mxu0 %v3842
        %6283 = vmatprep.subr.bf16.mxu0 %v3755
        %6284 = vmatpush1.bf16.msra.mxu0 %v3754
        %6285 = vmatprep.subr.bf16.mxu0 %v3667
        %6286 = vmatpush1.bf16.msra.mxu0 %v3666
        %6287 = vmatprep.subr.bf16.mxu0 %v3579
        %6288 = vmatpush1.bf16.msra.mxu0 %v3578
        %6289 = vmatprep.subr.bf16.mxu0 0
        %6290 = vmatpush2.bf16.msra.mxu0 0
        %6291 = vmatprep.subr.bf16.mxu0 0
        %6292 = vmatpush2.bf16.msra.mxu0 0
        %6293 = vmatprep.subr.bf16.mxu0 0
        %6294 = vmatpush2.bf16.msra.mxu0 0
        %6295 = vmatprep.subr.bf16.mxu0 0
        %6296 = vmatpush2.bf16.msra.mxu0 0
        %6297 = vmatprep.subr.bf16.mxu0 0
        %6298 = vmatpush2.bf16.msra.mxu0 0
        %6299 = vmatprep.subr.bf16.mxu0 0
        %6300 = vmatpush2.bf16.msra.mxu0 0
        %6301 = vmatprep.subr.bf16.mxu0 0
        %6302 = vmatpush2.bf16.msra.mxu0 0
        %6303 = vmatprep.subr.bf16.mxu0 0
        %6304 = vmatpush2.bf16.msra.mxu0 0
        %6305 = vmatprep.mubr.bf16.mxu0 0
        %6306 = vmatmul.mubr.bf16.gmra.mxu0 %v233
        %v6307 = vpop.f32.mrf.mxu0
        %v6308 = vadd.f32 %v1227, %v6307
        %v6309 = vpop.f32.mrf.mxu0
        %v6310 = vadd.f32 %v1231, %v6309
        %v6311 = vpop.f32.mrf.mxu0
        %v6312 = vpop.f32.mrf.mxu0
        %6313 = vdwg.mxu0
        %6314 = vmatprep.subr.bf16.mxu0 %v4197
        %6315 = vmatpush1.bf16.msra.mxu0 %v4196
        %6316 = vmatprep.subr.bf16.mxu0 %v4109
        %6317 = vmatpush1.bf16.msra.mxu0 %v4108
        %6318 = vmatprep.subr.bf16.mxu0 %v4021
        %6319 = vmatpush1.bf16.msra.mxu0 %v4020
        %6320 = vmatprep.subr.bf16.mxu0 %v3933
        %6321 = vmatpush1.bf16.msra.mxu0 %v3932
        %6322 = vmatprep.subr.bf16.mxu0 %v3845
        %6323 = vmatpush1.bf16.msra.mxu0 %v3844
        %6324 = vmatprep.subr.bf16.mxu0 %v3757
        %6325 = vmatpush1.bf16.msra.mxu0 %v3756
        %6326 = vmatprep.subr.bf16.mxu0 %v3669
        %6327 = vmatpush1.bf16.msra.mxu0 %v3668
        %6328 = vmatprep.subr.bf16.mxu0 %v3581
        %6329 = vmatpush1.bf16.msra.mxu0 %v3580
        %6330 = vmatprep.subr.bf16.mxu0 0
        %6331 = vmatpush2.bf16.msra.mxu0 0
        %6332 = vmatprep.subr.bf16.mxu0 0
        %6333 = vmatpush2.bf16.msra.mxu0 0
        %6334 = vmatprep.subr.bf16.mxu0 0
        %6335 = vmatpush2.bf16.msra.mxu0 0
        %6336 = vmatprep.subr.bf16.mxu0 0
        %6337 = vmatpush2.bf16.msra.mxu0 0
        %6338 = vmatprep.subr.bf16.mxu0 0
        %6339 = vmatpush2.bf16.msra.mxu0 0
        %6340 = vmatprep.subr.bf16.mxu0 0
        %6341 = vmatpush2.bf16.msra.mxu0 0
        %6342 = vmatprep.subr.bf16.mxu0 0
        %6343 = vmatpush2.bf16.msra.mxu0 0
        %6344 = vmatprep.subr.bf16.mxu0 0
        %6345 = vmatpush2.bf16.msra.mxu0 0
        %6346 = vmatprep.mubr.bf16.mxu0 0
        %6347 = vmatmul.mubr.bf16.gmra.mxu0 %v233
        %v6348 = vpop.f32.mrf.mxu0
        %v6349 = vadd.f32 %v1235, %v6348
        %v6350 = vpop.f32.mrf.mxu0
        %v6351 = vadd.f32 %v1239, %v6350
        %v6352 = vpop.f32.mrf.mxu0
        %v6353 = vpop.f32.mrf.mxu0
        %6354 = vdwg.mxu0
        %6355 = vmatprep.subr.bf16.mxu0 %v4199
        %6356 = vmatpush1.bf16.msra.mxu0 %v4198
        %6357 = vmatprep.subr.bf16.mxu0 %v4111
        %6358 = vmatpush1.bf16.msra.mxu0 %v4110
        %6359 = vmatprep.subr.bf16.mxu0 %v4023
        %6360 = vmatpush1.bf16.msra.mxu0 %v4022
        %6361 = vmatprep.subr.bf16.mxu0 %v3935
        %6362 = vmatpush1.bf16.msra.mxu0 %v3934
        %6363 = vmatprep.subr.bf16.mxu0 %v3847
        %6364 = vmatpush1.bf16.msra.mxu0 %v3846
        %6365 = vmatprep.subr.bf16.mxu0 %v3759
        %6366 = vmatpush1.bf16.msra.mxu0 %v3758
        %6367 = vmatprep.subr.bf16.mxu0 %v3671
        %6368 = vmatpush1.bf16.msra.mxu0 %v3670
        %6369 = vmatprep.subr.bf16.mxu0 %v3583
        %6370 = vmatpush1.bf16.msra.mxu0 %v3582
        %6371 = vmatprep.subr.bf16.mxu0 0
        %6372 = vmatpush2.bf16.msra.mxu0 0
        %6373 = vmatprep.subr.bf16.mxu0 0
        %6374 = vmatpush2.bf16.msra.mxu0 0
        %6375 = vmatprep.subr.bf16.mxu0 0
        %6376 = vmatpush2.bf16.msra.mxu0 0
        %6377 = vmatprep.subr.bf16.mxu0 0
        %6378 = vmatpush2.bf16.msra.mxu0 0
        %6379 = vmatprep.subr.bf16.mxu0 0
        %6380 = vmatpush2.bf16.msra.mxu0 0
        %6381 = vmatprep.subr.bf16.mxu0 0
        %6382 = vmatpush2.bf16.msra.mxu0 0
        %6383 = vmatprep.subr.bf16.mxu0 0
        %6384 = vmatpush2.bf16.msra.mxu0 0
        %6385 = vmatprep.subr.bf16.mxu0 0
        %6386 = vmatpush2.bf16.msra.mxu0 0
        %6387 = vmatprep.mubr.bf16.mxu0 0
        %6388 = vmatmul.mubr.bf16.gmra.mxu0 %v233
        %v6389 = vpop.f32.mrf.mxu0
        %v6390 = vadd.f32 %v1243, %v6389
        %v6391 = vpop.f32.mrf.mxu0
        %v6392 = vadd.f32 %v1247, %v6391
        %v6393 = vpop.f32.mrf.mxu0
        %v6394 = vpop.f32.mrf.mxu0
        %6395 = vdwg.mxu0
        %6396 = vmatprep.subr.bf16.mxu0 %v4201
        %6397 = vmatpush1.bf16.msra.mxu0 %v4200
        %6398 = vmatprep.subr.bf16.mxu0 %v4113
        %6399 = vmatpush1.bf16.msra.mxu0 %v4112
        %6400 = vmatprep.subr.bf16.mxu0 %v4025
        %6401 = vmatpush1.bf16.msra.mxu0 %v4024
        %6402 = vmatprep.subr.bf16.mxu0 %v3937
        %6403 = vmatpush1.bf16.msra.mxu0 %v3936
        %6404 = vmatprep.subr.bf16.mxu0 %v3849
        %6405 = vmatpush1.bf16.msra.mxu0 %v3848
        %6406 = vmatprep.subr.bf16.mxu0 %v3761
        %6407 = vmatpush1.bf16.msra.mxu0 %v3760
        %6408 = vmatprep.subr.bf16.mxu0 %v3673
        %6409 = vmatpush1.bf16.msra.mxu0 %v3672
        %6410 = vmatprep.subr.bf16.mxu0 %v3585
        %6411 = vmatpush1.bf16.msra.mxu0 %v3584
        %6412 = vmatprep.subr.bf16.mxu0 0
        %6413 = vmatpush2.bf16.msra.mxu0 0
        %6414 = vmatprep.subr.bf16.mxu0 0
        %6415 = vmatpush2.bf16.msra.mxu0 0
        %6416 = vmatprep.subr.bf16.mxu0 0
        %6417 = vmatpush2.bf16.msra.mxu0 0
        %6418 = vmatprep.subr.bf16.mxu0 0
        %6419 = vmatpush2.bf16.msra.mxu0 0
        %6420 = vmatprep.subr.bf16.mxu0 0
        %6421 = vmatpush2.bf16.msra.mxu0 0
        %6422 = vmatprep.subr.bf16.mxu0 0
        %6423 = vmatpush2.bf16.msra.mxu0 0
        %6424 = vmatprep.subr.bf16.mxu0 0
        %6425 = vmatpush2.bf16.msra.mxu0 0
        %6426 = vmatprep.subr.bf16.mxu0 0
        %6427 = vmatpush2.bf16.msra.mxu0 0
        %6428 = vmatprep.mubr.bf16.mxu0 0
        %6429 = vmatmul.mubr.bf16.gmra.mxu0 %v233
        %v6430 = vpop.f32.mrf.mxu0
        %v6431 = vadd.f32 %v1251, %v6430
        %v6432 = vpop.f32.mrf.mxu0
        %v6433 = vadd.f32 %v1255, %v6432
        %v6434 = vpop.f32.mrf.mxu0
        %v6435 = vpop.f32.mrf.mxu0
        %6436 = vdwg.mxu0
        %6437 = vmatprep.subr.bf16.mxu0 %v4203
        %6438 = vmatpush1.bf16.msra.mxu0 %v4202
        %6439 = vmatprep.subr.bf16.mxu0 %v4115
        %6440 = vmatpush1.bf16.msra.mxu0 %v4114
        %6441 = vmatprep.subr.bf16.mxu0 %v4027
        %6442 = vmatpush1.bf16.msra.mxu0 %v4026
        %6443 = vmatprep.subr.bf16.mxu0 %v3939
        %6444 = vmatpush1.bf16.msra.mxu0 %v3938
        %6445 = vmatprep.subr.bf16.mxu0 %v3851
        %6446 = vmatpush1.bf16.msra.mxu0 %v3850
        %6447 = vmatprep.subr.bf16.mxu0 %v3763
        %6448 = vmatpush1.bf16.msra.mxu0 %v3762
        %6449 = vmatprep.subr.bf16.mxu0 %v3675
        %6450 = vmatpush1.bf16.msra.mxu0 %v3674
        %6451 = vmatprep.subr.bf16.mxu0 %v3587
        %6452 = vmatpush1.bf16.msra.mxu0 %v3586
        %6453 = vmatprep.subr.bf16.mxu0 0
        %6454 = vmatpush2.bf16.msra.mxu0 0
        %6455 = vmatprep.subr.bf16.mxu0 0
        %6456 = vmatpush2.bf16.msra.mxu0 0
        %6457 = vmatprep.subr.bf16.mxu0 0
        %6458 = vmatpush2.bf16.msra.mxu0 0
        %6459 = vmatprep.subr.bf16.mxu0 0
        %6460 = vmatpush2.bf16.msra.mxu0 0
        %6461 = vmatprep.subr.bf16.mxu0 0
        %6462 = vmatpush2.bf16.msra.mxu0 0
        %6463 = vmatprep.subr.bf16.mxu0 0
        %6464 = vmatpush2.bf16.msra.mxu0 0
        %6465 = vmatprep.subr.bf16.mxu0 0
        %6466 = vmatpush2.bf16.msra.mxu0 0
        %6467 = vmatprep.subr.bf16.mxu0 0
        %6468 = vmatpush2.bf16.msra.mxu0 0
        %6469 = vmatprep.mubr.bf16.mxu0 0
        %6470 = vmatmul.mubr.bf16.gmra.mxu0 %v233
        %v6471 = vpop.f32.mrf.mxu0
        %v6472 = vadd.f32 %v1259, %v6471
        %v6473 = vpop.f32.mrf.mxu0
        %v6474 = vadd.f32 %v1263, %v6473
        %v6475 = vpop.f32.mrf.mxu0
        %v6476 = vpop.f32.mrf.mxu0
        %6477 = vdwg.mxu0
        %6478 = vmatprep.subr.bf16.mxu0 %v4205
        %6479 = vmatpush1.bf16.msra.mxu0 %v4204
        %6480 = vmatprep.subr.bf16.mxu0 %v4117
        %6481 = vmatpush1.bf16.msra.mxu0 %v4116
        %6482 = vmatprep.subr.bf16.mxu0 %v4029
        %6483 = vmatpush1.bf16.msra.mxu0 %v4028
        %6484 = vmatprep.subr.bf16.mxu0 %v3941
        %6485 = vmatpush1.bf16.msra.mxu0 %v3940
        %6486 = vmatprep.subr.bf16.mxu0 %v3853
        %6487 = vmatpush1.bf16.msra.mxu0 %v3852
        %6488 = vmatprep.subr.bf16.mxu0 %v3765
        %6489 = vmatpush1.bf16.msra.mxu0 %v3764
        %6490 = vmatprep.subr.bf16.mxu0 %v3677
        %6491 = vmatpush1.bf16.msra.mxu0 %v3676
        %6492 = vmatprep.subr.bf16.mxu0 %v3589
        %6493 = vmatpush1.bf16.msra.mxu0 %v3588
        %6494 = vmatprep.subr.bf16.mxu0 0
        %6495 = vmatpush2.bf16.msra.mxu0 0
        %6496 = vmatprep.subr.bf16.mxu0 0
        %6497 = vmatpush2.bf16.msra.mxu0 0
        %6498 = vmatprep.subr.bf16.mxu0 0
        %6499 = vmatpush2.bf16.msra.mxu0 0
        %6500 = vmatprep.subr.bf16.mxu0 0
        %6501 = vmatpush2.bf16.msra.mxu0 0
        %6502 = vmatprep.subr.bf16.mxu0 0
        %6503 = vmatpush2.bf16.msra.mxu0 0
        %6504 = vmatprep.subr.bf16.mxu0 0
        %6505 = vmatpush2.bf16.msra.mxu0 0
        %6506 = vmatprep.subr.bf16.mxu0 0
        %6507 = vmatpush2.bf16.msra.mxu0 0
        %6508 = vmatprep.subr.bf16.mxu0 0
        %6509 = vmatpush2.bf16.msra.mxu0 0
        %6510 = vmatprep.mubr.bf16.mxu0 0
        %6511 = vmatmul.mubr.bf16.gmra.mxu0 %v233
        %v6512 = vpop.f32.mrf.mxu0
        %v6513 = vadd.f32 %v1267, %v6512
        %v6514 = vpop.f32.mrf.mxu0
        %v6515 = vadd.f32 %v1271, %v6514
        %v6516 = vpop.f32.mrf.mxu0
        %v6517 = vpop.f32.mrf.mxu0
        %6518 = vdwg.mxu0
        %6519 = vmatprep.subr.bf16.mxu0 %v4207
        %6520 = vmatpush1.bf16.msra.mxu0 %v4206
        %6521 = vmatprep.subr.bf16.mxu0 %v4119
        %6522 = vmatpush1.bf16.msra.mxu0 %v4118
        %6523 = vmatprep.subr.bf16.mxu0 %v4031
        %6524 = vmatpush1.bf16.msra.mxu0 %v4030
        %6525 = vmatprep.subr.bf16.mxu0 %v3943
        %6526 = vmatpush1.bf16.msra.mxu0 %v3942
        %6527 = vmatprep.subr.bf16.mxu0 %v3855
        %6528 = vmatpush1.bf16.msra.mxu0 %v3854
        %6529 = vmatprep.subr.bf16.mxu0 %v3767
        %6530 = vmatpush1.bf16.msra.mxu0 %v3766
        %6531 = vmatprep.subr.bf16.mxu0 %v3679
        %6532 = vmatpush1.bf16.msra.mxu0 %v3678
        %6533 = vmatprep.subr.bf16.mxu0 %v3591
        %6534 = vmatpush1.bf16.msra.mxu0 %v3590
        %6535 = vmatprep.subr.bf16.mxu0 0
        %6536 = vmatpush2.bf16.msra.mxu0 0
        %6537 = vmatprep.subr.bf16.mxu0 0
        %6538 = vmatpush2.bf16.msra.mxu0 0
        %6539 = vmatprep.subr.bf16.mxu0 0
        %6540 = vmatpush2.bf16.msra.mxu0 0
        %6541 = vmatprep.subr.bf16.mxu0 0
        %6542 = vmatpush2.bf16.msra.mxu0 0
        %6543 = vmatprep.subr.bf16.mxu0 0
        %6544 = vmatpush2.bf16.msra.mxu0 0
        %6545 = vmatprep.subr.bf16.mxu0 0
        %6546 = vmatpush2.bf16.msra.mxu0 0
        %6547 = vmatprep.subr.bf16.mxu0 0
        %6548 = vmatpush2.bf16.msra.mxu0 0
        %6549 = vmatprep.subr.bf16.mxu0 0
        %6550 = vmatpush2.bf16.msra.mxu0 0
        %6551 = vmatprep.mubr.bf16.mxu0 0
        %6552 = vmatmul.mubr.bf16.gmra.mxu0 %v233
        %v6553 = vpop.f32.mrf.mxu0
        %v6554 = vadd.f32 %v1275, %v6553
        %v6555 = vpop.f32.mrf.mxu0
        %v6556 = vadd.f32 %v1279, %v6555
        %v6557 = vpop.f32.mrf.mxu0
        %v6558 = vpop.f32.mrf.mxu0
        %6559 = vdwg.mxu0
        %6560 = vmatprep.subr.bf16.mxu0 %v4209
        %6561 = vmatpush1.bf16.msra.mxu0 %v4208
        %6562 = vmatprep.subr.bf16.mxu0 %v4121
        %6563 = vmatpush1.bf16.msra.mxu0 %v4120
        %6564 = vmatprep.subr.bf16.mxu0 %v4033
        %6565 = vmatpush1.bf16.msra.mxu0 %v4032
        %6566 = vmatprep.subr.bf16.mxu0 %v3945
        %6567 = vmatpush1.bf16.msra.mxu0 %v3944
        %6568 = vmatprep.subr.bf16.mxu0 %v3857
        %6569 = vmatpush1.bf16.msra.mxu0 %v3856
        %6570 = vmatprep.subr.bf16.mxu0 %v3769
        %6571 = vmatpush1.bf16.msra.mxu0 %v3768
        %6572 = vmatprep.subr.bf16.mxu0 %v3681
        %6573 = vmatpush1.bf16.msra.mxu0 %v3680
        %6574 = vmatprep.subr.bf16.mxu0 %v3593
        %6575 = vmatpush1.bf16.msra.mxu0 %v3592
        %6576 = vmatprep.subr.bf16.mxu0 0
        %6577 = vmatpush2.bf16.msra.mxu0 0
        %6578 = vmatprep.subr.bf16.mxu0 0
        %6579 = vmatpush2.bf16.msra.mxu0 0
        %6580 = vmatprep.subr.bf16.mxu0 0
        %6581 = vmatpush2.bf16.msra.mxu0 0
        %6582 = vmatprep.subr.bf16.mxu0 0
        %6583 = vmatpush2.bf16.msra.mxu0 0
        %6584 = vmatprep.subr.bf16.mxu0 0
        %6585 = vmatpush2.bf16.msra.mxu0 0
        %6586 = vmatprep.subr.bf16.mxu0 0
        %6587 = vmatpush2.bf16.msra.mxu0 0
        %6588 = vmatprep.subr.bf16.mxu0 0
        %6589 = vmatpush2.bf16.msra.mxu0 0
        %6590 = vmatprep.subr.bf16.mxu0 0
        %6591 = vmatpush2.bf16.msra.mxu0 0
        %6592 = vmatprep.mubr.bf16.mxu0 0
        %6593 = vmatmul.mubr.bf16.gmra.mxu0 %v233
        %v6594 = vpop.f32.mrf.mxu0
        %v6595 = vadd.f32 %v1283, %v6594
        %v6596 = vpop.f32.mrf.mxu0
        %v6597 = vadd.f32 %v1287, %v6596
        %v6598 = vpop.f32.mrf.mxu0
        %v6599 = vpop.f32.mrf.mxu0
        %6600 = vdwg.mxu0
        %6601 = vmatprep.subr.bf16.mxu0 %v4211
        %6602 = vmatpush1.bf16.msra.mxu0 %v4210
        %6603 = vmatprep.subr.bf16.mxu0 %v4123
        %6604 = vmatpush1.bf16.msra.mxu0 %v4122
        %6605 = vmatprep.subr.bf16.mxu0 %v4035
        %6606 = vmatpush1.bf16.msra.mxu0 %v4034
        %6607 = vmatprep.subr.bf16.mxu0 %v3947
        %6608 = vmatpush1.bf16.msra.mxu0 %v3946
        %6609 = vmatprep.subr.bf16.mxu0 %v3859
        %6610 = vmatpush1.bf16.msra.mxu0 %v3858
        %6611 = vmatprep.subr.bf16.mxu0 %v3771
        %6612 = vmatpush1.bf16.msra.mxu0 %v3770
        %6613 = vmatprep.subr.bf16.mxu0 %v3683
        %6614 = vmatpush1.bf16.msra.mxu0 %v3682
        %6615 = vmatprep.subr.bf16.mxu0 %v3595
        %6616 = vmatpush1.bf16.msra.mxu0 %v3594
        %6617 = vmatprep.subr.bf16.mxu0 0
        %6618 = vmatpush2.bf16.msra.mxu0 0
        %6619 = vmatprep.subr.bf16.mxu0 0
        %6620 = vmatpush2.bf16.msra.mxu0 0
        %6621 = vmatprep.subr.bf16.mxu0 0
        %6622 = vmatpush2.bf16.msra.mxu0 0
        %6623 = vmatprep.subr.bf16.mxu0 0
        %6624 = vmatpush2.bf16.msra.mxu0 0
        %6625 = vmatprep.subr.bf16.mxu0 0
        %6626 = vmatpush2.bf16.msra.mxu0 0
        %6627 = vmatprep.subr.bf16.mxu0 0
        %6628 = vmatpush2.bf16.msra.mxu0 0
        %6629 = vmatprep.subr.bf16.mxu0 0
        %6630 = vmatpush2.bf16.msra.mxu0 0
        %6631 = vmatprep.subr.bf16.mxu0 0
        %6632 = vmatpush2.bf16.msra.mxu0 0
        %6633 = vmatprep.mubr.bf16.mxu0 0
        %6634 = vmatmul.mubr.bf16.gmra.mxu0 %v233
        %v6635 = vpop.f32.mrf.mxu0
        %v6636 = vadd.f32 %v1291, %v6635
        %v6637 = vpop.f32.mrf.mxu0
        %v6638 = vadd.f32 %v1295, %v6637
        %v6639 = vpop.f32.mrf.mxu0
        %v6640 = vpop.f32.mrf.mxu0
        %6641 = vdwg.mxu0
        %6642 = vmatprep.subr.bf16.mxu0 %v4213
        %6643 = vmatpush1.bf16.msra.mxu0 %v4212
        %6644 = vmatprep.subr.bf16.mxu0 %v4125
        %6645 = vmatpush1.bf16.msra.mxu0 %v4124
        %6646 = vmatprep.subr.bf16.mxu0 %v4037
        %6647 = vmatpush1.bf16.msra.mxu0 %v4036
        %6648 = vmatprep.subr.bf16.mxu0 %v3949
        %6649 = vmatpush1.bf16.msra.mxu0 %v3948
        %6650 = vmatprep.subr.bf16.mxu0 %v3861
        %6651 = vmatpush1.bf16.msra.mxu0 %v3860
        %6652 = vmatprep.subr.bf16.mxu0 %v3773
        %6653 = vmatpush1.bf16.msra.mxu0 %v3772
        %6654 = vmatprep.subr.bf16.mxu0 %v3685
        %6655 = vmatpush1.bf16.msra.mxu0 %v3684
        %6656 = vmatprep.subr.bf16.mxu0 %v3597
        %6657 = vmatpush1.bf16.msra.mxu0 %v3596
        %6658 = vmatprep.subr.bf16.mxu0 0
        %6659 = vmatpush2.bf16.msra.mxu0 0
        %6660 = vmatprep.subr.bf16.mxu0 0
        %6661 = vmatpush2.bf16.msra.mxu0 0
        %6662 = vmatprep.subr.bf16.mxu0 0
        %6663 = vmatpush2.bf16.msra.mxu0 0
        %6664 = vmatprep.subr.bf16.mxu0 0
        %6665 = vmatpush2.bf16.msra.mxu0 0
        %6666 = vmatprep.subr.bf16.mxu0 0
        %6667 = vmatpush2.bf16.msra.mxu0 0
        %6668 = vmatprep.subr.bf16.mxu0 0
        %6669 = vmatpush2.bf16.msra.mxu0 0
        %6670 = vmatprep.subr.bf16.mxu0 0
        %6671 = vmatpush2.bf16.msra.mxu0 0
        %6672 = vmatprep.subr.bf16.mxu0 0
        %6673 = vmatpush2.bf16.msra.mxu0 0
        %6674 = vmatprep.mubr.bf16.mxu0 0
        %6675 = vmatmul.mubr.bf16.gmra.mxu0 %v233
        %v6676 = vpop.f32.mrf.mxu0
        %v6677 = vadd.f32 %v1299, %v6676
        %v6678 = vpop.f32.mrf.mxu0
        %v6679 = vadd.f32 %v1303, %v6678
        %v6680 = vpop.f32.mrf.mxu0
        %v6681 = vpop.f32.mrf.mxu0
        %6682 = vdwg.mxu0
        %6683 = vmatprep.subr.bf16.mxu0 %v4215
        %6684 = vmatpush1.bf16.msra.mxu0 %v4214
        %6685 = vmatprep.subr.bf16.mxu0 %v4127
        %6686 = vmatpush1.bf16.msra.mxu0 %v4126
        %6687 = vmatprep.subr.bf16.mxu0 %v4039
        %6688 = vmatpush1.bf16.msra.mxu0 %v4038
        %6689 = vmatprep.subr.bf16.mxu0 %v3951
        %6690 = vmatpush1.bf16.msra.mxu0 %v3950
        %6691 = vmatprep.subr.bf16.mxu0 %v3863
        %6692 = vmatpush1.bf16.msra.mxu0 %v3862
        %6693 = vmatprep.subr.bf16.mxu0 %v3775
        %6694 = vmatpush1.bf16.msra.mxu0 %v3774
        %6695 = vmatprep.subr.bf16.mxu0 %v3687
        %6696 = vmatpush1.bf16.msra.mxu0 %v3686
        %6697 = vmatprep.subr.bf16.mxu0 %v3599
        %6698 = vmatpush1.bf16.msra.mxu0 %v3598
        %6699 = vmatprep.subr.bf16.mxu0 0
        %6700 = vmatpush2.bf16.msra.mxu0 0
        %6701 = vmatprep.subr.bf16.mxu0 0
        %6702 = vmatpush2.bf16.msra.mxu0 0
        %6703 = vmatprep.subr.bf16.mxu0 0
        %6704 = vmatpush2.bf16.msra.mxu0 0
        %6705 = vmatprep.subr.bf16.mxu0 0
        %6706 = vmatpush2.bf16.msra.mxu0 0
        %6707 = vmatprep.subr.bf16.mxu0 0
        %6708 = vmatpush2.bf16.msra.mxu0 0
        %6709 = vmatprep.subr.bf16.mxu0 0
        %6710 = vmatpush2.bf16.msra.mxu0 0
        %6711 = vmatprep.subr.bf16.mxu0 0
        %6712 = vmatpush2.bf16.msra.mxu0 0
        %6713 = vmatprep.subr.bf16.mxu0 0
        %6714 = vmatpush2.bf16.msra.mxu0 0
        %6715 = vmatprep.mubr.bf16.mxu0 0
        %6716 = vmatmul.mubr.bf16.gmra.mxu0 %v233
        %v6717 = vpop.f32.mrf.mxu0
        %v6718 = vadd.f32 %v1307, %v6717
        %v6719 = vpop.f32.mrf.mxu0
        %v6720 = vadd.f32 %v1311, %v6719
        %v6721 = vpop.f32.mrf.mxu0
        %v6722 = vpop.f32.mrf.mxu0
        %6723 = vdwg.mxu0
        %6724 = vst [vmem:[%s230] sm:$0xff] %v4955
        %6725 = vst [vmem:[%s230 + $0x8] sm:$0xff] %v4957
        %6726 = vst [vmem:[%s230 + $0x10] sm:$0xff] %v4996
        %6727 = vst [vmem:[%s230 + $0x18] sm:$0xff] %v4998
        %6728 = vst [vmem:[%s230 + $0x20] sm:$0xff] %v5037
        %6729 = vst [vmem:[%s230 + $0x28] sm:$0xff] %v5039
        %6730 = vst [vmem:[%s230 + $0x30] sm:$0xff] %v5078
        %6731 = vst [vmem:[%s230 + $0x38] sm:$0xff] %v5080
        %6732 = vst [vmem:[%s230 + $0x40] sm:$0xff] %v5119
        %6733 = vst [vmem:[%s230 + $0x48] sm:$0xff] %v5121
        %6734 = vst [vmem:[%s230 + $0x50] sm:$0xff] %v5160
        %6735 = vst [vmem:[%s230 + $0x58] sm:$0xff] %v5162
        %6736 = vst [vmem:[%s230 + $0x60] sm:$0xff] %v5201
        %6737 = vst [vmem:[%s230 + $0x68] sm:$0xff] %v5203
        %6738 = vst [vmem:[%s230 + $0x70] sm:$0xff] %v5242
        %6739 = vst [vmem:[%s230 + $0x78] sm:$0xff] %v5244
        %6740 = vst [vmem:[%s230 + $0x80] sm:$0xff] %v5283
        %6741 = vst [vmem:[%s230 + $0x88] sm:$0xff] %v5285
        %6742 = vst [vmem:[%s230 + $0x90] sm:$0xff] %v5324
        %6743 = vst [vmem:[%s230 + $0x98] sm:$0xff] %v5326
        %6744 = vst [vmem:[%s230 + $0xa0] sm:$0xff] %v5365
        %6745 = vst [vmem:[%s230 + $0xa8] sm:$0xff] %v5367
        %6746 = vst [vmem:[%s230 + $0xb0] sm:$0xff] %v5406
        %6747 = vst [vmem:[%s230 + $0xb8] sm:$0xff] %v5408
        %6748 = vst [vmem:[%s230 + $0xc0] sm:$0xff] %v5447
        %6749 = vst [vmem:[%s230 + $0xc8] sm:$0xff] %v5449
        %6750 = vst [vmem:[%s230 + $0xd0] sm:$0xff] %v5488
        %6751 = vst [vmem:[%s230 + $0xd8] sm:$0xff] %v5490
        %6752 = vst [vmem:[%s230 + $0xe0] sm:$0xff] %v5529
        %6753 = vst [vmem:[%s230 + $0xe8] sm:$0xff] %v5531
        %6754 = vst [vmem:[%s230 + $0xf0] sm:$0xff] %v5570
        %6755 = vst [vmem:[%s230 + $0xf8] sm:$0xff] %v5572
        %6756 = vst [vmem:[%s230 + $0x100] sm:$0xff] %v5611
        %6757 = vst [vmem:[%s230 + $0x108] sm:$0xff] %v5613
        %6758 = vst [vmem:[%s230 + $0x110] sm:$0xff] %v5652
        %6759 = vst [vmem:[%s230 + $0x118] sm:$0xff] %v5654
        %6760 = vst [vmem:[%s230 + $0x120] sm:$0xff] %v5693
        %6761 = vst [vmem:[%s230 + $0x128] sm:$0xff] %v5695
        %6762 = vst [vmem:[%s230 + $0x130] sm:$0xff] %v5734
        %6763 = vst [vmem:[%s230 + $0x138] sm:$0xff] %v5736
        %6764 = vst [vmem:[%s230 + $0x140] sm:$0xff] %v5775
        %6765 = vst [vmem:[%s230 + $0x148] sm:$0xff] %v5777
        %6766 = vst [vmem:[%s230 + $0x150] sm:$0xff] %v5816
        %6767 = vst [vmem:[%s230 + $0x158] sm:$0xff] %v5818
        %6768 = vst [vmem:[%s230 + $0x160] sm:$0xff] %v5857
        %6769 = vst [vmem:[%s230 + $0x168] sm:$0xff] %v5859
        %6770 = vst [vmem:[%s230 + $0x170] sm:$0xff] %v5898
        %6771 = vst [vmem:[%s230 + $0x178] sm:$0xff] %v5900
        %6772 = vst [vmem:[%s230 + $0x180] sm:$0xff] %v5939
        %6773 = vst [vmem:[%s230 + $0x188] sm:$0xff] %v5941
        %6774 = vst [vmem:[%s230 + $0x190] sm:$0xff] %v5980
        %6775 = vst [vmem:[%s230 + $0x198] sm:$0xff] %v5982
        %6776 = vst [vmem:[%s230 + $0x1a0] sm:$0xff] %v6021
        %6777 = vst [vmem:[%s230 + $0x1a8] sm:$0xff] %v6023
        %6778 = vst [vmem:[%s230 + $0x1b0] sm:$0xff] %v6062
        %6779 = vst [vmem:[%s230 + $0x1b8] sm:$0xff] %v6064
        %6780 = vst [vmem:[%s230 + $0x1c0] sm:$0xff] %v6103
        %6781 = vst [vmem:[%s230 + $0x1c8] sm:$0xff] %v6105
        %6782 = vst [vmem:[%s230 + $0x1d0] sm:$0xff] %v6144
        %6783 = vst [vmem:[%s230 + $0x1d8] sm:$0xff] %v6146
        %6784 = vst [vmem:[%s230 + $0x1e0] sm:$0xff] %v6185
        %6785 = vst [vmem:[%s230 + $0x1e8] sm:$0xff] %v6187
        %6786 = vst [vmem:[%s230 + $0x1f0] sm:$0xff] %v6226
        %6787 = vst [vmem:[%s230 + $0x1f8] sm:$0xff] %v6228
        %6788 = vst [vmem:[%s230 + $0x200] sm:$0xff] %v6267
        %6789 = vst [vmem:[%s230 + $0x208] sm:$0xff] %v6269
        %6790 = vst [vmem:[%s230 + $0x210] sm:$0xff] %v6308
        %6791 = vst [vmem:[%s230 + $0x218] sm:$0xff] %v6310
        %6792 = vst [vmem:[%s230 + $0x220] sm:$0xff] %v6349
        %6793 = vst [vmem:[%s230 + $0x228] sm:$0xff] %v6351
        %6794 = vst [vmem:[%s230 + $0x230] sm:$0xff] %v6390
        %6795 = vst [vmem:[%s230 + $0x238] sm:$0xff] %v6392
        %6796 = vst [vmem:[%s230 + $0x240] sm:$0xff] %v6431
        %6797 = vst [vmem:[%s230 + $0x248] sm:$0xff] %v6433
        %6798 = vst [vmem:[%s230 + $0x250] sm:$0xff] %v6472
        %6799 = vst [vmem:[%s230 + $0x258] sm:$0xff] %v6474
        %6800 = vst [vmem:[%s230 + $0x260] sm:$0xff] %v6513
        %6801 = vst [vmem:[%s230 + $0x268] sm:$0xff] %v6515
        %6802 = vst [vmem:[%s230 + $0x270] sm:$0xff] %v6554
        %6803 = vst [vmem:[%s230 + $0x278] sm:$0xff] %v6556
        %6804 = vst [vmem:[%s230 + $0x280] sm:$0xff] %v6595
        %6805 = vst [vmem:[%s230 + $0x288] sm:$0xff] %v6597
        %6806 = vst [vmem:[%s230 + $0x290] sm:$0xff] %v6636
        %6807 = vst [vmem:[%s230 + $0x298] sm:$0xff] %v6638
        %6808 = vst [vmem:[%s230 + $0x2a0] sm:$0xff] %v6677
        %6809 = vst [vmem:[%s230 + $0x2a8] sm:$0xff] %v6679
        %6810 = vst [vmem:[%s230 + $0x2b0] sm:$0xff] %v6718
        %6811 = vst [vmem:[%s230 + $0x2b8] sm:$0xff] %v6720
        %s6812 = smul.u32 88, %s20
        %p6813 = scmp.lt.s32.totalorder %s6812, 703
        %s6814 = scalar_select %p6813, %s6812, 703
        %s6815 = smul.addr %s6814, 8
        %s6816 = scalar_lea.vmem %s3, %s6815
        // Predicated region
        $region41: #{finet_forward.3} parent=31 // pred_check
          %p6817 = pneg %p111
        $region42: #{finet_forward.3} parent=31 // pred_check_branch
          %6819 = sbr.rel (%p6817) target = $region44
        $region43: #{finet_forward.3} parent=31 // pred_region
          %s6820 = smul.u32 88, %s20
        $region44: #{finet_forward.3} parent=31 // pred_fallthru
          _
      $region32: #{finet_forward.3} parent=5 // pred_fallthru
        _
      %p6821 = scmp.le.s32.totalorder 2, %s15
      // Predicated region
      $region45: #{finet_forward.3} parent=5 // pred_check
        %p6822 = pneg %p6821
      $region46: #{finet_forward.3} parent=5 // pred_check_branch
        %6824 = sbr.rel (%p6822) target = $region48
      $region47: #{finet_forward.3} parent=5 // pred_region
        %s6825 = ssub.s32 %s15, 2
        // Predicated region
        $region49: #{finet_forward.3} parent=47 // pred_check
          %p6826 = pneg %p117
        $region50: #{finet_forward.3} parent=47 // pred_check_branch
          %6828 = sbr.rel (%p6826) target = $region52
        $region51: #{finet_forward.3} parent=47 // pred_region
          %s6829 = smul.u32 88, %s21
          %p6830 = scmp.lt.s32.totalorder %s6829, 703
          %s6831 = scalar_select %p6830, %s6829, 703
          %s6832 = smul.addr %s6831, 8
          %s6833 = scalar_lea.vmem %s3, %s6832
        $region52: #{finet_forward.3} parent=47 // pred_fallthru
          _
      $region48: #{finet_forward.3} parent=5 // pred_fallthru
        _
    $region6: #{finet_forward.3} parent=1 // loop_footer
      %s19 = sadd.s32 1, %s15
    $region7: #{finet_forward.3} parent=1 // loop_footer_branch
      %14 = sbr.rel target = $region3
    $region8: #{finet_forward.3} parent=1 // loop_exit
      _
    %6834 = vsyncpa [#allocation3], 1
    %s6835 = scalar_lea.sflag [#allocation3], 1
    %6836 = vsyncpa %s6835, 1
    %6837 = vsyncpa [#allocation5], 1
    %s6838 = scalar_lea.sflag [#allocation5], 1
    %6839 = vsyncpa %s6838, 1

</llo_original>
